<compile_context>
chip_gen: v7x
topology: tpu7x:2x2x1
jax: 0.10.0
libtpu: 0.0.40
codegen_flags: <defaults>
</compile_context>

<pallas_src>
import numpy as np
import jax
import jax.numpy as jnp
from jax.experimental import pallas as pl
from jax.experimental.pallas import tpu as pltpu

LEAKY_SLOPE = 0.2
IN_EPS = 1e-5  # PyTorch InstanceNorm2d default eps


# ----------------------- host-side constant builders ------------------------

def _build_selh(KH, OH, Hp, stride):
    """0/1 row-selection matrices: selh[kh] @ A picks rows stride*oh + kh."""
    sel = np.zeros((KH, OH, Hp), np.float32)
    for kh in range(KH):
        for oh in range(OH):
            sel[kh, oh, stride * oh + kh] = 1.0
    return sel


def _build_wexp(w, Wp, OW, stride):
    """Block-Toeplitz expansion of the conv weight along W.

    w: (KH, KW, Cin, Cout).  Returns e of shape (KH, Wp*Cin, OW*Cout) with
      e[kh, wcol*Cin + ci, ow*Cout + co] = w[kh, wcol - stride*ow, ci, co]
    (zero where the tap is outside the kernel window), so for the kh-th tap,
    a row-selected slab of the padded activation in (H, W*Cin) layout times
    e[kh] gives that tap's contribution to the output in (OH, OW*Cout) layout.
    """
    KH, KW, Cin, Cout = w.shape
    e = np.zeros((KH, Wp * Cin, OW * Cout), np.float32)
    for kh in range(KH):
        for ow in range(OW):
            for kw in range(KW):
                wcol = stride * ow + kw
                e[kh, wcol * Cin:(wcol + 1) * Cin,
                  ow * Cout:(ow + 1) * Cout] = w[kh, kw]
    return e


# --------------------------------- kernel -----------------------------------

def _make_kernel(cfgs):
    """Build the fused 5-layer kernel (one batch sample per grid step)."""
    n_const = sum((1 if c['stride'] > 1 else 0) + 1 + (2 if c['use_in'] else 1)
                  for c in cfgs)
    n_layers = len(cfgs)

    def kernel(*refs):
        x_ref = refs[0]                       # (1, Hp1, Wp1*Cin1) bf16
        o_ref = refs[1 + n_const]             # (1, OH5, OW5*Cout5) f32
        scratch = refs[2 + n_const:]          # padded activation buffers (f32)

        ci = 1
        a = x_ref[0]                          # layer-1 padded input, bf16
        for li, cfg in enumerate(cfgs):
            stride, KH = cfg['stride'], cfg['KH']
            OH, OW, Cout = cfg['OH'], cfg['OW'], cfg['Cout']

            selh_ref = None
            if stride > 1:
                selh_ref = refs[ci]; ci += 1
            wexp_ref = refs[ci]; ci += 1
            if cfg['use_in']:
                g_ref, be_ref = refs[ci], refs[ci + 1]; ci += 2
                bias_ref = None
            else:
                bias_ref = refs[ci]; ci += 1
                g_ref = be_ref = None

            # ---- conv: KH banded matmuls on the MXU, bf16 in / f32 accumulate
            if stride > 1:
                a_bf = a.astype(jnp.bfloat16)
            y = None
            for kh in range(KH):
                if stride > 1:
                    # exact 0/1 row selection of the H-taps (handles H-stride)
                    b = jnp.dot(selh_ref[kh], a_bf,
                                preferred_element_type=jnp.float32)
                    b = b.astype(jnp.bfloat16)
                else:
                    b = a[kh:kh + OH, :].astype(jnp.bfloat16)
                t = jnp.dot(b, wexp_ref[kh],
                            preferred_element_type=jnp.float32)
                y = t if y is None else y + t   # (OH, OW*Cout) f32

            last = li == n_layers - 1
            if not last:
                nxt = cfgs[li + 1]
                dst = scratch[li]               # next layer's padded input
                dst[...] = jnp.zeros_like(dst)  # zero border (padding)
                r0 = nxt['ph']
                c0 = nxt['pw'] * Cout

            if cfg['use_in']:
                # InstanceNorm2d: per-channel over OH*OW spatial positions.
                # One-pass stats; conv bias dropped (cancelled by mean sub).
                cs = jnp.sum(y, axis=0, keepdims=True)        # (1, OW*Cout)
                cs2 = jnp.sum(y * y, axis=0, keepdims=True)
                s1 = cs[:, 0:Cout]
                s2 = cs2[:, 0:Cout]
                for ow in range(1, OW):
                    s1 = s1 + cs[:, ow * Cout:(ow + 1) * Cout]
                    s2 = s2 + cs2[:, ow * Cout:(ow + 1) * Cout]
                inv_n = 1.0 / float(OH * OW)
                mean = s1 * inv_n
                var = jnp.maximum(s2 * inv_n - mean * mean, 0.0)
                scale = g_ref[...] * jax.lax.rsqrt(var + IN_EPS)   # (1, Cout)
                shift = be_ref[...] - mean * scale
                # normalize + LeakyReLU per ow-group, write straight into the
                # next layer's padded VMEM buffer (no HBM writeback).
                for ow in range(OW):
                    yg = y[:, ow * Cout:(ow + 1) * Cout] * scale + shift
                    if cfg['use_act']:
                        yg = jnp.where(yg > 0, yg, LEAKY_SLOPE * yg)
                    dst[r0:r0 + OH,
                        c0 + ow * Cout:c0 + (ow + 1) * Cout] = yg
                a = dst[...]
            else:
                y = y + bias_ref[...]
                if cfg['use_act']:
                    y = jnp.where(y > 0, y, LEAKY_SLOPE * y)
                if last:
                    o_ref[0] = y.astype(o_ref.dtype)
                else:
                    dst[r0:r0 + OH, c0:c0 + OW * Cout] = y
                    a = dst[...]

    return kernel


# -------------------------------- wrapper ------------------------------------

def discriminator_forward(params, x_nchw):
    """params: dict of numpy float32 arrays; x_nchw: (N, Cin, H, W) f32."""
    x = jnp.transpose(x_nchw, (0, 2, 3, 1))      # NCHW -> NHWC
    N, H, W, Cin0 = x.shape

    layer_defs = [
        dict(w='w1', b='b1', stride=2, ph=1, pw=1, use_in=False, use_act=True),
        dict(w='w2', b='b2', stride=2, ph=1, pw=2, use_in=True,
             g='g2', be='be2', use_act=True),
        dict(w='w3', b='b3', stride=2, ph=1, pw=1, use_in=True,
             g='g3', be='be3', use_act=True),
        dict(w='w4', b='b4', stride=1, ph=2, pw=2, use_in=True,
             g='g4', be='be4', use_act=True),
        dict(w='w5', b='b5', stride=1, ph=1, pw=1, use_in=False, use_act=False),
    ]

    cfgs, consts = [], []
    Hin, Win, Cin = H, W, Cin0
    for ld in layer_defs:
        wnp = params[ld['w']]                      # (KH, KW, Cin, Cout)
        KH, KW, _, Cout = wnp.shape
        s, ph, pw = ld['stride'], ld['ph'], ld['pw']
        Hp, Wp = Hin + 2 * ph, Win + 2 * pw
        OH = (Hp - KH) // s + 1
        OW = (Wp - KW) // s + 1
        cfgs.append(dict(stride=s, KH=KH, OH=OH, OW=OW, Cin=Cin, Cout=Cout,
                         Hp=Hp, Wp=Wp, ph=ph, pw=pw,
                         use_in=ld['use_in'], use_act=ld['use_act']))
        if s > 1:
            consts.append(jnp.asarray(_build_selh(KH, OH, Hp, s), jnp.bfloat16))
        consts.append(jnp.asarray(_build_wexp(wnp, Wp, OW, s), jnp.bfloat16))
        if ld['use_in']:
            consts.append(jnp.asarray(params[ld['g']].reshape(1, Cout),
                                      jnp.float32))
            consts.append(jnp.asarray(params[ld['be']].reshape(1, Cout),
                                      jnp.float32))
        else:
            bi = np.tile(params[ld['b']], OW).reshape(1, OW * Cout)
            consts.append(jnp.asarray(bi, jnp.float32))
        Hin, Win, Cin = OH, OW, Cout

    # layer-1 input: zero-pad, flatten (W, Cin) onto lanes, feed bf16
    c0 = cfgs[0]
    xp = jnp.pad(x, ((0, 0), (c0['ph'], c0['ph']), (c0['pw'], c0['pw']), (0, 0)))
    x_in = xp.reshape(N, c0['Hp'], c0['Wp'] * c0['Cin']).astype(jnp.bfloat16)

    last = cfgs[-1]
    out_cols = last['OW'] * last['Cout']

    in_specs = [pl.BlockSpec((1, c0['Hp'], c0['Wp'] * c0['Cin']),
                             lambda n: (n, 0, 0))]
    for c in consts:
        in_specs.append(pl.BlockSpec(tuple(c.shape),
                                     lambda n, r=c.ndim: (0,) * r))

    out = pl.pallas_call(
        _make_kernel(cfgs),
        out_shape=jax.ShapeDtypeStruct((N, last['OH'], out_cols), jnp.float32),
        grid=(N,),
        in_specs=in_specs,
        out_specs=pl.BlockSpec((1, last['OH'], out_cols), lambda n: (n, 0, 0)),
        scratch_shapes=[pltpu.VMEM((cfg['Hp'], cfg['Wp'] * cfg['Cin']),
                                   jnp.float32) for cfg in cfgs[1:]],
        compiler_params=pltpu.CompilerParams(
            dimension_semantics=("parallel",)),
    )(x_in, *consts)

    out = out.reshape(N, last['OH'], last['OW'], last['Cout'])
    return jnp.transpose(out, (0, 3, 1, 2))       # NHWC -> NCHW


class DiscriminatorPallas:
    """JAX/Pallas port of the PyTorch Discriminator(input_nc, mid_nc)."""

    def __init__(self, input_nc, mid_nc, key):
        ks = jax.random.split(key, 10)
        m = mid_nc

        def w_init(k, kh, kw, cin, cout):
            return np.asarray(
                0.05 * jax.random.normal(k, (kh, kw, cin, cout), jnp.float32))

        def b_init(k, c):
            return np.asarray(0.01 * jax.random.normal(k, (c,), jnp.float32))

        # conv weights stored (KH, KW, Cin, Cout); IN affine init = (1, 0)
        self.params = dict(
            w1=w_init(ks[0], 4, 4, input_nc, m),  b1=b_init(ks[1], m),
            w2=w_init(ks[2], 4, 4, m, 2 * m),     b2=b_init(ks[3], 2 * m),
            w3=w_init(ks[4], 4, 4, 2 * m, 4 * m), b3=b_init(ks[5], 4 * m),
            w4=w_init(ks[6], 4, 4, 4 * m, 8 * m), b4=b_init(ks[7], 8 * m),
            w5=w_init(ks[8], 4, 4, 8 * m, 1),     b5=b_init(ks[9], 1),
            g2=np.ones(2 * m, np.float32), be2=np.zeros(2 * m, np.float32),
            g3=np.ones(4 * m, np.float32), be3=np.zeros(4 * m, np.float32),
            g4=np.ones(8 * m, np.float32), be4=np.zeros(8 * m, np.float32),
        )

    def __call__(self, x_nchw):
        return discriminator_forward(self.params, x_nchw)


# ------------------------ pure-JAX reference (check) -------------------------

def _ref_forward(params, x_nchw):
    """Quantization-matched reference (bf16 weights/activations, f32 math)."""
    def q(v):
        return jnp.asarray(v, jnp.bfloat16).astype(jnp.float32)

    def conv(a, w, b, stride, ph, pw):
        a = q(a)
        wq = q(w)
        ap = jnp.pad(a, ((0, 0), (ph, ph), (pw, pw), (0, 0)))
        N, Hp, Wp, Cin = ap.shape
        KH, KW, _, Cout = wq.shape
        OH = (Hp - KH) // stride + 1
        OW = (Wp - KW) // stride + 1
        sl = [ap[:, kh:kh + stride * (OH - 1) + 1:stride,
                 kw:kw + stride * (OW - 1) + 1:stride, :]
              for kh in range(KH) for kw in range(KW)]
        patches = jnp.concatenate(sl, axis=-1).reshape(N, OH * OW, KH * KW * Cin)
        y = jax.lax.dot_general(patches, wq.reshape(KH * KW * Cin, Cout),
                                (((2,), (0,)), ((), ())),
                                precision=jax.lax.Precision.HIGHEST)
        return y.reshape(N, OH, OW, Cout) + \
            jnp.asarray(b, jnp.float32).reshape(1, 1, 1, Cout)

    def inorm(y, g, be):
        m = jnp.mean(y, axis=(1, 2), keepdims=True)
        v = jnp.mean((y - m) ** 2, axis=(1, 2), keepdims=True)
        return (y - m) * jax.lax.rsqrt(v + IN_EPS) * \
            jnp.asarray(g, jnp.float32).reshape(1, 1, 1, -1) + \
            jnp.asarray(be, jnp.float32).reshape(1, 1, 1, -1)

    def lrelu(t):
        return jnp.where(t > 0, t, LEAKY_SLOPE * t)

    x = jnp.transpose(x_nchw, (0, 2, 3, 1))
    h = lrelu(conv(x, params['w1'], params['b1'], 2, 1, 1))
    h = lrelu(inorm(conv(h, params['w2'], params['b2'], 2, 1, 2),
                    params['g2'], params['be2']))
    h = lrelu(inorm(conv(h, params['w3'], params['b3'], 2, 1, 1),
                    params['g3'], params['be3']))
    h = lrelu(inorm(conv(h, params['w4'], params['b4'], 1, 2, 2),
                    params['g4'], params['be4']))
    h = conv(h, params['w5'], params['b5'], 1, 1, 1)
    return jnp.transpose(h, (0, 3, 1, 2))


if __name__ == "__main__":
    key = jax.random.PRNGKey(0)
    k_param, k_x = jax.random.split(key)

    batch, input_nc, mid_nc, spatial = 2, 4, 8, 16
    x = jax.random.normal(k_x, (batch, input_nc, spatial, spatial), jnp.float32)

    disc = DiscriminatorPallas(input_nc, mid_nc, k_param)
    out = jax.block_until_ready(disc(x))

    # 16 -> 8 -> (4,5) -> (2,2) -> (3,3) -> (2,2), 1 channel
    assert out.shape == (batch, 1, 2, 2), out.shape
    assert bool(jnp.all(jnp.isfinite(out)))

    ref = jax.block_until_ready(_ref_forward(disc.params, x))
    max_err = float(jnp.max(jnp.abs(out - ref)))
    assert max_err < 2e-2, max_err

    print("KERNEL_OK")
</pallas_src>

<mosaic_0001>
module attributes {stable_mosaic.version = 11 : i64} {
  func.func @kernel(%arg0: i32, %arg1: memref<1x18x72xbf16, #tpu.memory_space<vmem>>, %arg2: memref<4x8x18xbf16, #tpu.memory_space<vmem>>, %arg3: memref<4x72x64xbf16, #tpu.memory_space<vmem>>, %arg4: memref<1x64xf32, #tpu.memory_space<vmem>>, %arg5: memref<4x4x10xbf16, #tpu.memory_space<vmem>>, %arg6: memref<4x96x80xbf16, #tpu.memory_space<vmem>>, %arg7: memref<1x16xf32, #tpu.memory_space<vmem>>, %arg8: memref<1x16xf32, #tpu.memory_space<vmem>>, %arg9: memref<4x2x6xbf16, #tpu.memory_space<vmem>>, %arg10: memref<4x112x64xbf16, #tpu.memory_space<vmem>>, %arg11: memref<1x32xf32, #tpu.memory_space<vmem>>, %arg12: memref<1x32xf32, #tpu.memory_space<vmem>>, %arg13: memref<4x192x192xbf16, #tpu.memory_space<vmem>>, %arg14: memref<1x64xf32, #tpu.memory_space<vmem>>, %arg15: memref<1x64xf32, #tpu.memory_space<vmem>>, %arg16: memref<4x320x2xbf16, #tpu.memory_space<vmem>>, %arg17: memref<1x2xf32, #tpu.memory_space<vmem>>, %arg18: memref<1x2x2xf32, #tpu.memory_space<vmem>>, %arg19: memref<10x96xf32, #tpu.memory_space<vmem>>, %arg20: memref<6x112xf32, #tpu.memory_space<vmem>>, %arg21: memref<6x192xf32, #tpu.memory_space<vmem>>, %arg22: memref<5x320xf32, #tpu.memory_space<vmem>>) attributes {dimension_semantics = [#tpu.dimension_semantics<parallel>], iteration_bounds = array<i64: 2>, scalar_prefetch = 0 : i64, scratch_operands = 4 : i64, tpu.core_type = #tpu.core_type<tc>, window_params = [{transform_indices = @transform_0, window_bounds = array<i64: 1, 18, 72>}, {pipeline_mode = #tpu.pipeline_mode<synchronous>, transform_indices = @transform_1, window_bounds = array<i64: 4, 8, 18>}, {pipeline_mode = #tpu.pipeline_mode<synchronous>, transform_indices = @transform_2, window_bounds = array<i64: 4, 72, 64>}, {pipeline_mode = #tpu.pipeline_mode<synchronous>, transform_indices = @transform_3, window_bounds = array<i64: 1, 64>}, {pipeline_mode = #tpu.pipeline_mode<synchronous>, transform_indices = @transform_4, window_bounds = array<i64: 4, 4, 10>}, {pipeline_mode = #tpu.pipeline_mode<synchronous>, transform_indices = @transform_5, window_bounds = array<i64: 4, 96, 80>}, {pipeline_mode = #tpu.pipeline_mode<synchronous>, transform_indices = @transform_6, window_bounds = array<i64: 1, 16>}, {pipeline_mode = #tpu.pipeline_mode<synchronous>, transform_indices = @transform_7, window_bounds = array<i64: 1, 16>}, {pipeline_mode = #tpu.pipeline_mode<synchronous>, transform_indices = @transform_8, window_bounds = array<i64: 4, 2, 6>}, {pipeline_mode = #tpu.pipeline_mode<synchronous>, transform_indices = @transform_9, window_bounds = array<i64: 4, 112, 64>}, {pipeline_mode = #tpu.pipeline_mode<synchronous>, transform_indices = @transform_10, window_bounds = array<i64: 1, 32>}, {pipeline_mode = #tpu.pipeline_mode<synchronous>, transform_indices = @transform_11, window_bounds = array<i64: 1, 32>}, {pipeline_mode = #tpu.pipeline_mode<synchronous>, transform_indices = @transform_12, window_bounds = array<i64: 4, 192, 192>}, {pipeline_mode = #tpu.pipeline_mode<synchronous>, transform_indices = @transform_13, window_bounds = array<i64: 1, 64>}, {pipeline_mode = #tpu.pipeline_mode<synchronous>, transform_indices = @transform_14, window_bounds = array<i64: 1, 64>}, {pipeline_mode = #tpu.pipeline_mode<synchronous>, transform_indices = @transform_15, window_bounds = array<i64: 4, 320, 2>}, {pipeline_mode = #tpu.pipeline_mode<synchronous>, transform_indices = @transform_16, window_bounds = array<i64: 1, 2>}, {transform_indices = @transform_17, window_bounds = array<i64: 1, 2, 2>}]} {
    %c0 = arith.constant 0 : index
    %c0_0 = arith.constant 0 : index
    %c0_1 = arith.constant 0 : index
    %0 = vector.load %arg1[%c0, %c0_0, %c0_1] : memref<1x18x72xbf16, #tpu.memory_space<vmem>>, vector<1x18x72xbf16>
    %1 = vector.shape_cast %0 : vector<1x18x72xbf16> to vector<18x72xbf16>
    %c0_2 = arith.constant 0 : index
    %c0_3 = arith.constant 0 : index
    %c0_4 = arith.constant 0 : index
    %2 = vector.load %arg2[%c0_2, %c0_3, %c0_4] : memref<4x8x18xbf16, #tpu.memory_space<vmem>>, vector<1x8x18xbf16>
    %3 = vector.shape_cast %2 : vector<1x8x18xbf16> to vector<8x18xbf16>
    %cst = arith.constant dense<0.000000e+00> : vector<8x72xf32>
    %4 = tpu.matmul %3, %1, %cst {dimension_numbers = #tpu.dot_dimension_numbers<[1], [0], [0], [1], [0, 0, 1, 1], [], []>} : vector<8x18xbf16>, vector<18x72xbf16>, vector<8x72xf32> -> vector<8x72xf32>
    %5 = arith.truncf %4 : vector<8x72xf32> to vector<8x72xbf16>
    %c0_5 = arith.constant 0 : index
    %c0_6 = arith.constant 0 : index
    %c0_7 = arith.constant 0 : index
    %6 = vector.load %arg3[%c0_5, %c0_6, %c0_7] : memref<4x72x64xbf16, #tpu.memory_space<vmem>>, vector<1x72x64xbf16>
    %7 = vector.shape_cast %6 : vector<1x72x64xbf16> to vector<72x64xbf16>
    %cst_8 = arith.constant dense<0.000000e+00> : vector<8x64xf32>
    %8 = tpu.matmul %5, %7, %cst_8 {dimension_numbers = #tpu.dot_dimension_numbers<[1], [0], [0], [1], [0, 0, 1, 1], [], []>} : vector<8x72xbf16>, vector<72x64xbf16>, vector<8x64xf32> -> vector<8x64xf32>
    %c1 = arith.constant 1 : index
    %c0_9 = arith.constant 0 : index
    %c0_10 = arith.constant 0 : index
    %9 = vector.load %arg2[%c1, %c0_9, %c0_10] : memref<4x8x18xbf16, #tpu.memory_space<vmem>>, vector<1x8x18xbf16>
    %10 = vector.shape_cast %9 : vector<1x8x18xbf16> to vector<8x18xbf16>
    %cst_11 = arith.constant dense<0.000000e+00> : vector<8x72xf32>
    %11 = tpu.matmul %10, %1, %cst_11 {dimension_numbers = #tpu.dot_dimension_numbers<[1], [0], [0], [1], [0, 0, 1, 1], [], []>} : vector<8x18xbf16>, vector<18x72xbf16>, vector<8x72xf32> -> vector<8x72xf32>
    %12 = arith.truncf %11 : vector<8x72xf32> to vector<8x72xbf16>
    %c1_12 = arith.constant 1 : index
    %c0_13 = arith.constant 0 : index
    %c0_14 = arith.constant 0 : index
    %13 = vector.load %arg3[%c1_12, %c0_13, %c0_14] : memref<4x72x64xbf16, #tpu.memory_space<vmem>>, vector<1x72x64xbf16>
    %14 = vector.shape_cast %13 : vector<1x72x64xbf16> to vector<72x64xbf16>
    %cst_15 = arith.constant dense<0.000000e+00> : vector<8x64xf32>
    %15 = tpu.matmul %12, %14, %cst_15 {dimension_numbers = #tpu.dot_dimension_numbers<[1], [0], [0], [1], [0, 0, 1, 1], [], []>} : vector<8x72xbf16>, vector<72x64xbf16>, vector<8x64xf32> -> vector<8x64xf32>
    %16 = arith.addf %8, %15 : vector<8x64xf32>
    %c2 = arith.constant 2 : index
    %c0_16 = arith.constant 0 : index
    %c0_17 = arith.constant 0 : index
    %17 = vector.load %arg2[%c2, %c0_16, %c0_17] : memref<4x8x18xbf16, #tpu.memory_space<vmem>>, vector<1x8x18xbf16>
    %18 = vector.shape_cast %17 : vector<1x8x18xbf16> to vector<8x18xbf16>
    %cst_18 = arith.constant dense<0.000000e+00> : vector<8x72xf32>
    %19 = tpu.matmul %18, %1, %cst_18 {dimension_numbers = #tpu.dot_dimension_numbers<[1], [0], [0], [1], [0, 0, 1, 1], [], []>} : vector<8x18xbf16>, vector<18x72xbf16>, vector<8x72xf32> -> vector<8x72xf32>
    %20 = arith.truncf %19 : vector<8x72xf32> to vector<8x72xbf16>
    %c2_19 = arith.constant 2 : index
    %c0_20 = arith.constant 0 : index
    %c0_21 = arith.constant 0 : index
    %21 = vector.load %arg3[%c2_19, %c0_20, %c0_21] : memref<4x72x64xbf16, #tpu.memory_space<vmem>>, vector<1x72x64xbf16>
    %22 = vector.shape_cast %21 : vector<1x72x64xbf16> to vector<72x64xbf16>
    %cst_22 = arith.constant dense<0.000000e+00> : vector<8x64xf32>
    %23 = tpu.matmul %20, %22, %cst_22 {dimension_numbers = #tpu.dot_dimension_numbers<[1], [0], [0], [1], [0, 0, 1, 1], [], []>} : vector<8x72xbf16>, vector<72x64xbf16>, vector<8x64xf32> -> vector<8x64xf32>
    %24 = arith.addf %16, %23 : vector<8x64xf32>
    %c3 = arith.constant 3 : index
    %c0_23 = arith.constant 0 : index
    %c0_24 = arith.constant 0 : index
    %25 = vector.load %arg2[%c3, %c0_23, %c0_24] : memref<4x8x18xbf16, #tpu.memory_space<vmem>>, vector<1x8x18xbf16>
    %26 = vector.shape_cast %25 : vector<1x8x18xbf16> to vector<8x18xbf16>
    %cst_25 = arith.constant dense<0.000000e+00> : vector<8x72xf32>
    %27 = tpu.matmul %26, %1, %cst_25 {dimension_numbers = #tpu.dot_dimension_numbers<[1], [0], [0], [1], [0, 0, 1, 1], [], []>} : vector<8x18xbf16>, vector<18x72xbf16>, vector<8x72xf32> -> vector<8x72xf32>
    %28 = arith.truncf %27 : vector<8x72xf32> to vector<8x72xbf16>
    %c3_26 = arith.constant 3 : index
    %c0_27 = arith.constant 0 : index
    %c0_28 = arith.constant 0 : index
    %29 = vector.load %arg3[%c3_26, %c0_27, %c0_28] : memref<4x72x64xbf16, #tpu.memory_space<vmem>>, vector<1x72x64xbf16>
    %30 = vector.shape_cast %29 : vector<1x72x64xbf16> to vector<72x64xbf16>
    %cst_29 = arith.constant dense<0.000000e+00> : vector<8x64xf32>
    %31 = tpu.matmul %28, %30, %cst_29 {dimension_numbers = #tpu.dot_dimension_numbers<[1], [0], [0], [1], [0, 0, 1, 1], [], []>} : vector<8x72xbf16>, vector<72x64xbf16>, vector<8x64xf32> -> vector<8x64xf32>
    %32 = arith.addf %24, %31 : vector<8x64xf32>
    %cst_30 = arith.constant 0.000000e+00 : f32
    %33 = vector.broadcast %cst_30 : f32 to vector<10x96xf32>
    %c0_31 = arith.constant 0 : index
    %c0_32 = arith.constant 0 : index
    %34 = vector.load %arg19[%c0_31, %c0_32] : memref<10x96xf32, #tpu.memory_space<vmem>>, vector<10x96xf32>
    tpu.vector_store %arg19[%c0_31, %c0_32], %33 {strides = array<i32>} : memref<10x96xf32, #tpu.memory_space<vmem>>, vector<10x96xf32>,
    %c0_33 = arith.constant 0 : index
    %c0_34 = arith.constant 0 : index
    %35 = vector.load %arg4[%c0_33, %c0_34] : memref<1x64xf32, #tpu.memory_space<vmem>>, vector<1x64xf32>
    %36 = vector.broadcast %35 : vector<1x64xf32> to vector<8x64xf32>
    %37 = arith.addf %32, %36 : vector<8x64xf32>
    %cst_35 = arith.constant 0.000000e+00 : f32
    %38 = vector.broadcast %cst_35 : f32 to vector<8x64xf32>
    %39 = arith.cmpf ogt, %37, %38 : vector<8x64xf32>
    %cst_36 = arith.constant 2.000000e-01 : f32
    %40 = vector.broadcast %cst_36 : f32 to vector<8x64xf32>
    %41 = arith.mulf %40, %37 : vector<8x64xf32>
    %42 = arith.select %39, %37, %41 : vector<8x64xi1>, vector<8x64xf32>
    %c1_37 = arith.constant 1 : index
    %c16 = arith.constant 16 : index
    %43 = vector.load %arg19[%c1_37, %c16] : memref<10x96xf32, #tpu.memory_space<vmem>>, vector<8x64xf32>
    tpu.vector_store %arg19[%c1_37, %c16], %42 {strides = array<i32>} : memref<10x96xf32, #tpu.memory_space<vmem>>, vector<8x64xf32>,
    %c0_38 = arith.constant 0 : index
    %c0_39 = arith.constant 0 : index
    %44 = vector.load %arg19[%c0_38, %c0_39] : memref<10x96xf32, #tpu.memory_space<vmem>>, vector<10x96xf32>
    %45 = arith.truncf %44 : vector<10x96xf32> to vector<10x96xbf16>
    %c0_40 = arith.constant 0 : index
    %c0_41 = arith.constant 0 : index
    %c0_42 = arith.constant 0 : index
    %46 = vector.load %arg5[%c0_40, %c0_41, %c0_42] : memref<4x4x10xbf16, #tpu.memory_space<vmem>>, vector<1x4x10xbf16>
    %47 = vector.shape_cast %46 : vector<1x4x10xbf16> to vector<4x10xbf16>
    %cst_43 = arith.constant dense<0.000000e+00> : vector<4x96xf32>
    %48 = tpu.matmul %47, %45, %cst_43 {dimension_numbers = #tpu.dot_dimension_numbers<[1], [0], [0], [1], [0, 0, 1, 1], [], []>} : vector<4x10xbf16>, vector<10x96xbf16>, vector<4x96xf32> -> vector<4x96xf32>
    %49 = arith.truncf %48 : vector<4x96xf32> to vector<4x96xbf16>
    %c0_44 = arith.constant 0 : index
    %c0_45 = arith.constant 0 : index
    %c0_46 = arith.constant 0 : index
    %50 = vector.load %arg6[%c0_44, %c0_45, %c0_46] : memref<4x96x80xbf16, #tpu.memory_space<vmem>>, vector<1x96x80xbf16>
    %51 = vector.shape_cast %50 : vector<1x96x80xbf16> to vector<96x80xbf16>
    %cst_47 = arith.constant dense<0.000000e+00> : vector<4x80xf32>
    %52 = tpu.matmul %49, %51, %cst_47 {dimension_numbers = #tpu.dot_dimension_numbers<[1], [0], [0], [1], [0, 0, 1, 1], [], []>} : vector<4x96xbf16>, vector<96x80xbf16>, vector<4x80xf32> -> vector<4x80xf32>
    %c1_48 = arith.constant 1 : index
    %c0_49 = arith.constant 0 : index
    %c0_50 = arith.constant 0 : index
    %53 = vector.load %arg5[%c1_48, %c0_49, %c0_50] : memref<4x4x10xbf16, #tpu.memory_space<vmem>>, vector<1x4x10xbf16>
    %54 = vector.shape_cast %53 : vector<1x4x10xbf16> to vector<4x10xbf16>
    %cst_51 = arith.constant dense<0.000000e+00> : vector<4x96xf32>
    %55 = tpu.matmul %54, %45, %cst_51 {dimension_numbers = #tpu.dot_dimension_numbers<[1], [0], [0], [1], [0, 0, 1, 1], [], []>} : vector<4x10xbf16>, vector<10x96xbf16>, vector<4x96xf32> -> vector<4x96xf32>
    %56 = arith.truncf %55 : vector<4x96xf32> to vector<4x96xbf16>
    %c1_52 = arith.constant 1 : index
    %c0_53 = arith.constant 0 : index
    %c0_54 = arith.constant 0 : index
    %57 = vector.load %arg6[%c1_52, %c0_53, %c0_54] : memref<4x96x80xbf16, #tpu.memory_space<vmem>>, vector<1x96x80xbf16>
    %58 = vector.shape_cast %57 : vector<1x96x80xbf16> to vector<96x80xbf16>
    %cst_55 = arith.constant dense<0.000000e+00> : vector<4x80xf32>
    %59 = tpu.matmul %56, %58, %cst_55 {dimension_numbers = #tpu.dot_dimension_numbers<[1], [0], [0], [1], [0, 0, 1, 1], [], []>} : vector<4x96xbf16>, vector<96x80xbf16>, vector<4x80xf32> -> vector<4x80xf32>
    %60 = arith.addf %52, %59 : vector<4x80xf32>
    %c2_56 = arith.constant 2 : index
    %c0_57 = arith.constant 0 : index
    %c0_58 = arith.constant 0 : index
    %61 = vector.load %arg5[%c2_56, %c0_57, %c0_58] : memref<4x4x10xbf16, #tpu.memory_space<vmem>>, vector<1x4x10xbf16>
    %62 = vector.shape_cast %61 : vector<1x4x10xbf16> to vector<4x10xbf16>
    %cst_59 = arith.constant dense<0.000000e+00> : vector<4x96xf32>
    %63 = tpu.matmul %62, %45, %cst_59 {dimension_numbers = #tpu.dot_dimension_numbers<[1], [0], [0], [1], [0, 0, 1, 1], [], []>} : vector<4x10xbf16>, vector<10x96xbf16>, vector<4x96xf32> -> vector<4x96xf32>
    %64 = arith.truncf %63 : vector<4x96xf32> to vector<4x96xbf16>
    %c2_60 = arith.constant 2 : index
    %c0_61 = arith.constant 0 : index
    %c0_62 = arith.constant 0 : index
    %65 = vector.load %arg6[%c2_60, %c0_61, %c0_62] : memref<4x96x80xbf16, #tpu.memory_space<vmem>>, vector<1x96x80xbf16>
    %66 = vector.shape_cast %65 : vector<1x96x80xbf16> to vector<96x80xbf16>
    %cst_63 = arith.constant dense<0.000000e+00> : vector<4x80xf32>
    %67 = tpu.matmul %64, %66, %cst_63 {dimension_numbers = #tpu.dot_dimension_numbers<[1], [0], [0], [1], [0, 0, 1, 1], [], []>} : vector<4x96xbf16>, vector<96x80xbf16>, vector<4x80xf32> -> vector<4x80xf32>
    %68 = arith.addf %60, %67 : vector<4x80xf32>
    %c3_64 = arith.constant 3 : index
    %c0_65 = arith.constant 0 : index
    %c0_66 = arith.constant 0 : index
    %69 = vector.load %arg5[%c3_64, %c0_65, %c0_66] : memref<4x4x10xbf16, #tpu.memory_space<vmem>>, vector<1x4x10xbf16>
    %70 = vector.shape_cast %69 : vector<1x4x10xbf16> to vector<4x10xbf16>
    %cst_67 = arith.constant dense<0.000000e+00> : vector<4x96xf32>
    %71 = tpu.matmul %70, %45, %cst_67 {dimension_numbers = #tpu.dot_dimension_numbers<[1], [0], [0], [1], [0, 0, 1, 1], [], []>} : vector<4x10xbf16>, vector<10x96xbf16>, vector<4x96xf32> -> vector<4x96xf32>
    %72 = arith.truncf %71 : vector<4x96xf32> to vector<4x96xbf16>
    %c3_68 = arith.constant 3 : index
    %c0_69 = arith.constant 0 : index
    %c0_70 = arith.constant 0 : index
    %73 = vector.load %arg6[%c3_68, %c0_69, %c0_70] : memref<4x96x80xbf16, #tpu.memory_space<vmem>>, vector<1x96x80xbf16>
    %74 = vector.shape_cast %73 : vector<1x96x80xbf16> to vector<96x80xbf16>
    %cst_71 = arith.constant dense<0.000000e+00> : vector<4x80xf32>
    %75 = tpu.matmul %72, %74, %cst_71 {dimension_numbers = #tpu.dot_dimension_numbers<[1], [0], [0], [1], [0, 0, 1, 1], [], []>} : vector<4x96xbf16>, vector<96x80xbf16>, vector<4x80xf32> -> vector<4x80xf32>
    %76 = arith.addf %68, %75 : vector<4x80xf32>
    %cst_72 = arith.constant 0.000000e+00 : f32
    %77 = vector.broadcast %cst_72 : f32 to vector<6x112xf32>
    %c0_73 = arith.constant 0 : index
    %c0_74 = arith.constant 0 : index
    %78 = vector.load %arg20[%c0_73, %c0_74] : memref<6x112xf32, #tpu.memory_space<vmem>>, vector<6x112xf32>
    tpu.vector_store %arg20[%c0_73, %c0_74], %77 {strides = array<i32>} : memref<6x112xf32, #tpu.memory_space<vmem>>, vector<6x112xf32>,
    %cst_75 = arith.constant dense<0.000000e+00> : vector<80xf32>
    %79 = vector.multi_reduction <add>, %76, %cst_75 [0] : vector<4x80xf32> to vector<80xf32>
    %80 = vector.shape_cast %79 : vector<80xf32> to vector<1x80xf32>
    %81 = arith.mulf %76, %76 : vector<4x80xf32>
    %cst_76 = arith.constant dense<0.000000e+00> : vector<80xf32>
    %82 = vector.multi_reduction <add>, %81, %cst_76 [0] : vector<4x80xf32> to vector<80xf32>
    %83 = vector.shape_cast %82 : vector<80xf32> to vector<1x80xf32>
    %84 = vector.extract_strided_slice %80 {offsets = [0, 0], sizes = [1, 16], strides = [1, 1]} : vector<1x80xf32> to vector<1x16xf32>
    %85 = vector.extract_strided_slice %83 {offsets = [0, 0], sizes = [1, 16], strides = [1, 1]} : vector<1x80xf32> to vector<1x16xf32>
    %86 = vector.extract_strided_slice %80 {offsets = [0, 16], sizes = [1, 16], strides = [1, 1]} : vector<1x80xf32> to vector<1x16xf32>
    %87 = arith.addf %84, %86 : vector<1x16xf32>
    %88 = vector.extract_strided_slice %83 {offsets = [0, 16], sizes = [1, 16], strides = [1, 1]} : vector<1x80xf32> to vector<1x16xf32>
    %89 = arith.addf %85, %88 : vector<1x16xf32>
    %90 = vector.extract_strided_slice %80 {offsets = [0, 32], sizes = [1, 16], strides = [1, 1]} : vector<1x80xf32> to vector<1x16xf32>
    %91 = arith.addf %87, %90 : vector<1x16xf32>
    %92 = vector.extract_strided_slice %83 {offsets = [0, 32], sizes = [1, 16], strides = [1, 1]} : vector<1x80xf32> to vector<1x16xf32>
    %93 = arith.addf %89, %92 : vector<1x16xf32>
    %94 = vector.extract_strided_slice %80 {offsets = [0, 48], sizes = [1, 16], strides = [1, 1]} : vector<1x80xf32> to vector<1x16xf32>
    %95 = arith.addf %91, %94 : vector<1x16xf32>
    %96 = vector.extract_strided_slice %83 {offsets = [0, 48], sizes = [1, 16], strides = [1, 1]} : vector<1x80xf32> to vector<1x16xf32>
    %97 = arith.addf %93, %96 : vector<1x16xf32>
    %98 = vector.extract_strided_slice %80 {offsets = [0, 64], sizes = [1, 16], strides = [1, 1]} : vector<1x80xf32> to vector<1x16xf32>
    %99 = arith.addf %95, %98 : vector<1x16xf32>
    %100 = vector.extract_strided_slice %83 {offsets = [0, 64], sizes = [1, 16], strides = [1, 1]} : vector<1x80xf32> to vector<1x16xf32>
    %101 = arith.addf %97, %100 : vector<1x16xf32>
    %cst_77 = arith.constant 5.000000e-02 : f32
    %102 = vector.broadcast %cst_77 : f32 to vector<1x16xf32>
    %103 = arith.mulf %99, %102 : vector<1x16xf32>
    %cst_78 = arith.constant 5.000000e-02 : f32
    %104 = vector.broadcast %cst_78 : f32 to vector<1x16xf32>
    %105 = arith.mulf %101, %104 : vector<1x16xf32>
    %106 = arith.mulf %103, %103 : vector<1x16xf32>
    %107 = arith.subf %105, %106 : vector<1x16xf32>
    %cst_79 = arith.constant 0.000000e+00 : f32
    %108 = vector.broadcast %cst_79 : f32 to vector<1x16xf32>
    %109 = arith.maximumf %107, %108 : vector<1x16xf32>
    %c0_80 = arith.constant 0 : index
    %c0_81 = arith.constant 0 : index
    %110 = vector.load %arg7[%c0_80, %c0_81] : memref<1x16xf32, #tpu.memory_space<vmem>>, vector<1x16xf32>
    %cst_82 = arith.constant 9.99999974E-6 : f32
    %111 = vector.broadcast %cst_82 : f32 to vector<1x16xf32>
    %112 = arith.addf %109, %111 : vector<1x16xf32>
    %113 = math.rsqrt %112 : vector<1x16xf32>
    %114 = arith.mulf %110, %113 : vector<1x16xf32>
    %c0_83 = arith.constant 0 : index
    %c0_84 = arith.constant 0 : index
    %115 = vector.load %arg8[%c0_83, %c0_84] : memref<1x16xf32, #tpu.memory_space<vmem>>, vector<1x16xf32>
    %116 = arith.mulf %103, %114 : vector<1x16xf32>
    %117 = arith.subf %115, %116 : vector<1x16xf32>
    %118 = vector.extract_strided_slice %76 {offsets = [0, 0], sizes = [4, 16], strides = [1, 1]} : vector<4x80xf32> to vector<4x16xf32>
    %119 = vector.broadcast %114 : vector<1x16xf32> to vector<4x16xf32>
    %120 = arith.mulf %118, %119 : vector<4x16xf32>
    %121 = vector.broadcast %117 : vector<1x16xf32> to vector<4x16xf32>
    %122 = arith.addf %120, %121 : vector<4x16xf32>
    %cst_85 = arith.constant 0.000000e+00 : f32
    %123 = vector.broadcast %cst_85 : f32 to vector<4x16xf32>
    %124 = arith.cmpf ogt, %122, %123 : vector<4x16xf32>
    %cst_86 = arith.constant 2.000000e-01 : f32
    %125 = vector.broadcast %cst_86 : f32 to vector<4x16xf32>
    %126 = arith.mulf %125, %122 : vector<4x16xf32>
    %127 = arith.select %124, %122, %126 : vector<4x16xi1>, vector<4x16xf32>
    %c1_87 = arith.constant 1 : index
    %c16_88 = arith.constant 16 : index
    %128 = vector.load %arg20[%c1_87, %c16_88] : memref<6x112xf32, #tpu.memory_space<vmem>>, vector<4x16xf32>
    tpu.vector_store %arg20[%c1_87, %c16_88], %127 {strides = array<i32>} : memref<6x112xf32, #tpu.memory_space<vmem>>, vector<4x16xf32>,
    %129 = vector.extract_strided_slice %76 {offsets = [0, 16], sizes = [4, 16], strides = [1, 1]} : vector<4x80xf32> to vector<4x16xf32>
    %130 = vector.broadcast %114 : vector<1x16xf32> to vector<4x16xf32>
    %131 = arith.mulf %129, %130 : vector<4x16xf32>
    %132 = vector.broadcast %117 : vector<1x16xf32> to vector<4x16xf32>
    %133 = arith.addf %131, %132 : vector<4x16xf32>
    %cst_89 = arith.constant 0.000000e+00 : f32
    %134 = vector.broadcast %cst_89 : f32 to vector<4x16xf32>
    %135 = arith.cmpf ogt, %133, %134 : vector<4x16xf32>
    %cst_90 = arith.constant 2.000000e-01 : f32
    %136 = vector.broadcast %cst_90 : f32 to vector<4x16xf32>
    %137 = arith.mulf %136, %133 : vector<4x16xf32>
    %138 = arith.select %135, %133, %137 : vector<4x16xi1>, vector<4x16xf32>
    %c1_91 = arith.constant 1 : index
    %c32 = arith.constant 32 : index
    %139 = vector.load %arg20[%c1_91, %c32] : memref<6x112xf32, #tpu.memory_space<vmem>>, vector<4x16xf32>
    tpu.vector_store %arg20[%c1_91, %c32], %138 {strides = array<i32>} : memref<6x112xf32, #tpu.memory_space<vmem>>, vector<4x16xf32>,
    %140 = vector.extract_strided_slice %76 {offsets = [0, 32], sizes = [4, 16], strides = [1, 1]} : vector<4x80xf32> to vector<4x16xf32>
    %141 = vector.broadcast %114 : vector<1x16xf32> to vector<4x16xf32>
    %142 = arith.mulf %140, %141 : vector<4x16xf32>
    %143 = vector.broadcast %117 : vector<1x16xf32> to vector<4x16xf32>
    %144 = arith.addf %142, %143 : vector<4x16xf32>
    %cst_92 = arith.constant 0.000000e+00 : f32
    %145 = vector.broadcast %cst_92 : f32 to vector<4x16xf32>
    %146 = arith.cmpf ogt, %144, %145 : vector<4x16xf32>
    %cst_93 = arith.constant 2.000000e-01 : f32
    %147 = vector.broadcast %cst_93 : f32 to vector<4x16xf32>
    %148 = arith.mulf %147, %144 : vector<4x16xf32>
    %149 = arith.select %146, %144, %148 : vector<4x16xi1>, vector<4x16xf32>
    %c1_94 = arith.constant 1 : index
    %c48 = arith.constant 48 : index
    %150 = vector.load %arg20[%c1_94, %c48] : memref<6x112xf32, #tpu.memory_space<vmem>>, vector<4x16xf32>
    tpu.vector_store %arg20[%c1_94, %c48], %149 {strides = array<i32>} : memref<6x112xf32, #tpu.memory_space<vmem>>, vector<4x16xf32>,
    %151 = vector.extract_strided_slice %76 {offsets = [0, 48], sizes = [4, 16], strides = [1, 1]} : vector<4x80xf32> to vector<4x16xf32>
    %152 = vector.broadcast %114 : vector<1x16xf32> to vector<4x16xf32>
    %153 = arith.mulf %151, %152 : vector<4x16xf32>
    %154 = vector.broadcast %117 : vector<1x16xf32> to vector<4x16xf32>
    %155 = arith.addf %153, %154 : vector<4x16xf32>
    %cst_95 = arith.constant 0.000000e+00 : f32
    %156 = vector.broadcast %cst_95 : f32 to vector<4x16xf32>
    %157 = arith.cmpf ogt, %155, %156 : vector<4x16xf32>
    %cst_96 = arith.constant 2.000000e-01 : f32
    %158 = vector.broadcast %cst_96 : f32 to vector<4x16xf32>
    %159 = arith.mulf %158, %155 : vector<4x16xf32>
    %160 = arith.select %157, %155, %159 : vector<4x16xi1>, vector<4x16xf32>
    %c1_97 = arith.constant 1 : index
    %c64 = arith.constant 64 : index
    %161 = vector.load %arg20[%c1_97, %c64] : memref<6x112xf32, #tpu.memory_space<vmem>>, vector<4x16xf32>
    tpu.vector_store %arg20[%c1_97, %c64], %160 {strides = array<i32>} : memref<6x112xf32, #tpu.memory_space<vmem>>, vector<4x16xf32>,
    %162 = vector.extract_strided_slice %76 {offsets = [0, 64], sizes = [4, 16], strides = [1, 1]} : vector<4x80xf32> to vector<4x16xf32>
    %163 = vector.broadcast %114 : vector<1x16xf32> to vector<4x16xf32>
    %164 = arith.mulf %162, %163 : vector<4x16xf32>
    %165 = vector.broadcast %117 : vector<1x16xf32> to vector<4x16xf32>
    %166 = arith.addf %164, %165 : vector<4x16xf32>
    %cst_98 = arith.constant 0.000000e+00 : f32
    %167 = vector.broadcast %cst_98 : f32 to vector<4x16xf32>
    %168 = arith.cmpf ogt, %166, %167 : vector<4x16xf32>
    %cst_99 = arith.constant 2.000000e-01 : f32
    %169 = vector.broadcast %cst_99 : f32 to vector<4x16xf32>
    %170 = arith.mulf %169, %166 : vector<4x16xf32>
    %171 = arith.select %168, %166, %170 : vector<4x16xi1>, vector<4x16xf32>
    %c1_100 = arith.constant 1 : index
    %c80 = arith.constant 80 : index
    %172 = vector.load %arg20[%c1_100, %c80] : memref<6x112xf32, #tpu.memory_space<vmem>>, vector<4x16xf32>
    tpu.vector_store %arg20[%c1_100, %c80], %171 {strides = array<i32>} : memref<6x112xf32, #tpu.memory_space<vmem>>, vector<4x16xf32>,
    %c0_101 = arith.constant 0 : index
    %c0_102 = arith.constant 0 : index
    %173 = vector.load %arg20[%c0_101, %c0_102] : memref<6x112xf32, #tpu.memory_space<vmem>>, vector<6x112xf32>
    %174 = arith.truncf %173 : vector<6x112xf32> to vector<6x112xbf16>
    %c0_103 = arith.constant 0 : index
    %c0_104 = arith.constant 0 : index
    %c0_105 = arith.constant 0 : index
    %175 = vector.load %arg9[%c0_103, %c0_104, %c0_105] : memref<4x2x6xbf16, #tpu.memory_space<vmem>>, vector<1x2x6xbf16>
    %176 = vector.shape_cast %175 : vector<1x2x6xbf16> to vector<2x6xbf16>
    %cst_106 = arith.constant dense<0.000000e+00> : vector<2x112xf32>
    %177 = tpu.matmul %176, %174, %cst_106 {dimension_numbers = #tpu.dot_dimension_numbers<[1], [0], [0], [1], [0, 0, 1, 1], [], []>} : vector<2x6xbf16>, vector<6x112xbf16>, vector<2x112xf32> -> vector<2x112xf32>
    %178 = arith.truncf %177 : vector<2x112xf32> to vector<2x112xbf16>
    %c0_107 = arith.constant 0 : index
    %c0_108 = arith.constant 0 : index
    %c0_109 = arith.constant 0 : index
    %179 = vector.load %arg10[%c0_107, %c0_108, %c0_109] : memref<4x112x64xbf16, #tpu.memory_space<vmem>>, vector<1x112x64xbf16>
    %180 = vector.shape_cast %179 : vector<1x112x64xbf16> to vector<112x64xbf16>
    %cst_110 = arith.constant dense<0.000000e+00> : vector<2x64xf32>
    %181 = tpu.matmul %178, %180, %cst_110 {dimension_numbers = #tpu.dot_dimension_numbers<[1], [0], [0], [1], [0, 0, 1, 1], [], []>} : vector<2x112xbf16>, vector<112x64xbf16>, vector<2x64xf32> -> vector<2x64xf32>
    %c1_111 = arith.constant 1 : index
    %c0_112 = arith.constant 0 : index
    %c0_113 = arith.constant 0 : index
    %182 = vector.load %arg9[%c1_111, %c0_112, %c0_113] : memref<4x2x6xbf16, #tpu.memory_space<vmem>>, vector<1x2x6xbf16>
    %183 = vector.shape_cast %182 : vector<1x2x6xbf16> to vector<2x6xbf16>
    %cst_114 = arith.constant dense<0.000000e+00> : vector<2x112xf32>
    %184 = tpu.matmul %183, %174, %cst_114 {dimension_numbers = #tpu.dot_dimension_numbers<[1], [0], [0], [1], [0, 0, 1, 1], [], []>} : vector<2x6xbf16>, vector<6x112xbf16>, vector<2x112xf32> -> vector<2x112xf32>
    %185 = arith.truncf %184 : vector<2x112xf32> to vector<2x112xbf16>
    %c1_115 = arith.constant 1 : index
    %c0_116 = arith.constant 0 : index
    %c0_117 = arith.constant 0 : index
    %186 = vector.load %arg10[%c1_115, %c0_116, %c0_117] : memref<4x112x64xbf16, #tpu.memory_space<vmem>>, vector<1x112x64xbf16>
    %187 = vector.shape_cast %186 : vector<1x112x64xbf16> to vector<112x64xbf16>
    %cst_118 = arith.constant dense<0.000000e+00> : vector<2x64xf32>
    %188 = tpu.matmul %185, %187, %cst_118 {dimension_numbers = #tpu.dot_dimension_numbers<[1], [0], [0], [1], [0, 0, 1, 1], [], []>} : vector<2x112xbf16>, vector<112x64xbf16>, vector<2x64xf32> -> vector<2x64xf32>
    %189 = arith.addf %181, %188 : vector<2x64xf32>
    %c2_119 = arith.constant 2 : index
    %c0_120 = arith.constant 0 : index
    %c0_121 = arith.constant 0 : index
    %190 = vector.load %arg9[%c2_119, %c0_120, %c0_121] : memref<4x2x6xbf16, #tpu.memory_space<vmem>>, vector<1x2x6xbf16>
    %191 = vector.shape_cast %190 : vector<1x2x6xbf16> to vector<2x6xbf16>
    %cst_122 = arith.constant dense<0.000000e+00> : vector<2x112xf32>
    %192 = tpu.matmul %191, %174, %cst_122 {dimension_numbers = #tpu.dot_dimension_numbers<[1], [0], [0], [1], [0, 0, 1, 1], [], []>} : vector<2x6xbf16>, vector<6x112xbf16>, vector<2x112xf32> -> vector<2x112xf32>
    %193 = arith.truncf %192 : vector<2x112xf32> to vector<2x112xbf16>
    %c2_123 = arith.constant 2 : index
    %c0_124 = arith.constant 0 : index
    %c0_125 = arith.constant 0 : index
    %194 = vector.load %arg10[%c2_123, %c0_124, %c0_125] : memref<4x112x64xbf16, #tpu.memory_space<vmem>>, vector<1x112x64xbf16>
    %195 = vector.shape_cast %194 : vector<1x112x64xbf16> to vector<112x64xbf16>
    %cst_126 = arith.constant dense<0.000000e+00> : vector<2x64xf32>
    %196 = tpu.matmul %193, %195, %cst_126 {dimension_numbers = #tpu.dot_dimension_numbers<[1], [0], [0], [1], [0, 0, 1, 1], [], []>} : vector<2x112xbf16>, vector<112x64xbf16>, vector<2x64xf32> -> vector<2x64xf32>
    %197 = arith.addf %189, %196 : vector<2x64xf32>
    %c3_127 = arith.constant 3 : index
    %c0_128 = arith.constant 0 : index
    %c0_129 = arith.constant 0 : index
    %198 = vector.load %arg9[%c3_127, %c0_128, %c0_129] : memref<4x2x6xbf16, #tpu.memory_space<vmem>>, vector<1x2x6xbf16>
    %199 = vector.shape_cast %198 : vector<1x2x6xbf16> to vector<2x6xbf16>
    %cst_130 = arith.constant dense<0.000000e+00> : vector<2x112xf32>
    %200 = tpu.matmul %199, %174, %cst_130 {dimension_numbers = #tpu.dot_dimension_numbers<[1], [0], [0], [1], [0, 0, 1, 1], [], []>} : vector<2x6xbf16>, vector<6x112xbf16>, vector<2x112xf32> -> vector<2x112xf32>
    %201 = arith.truncf %200 : vector<2x112xf32> to vector<2x112xbf16>
    %c3_131 = arith.constant 3 : index
    %c0_132 = arith.constant 0 : index
    %c0_133 = arith.constant 0 : index
    %202 = vector.load %arg10[%c3_131, %c0_132, %c0_133] : memref<4x112x64xbf16, #tpu.memory_space<vmem>>, vector<1x112x64xbf16>
    %203 = vector.shape_cast %202 : vector<1x112x64xbf16> to vector<112x64xbf16>
    %cst_134 = arith.constant dense<0.000000e+00> : vector<2x64xf32>
    %204 = tpu.matmul %201, %203, %cst_134 {dimension_numbers = #tpu.dot_dimension_numbers<[1], [0], [0], [1], [0, 0, 1, 1], [], []>} : vector<2x112xbf16>, vector<112x64xbf16>, vector<2x64xf32> -> vector<2x64xf32>
    %205 = arith.addf %197, %204 : vector<2x64xf32>
    %cst_135 = arith.constant 0.000000e+00 : f32
    %206 = vector.broadcast %cst_135 : f32 to vector<6x192xf32>
    %c0_136 = arith.constant 0 : index
    %c0_137 = arith.constant 0 : index
    %207 = vector.load %arg21[%c0_136, %c0_137] : memref<6x192xf32, #tpu.memory_space<vmem>>, vector<6x192xf32>
    tpu.vector_store %arg21[%c0_136, %c0_137], %206 {strides = array<i32>} : memref<6x192xf32, #tpu.memory_space<vmem>>, vector<6x192xf32>,
    %cst_138 = arith.constant dense<0.000000e+00> : vector<64xf32>
    %208 = vector.multi_reduction <add>, %205, %cst_138 [0] : vector<2x64xf32> to vector<64xf32>
    %209 = vector.shape_cast %208 : vector<64xf32> to vector<1x64xf32>
    %210 = arith.mulf %205, %205 : vector<2x64xf32>
    %cst_139 = arith.constant dense<0.000000e+00> : vector<64xf32>
    %211 = vector.multi_reduction <add>, %210, %cst_139 [0] : vector<2x64xf32> to vector<64xf32>
    %212 = vector.shape_cast %211 : vector<64xf32> to vector<1x64xf32>
    %213 = vector.extract_strided_slice %209 {offsets = [0, 0], sizes = [1, 32], strides = [1, 1]} : vector<1x64xf32> to vector<1x32xf32>
    %214 = vector.extract_strided_slice %212 {offsets = [0, 0], sizes = [1, 32], strides = [1, 1]} : vector<1x64xf32> to vector<1x32xf32>
    %215 = vector.extract_strided_slice %209 {offsets = [0, 32], sizes = [1, 32], strides = [1, 1]} : vector<1x64xf32> to vector<1x32xf32>
    %216 = arith.addf %213, %215 : vector<1x32xf32>
    %217 = vector.extract_strided_slice %212 {offsets = [0, 32], sizes = [1, 32], strides = [1, 1]} : vector<1x64xf32> to vector<1x32xf32>
    %218 = arith.addf %214, %217 : vector<1x32xf32>
    %cst_140 = arith.constant 2.500000e-01 : f32
    %219 = vector.broadcast %cst_140 : f32 to vector<1x32xf32>
    %220 = arith.mulf %216, %219 : vector<1x32xf32>
    %cst_141 = arith.constant 2.500000e-01 : f32
    %221 = vector.broadcast %cst_141 : f32 to vector<1x32xf32>
    %222 = arith.mulf %218, %221 : vector<1x32xf32>
    %223 = arith.mulf %220, %220 : vector<1x32xf32>
    %224 = arith.subf %222, %223 : vector<1x32xf32>
    %cst_142 = arith.constant 0.000000e+00 : f32
    %225 = vector.broadcast %cst_142 : f32 to vector<1x32xf32>
    %226 = arith.maximumf %224, %225 : vector<1x32xf32>
    %c0_143 = arith.constant 0 : index
    %c0_144 = arith.constant 0 : index
    %227 = vector.load %arg11[%c0_143, %c0_144] : memref<1x32xf32, #tpu.memory_space<vmem>>, vector<1x32xf32>
    %cst_145 = arith.constant 9.99999974E-6 : f32
    %228 = vector.broadcast %cst_145 : f32 to vector<1x32xf32>
    %229 = arith.addf %226, %228 : vector<1x32xf32>
    %230 = math.rsqrt %229 : vector<1x32xf32>
    %231 = arith.mulf %227, %230 : vector<1x32xf32>
    %c0_146 = arith.constant 0 : index
    %c0_147 = arith.constant 0 : index
    %232 = vector.load %arg12[%c0_146, %c0_147] : memref<1x32xf32, #tpu.memory_space<vmem>>, vector<1x32xf32>
    %233 = arith.mulf %220, %231 : vector<1x32xf32>
    %234 = arith.subf %232, %233 : vector<1x32xf32>
    %235 = vector.extract_strided_slice %205 {offsets = [0, 0], sizes = [2, 32], strides = [1, 1]} : vector<2x64xf32> to vector<2x32xf32>
    %236 = vector.broadcast %231 : vector<1x32xf32> to vector<2x32xf32>
    %237 = arith.mulf %235, %236 : vector<2x32xf32>
    %238 = vector.broadcast %234 : vector<1x32xf32> to vector<2x32xf32>
    %239 = arith.addf %237, %238 : vector<2x32xf32>
    %cst_148 = arith.constant 0.000000e+00 : f32
    %240 = vector.broadcast %cst_148 : f32 to vector<2x32xf32>
    %241 = arith.cmpf ogt, %239, %240 : vector<2x32xf32>
    %cst_149 = arith.constant 2.000000e-01 : f32
    %242 = vector.broadcast %cst_149 : f32 to vector<2x32xf32>
    %243 = arith.mulf %242, %239 : vector<2x32xf32>
    %244 = arith.select %241, %239, %243 : vector<2x32xi1>, vector<2x32xf32>
    %c2_150 = arith.constant 2 : index
    %c64_151 = arith.constant 64 : index
    %245 = vector.load %arg21[%c2_150, %c64_151] : memref<6x192xf32, #tpu.memory_space<vmem>>, vector<2x32xf32>
    tpu.vector_store %arg21[%c2_150, %c64_151], %244 {strides = array<i32>} : memref<6x192xf32, #tpu.memory_space<vmem>>, vector<2x32xf32>,
    %246 = vector.extract_strided_slice %205 {offsets = [0, 32], sizes = [2, 32], strides = [1, 1]} : vector<2x64xf32> to vector<2x32xf32>
    %247 = vector.broadcast %231 : vector<1x32xf32> to vector<2x32xf32>
    %248 = arith.mulf %246, %247 : vector<2x32xf32>
    %249 = vector.broadcast %234 : vector<1x32xf32> to vector<2x32xf32>
    %250 = arith.addf %248, %249 : vector<2x32xf32>
    %cst_152 = arith.constant 0.000000e+00 : f32
    %251 = vector.broadcast %cst_152 : f32 to vector<2x32xf32>
    %252 = arith.cmpf ogt, %250, %251 : vector<2x32xf32>
    %cst_153 = arith.constant 2.000000e-01 : f32
    %253 = vector.broadcast %cst_153 : f32 to vector<2x32xf32>
    %254 = arith.mulf %253, %250 : vector<2x32xf32>
    %255 = arith.select %252, %250, %254 : vector<2x32xi1>, vector<2x32xf32>
    %c2_154 = arith.constant 2 : index
    %c96 = arith.constant 96 : index
    %256 = vector.load %arg21[%c2_154, %c96] : memref<6x192xf32, #tpu.memory_space<vmem>>, vector<2x32xf32>
    tpu.vector_store %arg21[%c2_154, %c96], %255 {strides = array<i32>} : memref<6x192xf32, #tpu.memory_space<vmem>>, vector<2x32xf32>,
    %c0_155 = arith.constant 0 : index
    %c0_156 = arith.constant 0 : index
    %257 = vector.load %arg21[%c0_155, %c0_156] : memref<6x192xf32, #tpu.memory_space<vmem>>, vector<6x192xf32>
    %258 = vector.extract_strided_slice %257 {offsets = [0, 0], sizes = [3, 192], strides = [1, 1]} : vector<6x192xf32> to vector<3x192xf32>
    %259 = arith.truncf %258 : vector<3x192xf32> to vector<3x192xbf16>
    %c0_157 = arith.constant 0 : index
    %c0_158 = arith.constant 0 : index
    %c0_159 = arith.constant 0 : index
    %260 = vector.load %arg13[%c0_157, %c0_158, %c0_159] : memref<4x192x192xbf16, #tpu.memory_space<vmem>>, vector<1x192x192xbf16>
    %261 = vector.shape_cast %260 : vector<1x192x192xbf16> to vector<192x192xbf16>
    %cst_160 = arith.constant dense<0.000000e+00> : vector<3x192xf32>
    %262 = tpu.matmul %259, %261, %cst_160 {dimension_numbers = #tpu.dot_dimension_numbers<[1], [0], [0], [1], [0, 0, 1, 1], [], []>} : vector<3x192xbf16>, vector<192x192xbf16>, vector<3x192xf32> -> vector<3x192xf32>
    %263 = vector.extract_strided_slice %257 {offsets = [1, 0], sizes = [3, 192], strides = [1, 1]} : vector<6x192xf32> to vector<3x192xf32>
    %264 = arith.truncf %263 : vector<3x192xf32> to vector<3x192xbf16>
    %c1_161 = arith.constant 1 : index
    %c0_162 = arith.constant 0 : index
    %c0_163 = arith.constant 0 : index
    %265 = vector.load %arg13[%c1_161, %c0_162, %c0_163] : memref<4x192x192xbf16, #tpu.memory_space<vmem>>, vector<1x192x192xbf16>
    %266 = vector.shape_cast %265 : vector<1x192x192xbf16> to vector<192x192xbf16>
    %cst_164 = arith.constant dense<0.000000e+00> : vector<3x192xf32>
    %267 = tpu.matmul %264, %266, %cst_164 {dimension_numbers = #tpu.dot_dimension_numbers<[1], [0], [0], [1], [0, 0, 1, 1], [], []>} : vector<3x192xbf16>, vector<192x192xbf16>, vector<3x192xf32> -> vector<3x192xf32>
    %268 = arith.addf %262, %267 : vector<3x192xf32>
    %269 = vector.extract_strided_slice %257 {offsets = [2, 0], sizes = [3, 192], strides = [1, 1]} : vector<6x192xf32> to vector<3x192xf32>
    %270 = arith.truncf %269 : vector<3x192xf32> to vector<3x192xbf16>
    %c2_165 = arith.constant 2 : index
    %c0_166 = arith.constant 0 : index
    %c0_167 = arith.constant 0 : index
    %271 = vector.load %arg13[%c2_165, %c0_166, %c0_167] : memref<4x192x192xbf16, #tpu.memory_space<vmem>>, vector<1x192x192xbf16>
    %272 = vector.shape_cast %271 : vector<1x192x192xbf16> to vector<192x192xbf16>
    %cst_168 = arith.constant dense<0.000000e+00> : vector<3x192xf32>
    %273 = tpu.matmul %270, %272, %cst_168 {dimension_numbers = #tpu.dot_dimension_numbers<[1], [0], [0], [1], [0, 0, 1, 1], [], []>} : vector<3x192xbf16>, vector<192x192xbf16>, vector<3x192xf32> -> vector<3x192xf32>
    %274 = arith.addf %268, %273 : vector<3x192xf32>
    %275 = vector.extract_strided_slice %257 {offsets = [3, 0], sizes = [3, 192], strides = [1, 1]} : vector<6x192xf32> to vector<3x192xf32>
    %276 = arith.truncf %275 : vector<3x192xf32> to vector<3x192xbf16>
    %c3_169 = arith.constant 3 : index
    %c0_170 = arith.constant 0 : index
    %c0_171 = arith.constant 0 : index
    %277 = vector.load %arg13[%c3_169, %c0_170, %c0_171] : memref<4x192x192xbf16, #tpu.memory_space<vmem>>, vector<1x192x192xbf16>
    %278 = vector.shape_cast %277 : vector<1x192x192xbf16> to vector<192x192xbf16>
    %cst_172 = arith.constant dense<0.000000e+00> : vector<3x192xf32>
    %279 = tpu.matmul %276, %278, %cst_172 {dimension_numbers = #tpu.dot_dimension_numbers<[1], [0], [0], [1], [0, 0, 1, 1], [], []>} : vector<3x192xbf16>, vector<192x192xbf16>, vector<3x192xf32> -> vector<3x192xf32>
    %280 = arith.addf %274, %279 : vector<3x192xf32>
    %cst_173 = arith.constant 0.000000e+00 : f32
    %281 = vector.broadcast %cst_173 : f32 to vector<5x320xf32>
    %c0_174 = arith.constant 0 : index
    %c0_175 = arith.constant 0 : index
    %282 = vector.load %arg22[%c0_174, %c0_175] : memref<5x320xf32, #tpu.memory_space<vmem>>, vector<5x320xf32>
    tpu.vector_store %arg22[%c0_174, %c0_175], %281 {strides = array<i32>} : memref<5x320xf32, #tpu.memory_space<vmem>>, vector<5x320xf32>,
    %cst_176 = arith.constant dense<0.000000e+00> : vector<192xf32>
    %283 = vector.multi_reduction <add>, %280, %cst_176 [0] : vector<3x192xf32> to vector<192xf32>
    %284 = vector.shape_cast %283 : vector<192xf32> to vector<1x192xf32>
    %285 = arith.mulf %280, %280 : vector<3x192xf32>
    %cst_177 = arith.constant dense<0.000000e+00> : vector<192xf32>
    %286 = vector.multi_reduction <add>, %285, %cst_177 [0] : vector<3x192xf32> to vector<192xf32>
    %287 = vector.shape_cast %286 : vector<192xf32> to vector<1x192xf32>
    %288 = vector.extract_strided_slice %284 {offsets = [0, 0], sizes = [1, 64], strides = [1, 1]} : vector<1x192xf32> to vector<1x64xf32>
    %289 = vector.extract_strided_slice %287 {offsets = [0, 0], sizes = [1, 64], strides = [1, 1]} : vector<1x192xf32> to vector<1x64xf32>
    %290 = vector.extract_strided_slice %284 {offsets = [0, 64], sizes = [1, 64], strides = [1, 1]} : vector<1x192xf32> to vector<1x64xf32>
    %291 = arith.addf %288, %290 : vector<1x64xf32>
    %292 = vector.extract_strided_slice %287 {offsets = [0, 64], sizes = [1, 64], strides = [1, 1]} : vector<1x192xf32> to vector<1x64xf32>
    %293 = arith.addf %289, %292 : vector<1x64xf32>
    %294 = vector.extract_strided_slice %284 {offsets = [0, 128], sizes = [1, 64], strides = [1, 1]} : vector<1x192xf32> to vector<1x64xf32>
    %295 = arith.addf %291, %294 : vector<1x64xf32>
    %296 = vector.extract_strided_slice %287 {offsets = [0, 128], sizes = [1, 64], strides = [1, 1]} : vector<1x192xf32> to vector<1x64xf32>
    %297 = arith.addf %293, %296 : vector<1x64xf32>
    %cst_178 = arith.constant 0.111111112 : f32
    %298 = vector.broadcast %cst_178 : f32 to vector<1x64xf32>
    %299 = arith.mulf %295, %298 : vector<1x64xf32>
    %cst_179 = arith.constant 0.111111112 : f32
    %300 = vector.broadcast %cst_179 : f32 to vector<1x64xf32>
    %301 = arith.mulf %297, %300 : vector<1x64xf32>
    %302 = arith.mulf %299, %299 : vector<1x64xf32>
    %303 = arith.subf %301, %302 : vector<1x64xf32>
    %cst_180 = arith.constant 0.000000e+00 : f32
    %304 = vector.broadcast %cst_180 : f32 to vector<1x64xf32>
    %305 = arith.maximumf %303, %304 : vector<1x64xf32>
    %c0_181 = arith.constant 0 : index
    %c0_182 = arith.constant 0 : index
    %306 = vector.load %arg14[%c0_181, %c0_182] : memref<1x64xf32, #tpu.memory_space<vmem>>, vector<1x64xf32>
    %cst_183 = arith.constant 9.99999974E-6 : f32
    %307 = vector.broadcast %cst_183 : f32 to vector<1x64xf32>
    %308 = arith.addf %305, %307 : vector<1x64xf32>
    %309 = math.rsqrt %308 : vector<1x64xf32>
    %310 = arith.mulf %306, %309 : vector<1x64xf32>
    %c0_184 = arith.constant 0 : index
    %c0_185 = arith.constant 0 : index
    %311 = vector.load %arg15[%c0_184, %c0_185] : memref<1x64xf32, #tpu.memory_space<vmem>>, vector<1x64xf32>
    %312 = arith.mulf %299, %310 : vector<1x64xf32>
    %313 = arith.subf %311, %312 : vector<1x64xf32>
    %314 = vector.extract_strided_slice %280 {offsets = [0, 0], sizes = [3, 64], strides = [1, 1]} : vector<3x192xf32> to vector<3x64xf32>
    %315 = vector.broadcast %310 : vector<1x64xf32> to vector<3x64xf32>
    %316 = arith.mulf %314, %315 : vector<3x64xf32>
    %317 = vector.broadcast %313 : vector<1x64xf32> to vector<3x64xf32>
    %318 = arith.addf %316, %317 : vector<3x64xf32>
    %cst_186 = arith.constant 0.000000e+00 : f32
    %319 = vector.broadcast %cst_186 : f32 to vector<3x64xf32>
    %320 = arith.cmpf ogt, %318, %319 : vector<3x64xf32>
    %cst_187 = arith.constant 2.000000e-01 : f32
    %321 = vector.broadcast %cst_187 : f32 to vector<3x64xf32>
    %322 = arith.mulf %321, %318 : vector<3x64xf32>
    %323 = arith.select %320, %318, %322 : vector<3x64xi1>, vector<3x64xf32>
    %c1_188 = arith.constant 1 : index
    %c64_189 = arith.constant 64 : index
    %324 = vector.load %arg22[%c1_188, %c64_189] : memref<5x320xf32, #tpu.memory_space<vmem>>, vector<3x64xf32>
    tpu.vector_store %arg22[%c1_188, %c64_189], %323 {strides = array<i32>} : memref<5x320xf32, #tpu.memory_space<vmem>>, vector<3x64xf32>,
    %325 = vector.extract_strided_slice %280 {offsets = [0, 64], sizes = [3, 64], strides = [1, 1]} : vector<3x192xf32> to vector<3x64xf32>
    %326 = vector.broadcast %310 : vector<1x64xf32> to vector<3x64xf32>
    %327 = arith.mulf %325, %326 : vector<3x64xf32>
    %328 = vector.broadcast %313 : vector<1x64xf32> to vector<3x64xf32>
    %329 = arith.addf %327, %328 : vector<3x64xf32>
    %cst_190 = arith.constant 0.000000e+00 : f32
    %330 = vector.broadcast %cst_190 : f32 to vector<3x64xf32>
    %331 = arith.cmpf ogt, %329, %330 : vector<3x64xf32>
    %cst_191 = arith.constant 2.000000e-01 : f32
    %332 = vector.broadcast %cst_191 : f32 to vector<3x64xf32>
    %333 = arith.mulf %332, %329 : vector<3x64xf32>
    %334 = arith.select %331, %329, %333 : vector<3x64xi1>, vector<3x64xf32>
    %c1_192 = arith.constant 1 : index
    %c128 = arith.constant 128 : index
    %335 = vector.load %arg22[%c1_192, %c128] : memref<5x320xf32, #tpu.memory_space<vmem>>, vector<3x64xf32>
    tpu.vector_store %arg22[%c1_192, %c128], %334 {strides = array<i32>} : memref<5x320xf32, #tpu.memory_space<vmem>>, vector<3x64xf32>,
    %336 = vector.extract_strided_slice %280 {offsets = [0, 128], sizes = [3, 64], strides = [1, 1]} : vector<3x192xf32> to vector<3x64xf32>
    %337 = vector.broadcast %310 : vector<1x64xf32> to vector<3x64xf32>
    %338 = arith.mulf %336, %337 : vector<3x64xf32>
    %339 = vector.broadcast %313 : vector<1x64xf32> to vector<3x64xf32>
    %340 = arith.addf %338, %339 : vector<3x64xf32>
    %cst_193 = arith.constant 0.000000e+00 : f32
    %341 = vector.broadcast %cst_193 : f32 to vector<3x64xf32>
    %342 = arith.cmpf ogt, %340, %341 : vector<3x64xf32>
    %cst_194 = arith.constant 2.000000e-01 : f32
    %343 = vector.broadcast %cst_194 : f32 to vector<3x64xf32>
    %344 = arith.mulf %343, %340 : vector<3x64xf32>
    %345 = arith.select %342, %340, %344 : vector<3x64xi1>, vector<3x64xf32>
    %c1_195 = arith.constant 1 : index
    %c192 = arith.constant 192 : index
    %346 = vector.load %arg22[%c1_195, %c192] : memref<5x320xf32, #tpu.memory_space<vmem>>, vector<3x64xf32>
    tpu.vector_store %arg22[%c1_195, %c192], %345 {strides = array<i32>} : memref<5x320xf32, #tpu.memory_space<vmem>>, vector<3x64xf32>,
    %c0_196 = arith.constant 0 : index
    %c0_197 = arith.constant 0 : index
    %347 = vector.load %arg22[%c0_196, %c0_197] : memref<5x320xf32, #tpu.memory_space<vmem>>, vector<5x320xf32>
    %348 = vector.extract_strided_slice %347 {offsets = [0, 0], sizes = [2, 320], strides = [1, 1]} : vector<5x320xf32> to vector<2x320xf32>
    %349 = arith.truncf %348 : vector<2x320xf32> to vector<2x320xbf16>
    %c0_198 = arith.constant 0 : index
    %c0_199 = arith.constant 0 : index
    %c0_200 = arith.constant 0 : index
    %350 = vector.load %arg16[%c0_198, %c0_199, %c0_200] : memref<4x320x2xbf16, #tpu.memory_space<vmem>>, vector<1x320x2xbf16>
    %351 = vector.shape_cast %350 : vector<1x320x2xbf16> to vector<320x2xbf16>
    %cst_201 = arith.constant dense<0.000000e+00> : vector<2x2xf32>
    %352 = tpu.matmul %349, %351, %cst_201 {dimension_numbers = #tpu.dot_dimension_numbers<[1], [0], [0], [1], [0, 0, 1, 1], [], []>} : vector<2x320xbf16>, vector<320x2xbf16>, vector<2x2xf32> -> vector<2x2xf32>
    %353 = vector.extract_strided_slice %347 {offsets = [1, 0], sizes = [2, 320], strides = [1, 1]} : vector<5x320xf32> to vector<2x320xf32>
    %354 = arith.truncf %353 : vector<2x320xf32> to vector<2x320xbf16>
    %c1_202 = arith.constant 1 : index
    %c0_203 = arith.constant 0 : index
    %c0_204 = arith.constant 0 : index
    %355 = vector.load %arg16[%c1_202, %c0_203, %c0_204] : memref<4x320x2xbf16, #tpu.memory_space<vmem>>, vector<1x320x2xbf16>
    %356 = vector.shape_cast %355 : vector<1x320x2xbf16> to vector<320x2xbf16>
    %cst_205 = arith.constant dense<0.000000e+00> : vector<2x2xf32>
    %357 = tpu.matmul %354, %356, %cst_205 {dimension_numbers = #tpu.dot_dimension_numbers<[1], [0], [0], [1], [0, 0, 1, 1], [], []>} : vector<2x320xbf16>, vector<320x2xbf16>, vector<2x2xf32> -> vector<2x2xf32>
    %358 = arith.addf %352, %357 : vector<2x2xf32>
    %359 = vector.extract_strided_slice %347 {offsets = [2, 0], sizes = [2, 320], strides = [1, 1]} : vector<5x320xf32> to vector<2x320xf32>
    %360 = arith.truncf %359 : vector<2x320xf32> to vector<2x320xbf16>
    %c2_206 = arith.constant 2 : index
    %c0_207 = arith.constant 0 : index
    %c0_208 = arith.constant 0 : index
    %361 = vector.load %arg16[%c2_206, %c0_207, %c0_208] : memref<4x320x2xbf16, #tpu.memory_space<vmem>>, vector<1x320x2xbf16>
    %362 = vector.shape_cast %361 : vector<1x320x2xbf16> to vector<320x2xbf16>
    %cst_209 = arith.constant dense<0.000000e+00> : vector<2x2xf32>
    %363 = tpu.matmul %360, %362, %cst_209 {dimension_numbers = #tpu.dot_dimension_numbers<[1], [0], [0], [1], [0, 0, 1, 1], [], []>} : vector<2x320xbf16>, vector<320x2xbf16>, vector<2x2xf32> -> vector<2x2xf32>
    %364 = arith.addf %358, %363 : vector<2x2xf32>
    %365 = vector.extract_strided_slice %347 {offsets = [3, 0], sizes = [2, 320], strides = [1, 1]} : vector<5x320xf32> to vector<2x320xf32>
    %366 = arith.truncf %365 : vector<2x320xf32> to vector<2x320xbf16>
    %c3_210 = arith.constant 3 : index
    %c0_211 = arith.constant 0 : index
    %c0_212 = arith.constant 0 : index
    %367 = vector.load %arg16[%c3_210, %c0_211, %c0_212] : memref<4x320x2xbf16, #tpu.memory_space<vmem>>, vector<1x320x2xbf16>
    %368 = vector.shape_cast %367 : vector<1x320x2xbf16> to vector<320x2xbf16>
    %cst_213 = arith.constant dense<0.000000e+00> : vector<2x2xf32>
    %369 = tpu.matmul %366, %368, %cst_213 {dimension_numbers = #tpu.dot_dimension_numbers<[1], [0], [0], [1], [0, 0, 1, 1], [], []>} : vector<2x320xbf16>, vector<320x2xbf16>, vector<2x2xf32> -> vector<2x2xf32>
    %370 = arith.addf %364, %369 : vector<2x2xf32>
    %c0_214 = arith.constant 0 : index
    %c0_215 = arith.constant 0 : index
    %371 = vector.load %arg17[%c0_214, %c0_215] : memref<1x2xf32, #tpu.memory_space<vmem>>, vector<1x2xf32>
    %372 = vector.broadcast %371 : vector<1x2xf32> to vector<2x2xf32>
    %373 = arith.addf %370, %372 : vector<2x2xf32>
    %c0_216 = arith.constant 0 : index
    %c0_217 = arith.constant 0 : index
    %c0_218 = arith.constant 0 : index
    %374 = vector.load %arg18[%c0_216, %c0_217, %c0_218] : memref<1x2x2xf32, #tpu.memory_space<vmem>>, vector<1x2x2xf32>
    %375 = vector.shape_cast %374 : vector<1x2x2xf32> to vector<2x2xf32>
    %376 = vector.shape_cast %373 : vector<2x2xf32> to vector<1x2x2xf32>
    tpu.vector_store %arg18[%c0_216, %c0_217, %c0_218], %376 {strides = array<i32>} : memref<1x2x2xf32, #tpu.memory_space<vmem>>, vector<1x2x2xf32>,
    return
  }
  func.func @transform_0(%arg0: i32) -> (i32, i32, i32) {
    %c0_i32 = arith.constant 0 : i32
    %c0_i32_0 = arith.constant 0 : i32
    %c0_i32_1 = arith.constant 0 : i32
    return %arg0, %c0_i32, %c0_i32_0 : i32, i32, i32
  }
  func.func @transform_1(%arg0: i32) -> (i32, i32, i32) {
    %c0_i32 = arith.constant 0 : i32
    %c0_i32_0 = arith.constant 0 : i32
    %c0_i32_1 = arith.constant 0 : i32
    %c0_i32_2 = arith.constant 0 : i32
    return %c0_i32, %c0_i32_0, %c0_i32_1 : i32, i32, i32
  }
  func.func @transform_2(%arg0: i32) -> (i32, i32, i32) {
    %c0_i32 = arith.constant 0 : i32
    %c0_i32_0 = arith.constant 0 : i32
    %c0_i32_1 = arith.constant 0 : i32
    %c0_i32_2 = arith.constant 0 : i32
    return %c0_i32, %c0_i32_0, %c0_i32_1 : i32, i32, i32
  }
  func.func @transform_3(%arg0: i32) -> (i32, i32) {
    %c0_i32 = arith.constant 0 : i32
    %c0_i32_0 = arith.constant 0 : i32
    %c0_i32_1 = arith.constant 0 : i32
    return %c0_i32, %c0_i32_0 : i32, i32
  }
  func.func @transform_4(%arg0: i32) -> (i32, i32, i32) {
    %c0_i32 = arith.constant 0 : i32
    %c0_i32_0 = arith.constant 0 : i32
    %c0_i32_1 = arith.constant 0 : i32
    %c0_i32_2 = arith.constant 0 : i32
    return %c0_i32, %c0_i32_0, %c0_i32_1 : i32, i32, i32
  }
  func.func @transform_5(%arg0: i32) -> (i32, i32, i32) {
    %c0_i32 = arith.constant 0 : i32
    %c0_i32_0 = arith.constant 0 : i32
    %c0_i32_1 = arith.constant 0 : i32
    %c0_i32_2 = arith.constant 0 : i32
    return %c0_i32, %c0_i32_0, %c0_i32_1 : i32, i32, i32
  }
  func.func @transform_6(%arg0: i32) -> (i32, i32) {
    %c0_i32 = arith.constant 0 : i32
    %c0_i32_0 = arith.constant 0 : i32
    %c0_i32_1 = arith.constant 0 : i32
    return %c0_i32, %c0_i32_0 : i32, i32
  }
  func.func @transform_7(%arg0: i32) -> (i32, i32) {
    %c0_i32 = arith.constant 0 : i32
    %c0_i32_0 = arith.constant 0 : i32
    %c0_i32_1 = arith.constant 0 : i32
    return %c0_i32, %c0_i32_0 : i32, i32
  }
  func.func @transform_8(%arg0: i32) -> (i32, i32, i32) {
    %c0_i32 = arith.constant 0 : i32
    %c0_i32_0 = arith.constant 0 : i32
    %c0_i32_1 = arith.constant 0 : i32
    %c0_i32_2 = arith.constant 0 : i32
    return %c0_i32, %c0_i32_0, %c0_i32_1 : i32, i32, i32
  }
  func.func @transform_9(%arg0: i32) -> (i32, i32, i32) {
    %c0_i32 = arith.constant 0 : i32
    %c0_i32_0 = arith.constant 0 : i32
    %c0_i32_1 = arith.constant 0 : i32
    %c0_i32_2 = arith.constant 0 : i32
    return %c0_i32, %c0_i32_0, %c0_i32_1 : i32, i32, i32
  }
  func.func @transform_10(%arg0: i32) -> (i32, i32) {
    %c0_i32 = arith.constant 0 : i32
    %c0_i32_0 = arith.constant 0 : i32
    %c0_i32_1 = arith.constant 0 : i32
    return %c0_i32, %c0_i32_0 : i32, i32
  }
  func.func @transform_11(%arg0: i32) -> (i32, i32) {
    %c0_i32 = arith.constant 0 : i32
    %c0_i32_0 = arith.constant 0 : i32
    %c0_i32_1 = arith.constant 0 : i32
    return %c0_i32, %c0_i32_0 : i32, i32
  }
  func.func @transform_12(%arg0: i32) -> (i32, i32, i32) {
    %c0_i32 = arith.constant 0 : i32
    %c0_i32_0 = arith.constant 0 : i32
    %c0_i32_1 = arith.constant 0 : i32
    %c0_i32_2 = arith.constant 0 : i32
    return %c0_i32, %c0_i32_0, %c0_i32_1 : i32, i32, i32
  }
  func.func @transform_13(%arg0: i32) -> (i32, i32) {
    %c0_i32 = arith.constant 0 : i32
    %c0_i32_0 = arith.constant 0 : i32
    %c0_i32_1 = arith.constant 0 : i32
    return %c0_i32, %c0_i32_0 : i32, i32
  }
  func.func @transform_14(%arg0: i32) -> (i32, i32) {
    %c0_i32 = arith.constant 0 : i32
    %c0_i32_0 = arith.constant 0 : i32
    %c0_i32_1 = arith.constant 0 : i32
    return %c0_i32, %c0_i32_0 : i32, i32
  }
  func.func @transform_15(%arg0: i32) -> (i32, i32, i32) {
    %c0_i32 = arith.constant 0 : i32
    %c0_i32_0 = arith.constant 0 : i32
    %c0_i32_1 = arith.constant 0 : i32
    %c0_i32_2 = arith.constant 0 : i32
    return %c0_i32, %c0_i32_0, %c0_i32_1 : i32, i32, i32
  }
  func.func @transform_16(%arg0: i32) -> (i32, i32) {
    %c0_i32 = arith.constant 0 : i32
    %c0_i32_0 = arith.constant 0 : i32
    %c0_i32_1 = arith.constant 0 : i32
    return %c0_i32, %c0_i32_0 : i32, i32
  }
  func.func @transform_17(%arg0: i32) -> (i32, i32, i32) {
    %c0_i32 = arith.constant 0 : i32
    %c0_i32_0 = arith.constant 0 : i32
    %c0_i32_1 = arith.constant 0 : i32
    return %arg0, %c0_i32, %c0_i32_0 : i32, i32, i32
  }
}

</mosaic_0001>

<llo_original>
// kernel: tpu_custom_call.1
$region0: #{tpu_custom_call.1}
  #allocation0 [shape = 'u32[]', space=smem, size = 0x4, offset = 0x4, fixed_abs, tag = 'smem constant byte address 0x4 - core index']
  #allocation1 [shape = 'u32[144,128]{1,0:T(1,128)}', space=vmem, size = 0x12000, scoped, tag = 'internal scratch']
  #allocation2 [shape = 'f32[10,96]{1,0:T(8,128)}', space=vmem, size = 0x2000, scoped, tag = 'scratch operand']
  #allocation3 [shape = 'f32[6,112]{1,0:T(8,128)}', space=vmem, size = 0x1000, scoped, tag = 'scratch operand']
  #allocation4 [shape = 'f32[6,192]{1,0:T(8,128)}', space=vmem, size = 0x2000, scoped, tag = 'scratch operand']
  #allocation5 [shape = 'f32[5,320]{1,0:T(8,128)}', space=vmem, size = 0x3000, scoped, tag = 'scratch operand']
  %s0 = inlined_call_operand.vmem [shape: bf16[2,18,72], index: 0, kind: input, shape index: {}]
  %s1 = inlined_call_operand.vmem [shape: bf16[4,8,18], index: 1, kind: input, shape index: {}]
  %s2 = inlined_call_operand.vmem [shape: bf16[4,72,64], index: 2, kind: input, shape index: {}]
  %s3 = inlined_call_operand.vmem [shape: f32[1,64], index: 3, kind: input, shape index: {}]
  %s4 = inlined_call_operand.vmem [shape: bf16[4,4,10], index: 4, kind: input, shape index: {}]
  %s5 = inlined_call_operand.vmem [shape: bf16[4,96,80], index: 5, kind: input, shape index: {}]
  %s6 = inlined_call_operand.vmem [shape: f32[1,16], index: 6, kind: input, shape index: {}]
  %s7 = inlined_call_operand.vmem [shape: f32[1,16], index: 7, kind: input, shape index: {}]
  %s8 = inlined_call_operand.vmem [shape: bf16[4,2,6], index: 8, kind: input, shape index: {}]
  %s9 = inlined_call_operand.vmem [shape: bf16[4,112,64], index: 9, kind: input, shape index: {}]
  %s10 = inlined_call_operand.vmem [shape: f32[1,32], index: 10, kind: input, shape index: {}]
  %s11 = inlined_call_operand.vmem [shape: f32[1,32], index: 11, kind: input, shape index: {}]
  %s12 = inlined_call_operand.vmem [shape: bf16[4,192,192], index: 12, kind: input, shape index: {}]
  %s13 = inlined_call_operand.vmem [shape: f32[1,64], index: 13, kind: input, shape index: {}]
  %s14 = inlined_call_operand.vmem [shape: f32[1,64], index: 14, kind: input, shape index: {}]
  %s15 = inlined_call_operand.vmem [shape: bf16[4,320,2], index: 15, kind: input, shape index: {}]
  %s16 = inlined_call_operand.vmem [shape: f32[1,2], index: 16, kind: input, shape index: {}]
  %s17 = inlined_call_operand.hbm [shape: f32[2,2,2], index: 17, kind: output, shape index: {}]
  %s18 = sld [smem:[#allocation0]]
  $region101: #{tpu_custom_call.1} parent=0
    _
  %s20 = ssub.s32 1, %s18
  %s21 = scalar_select 0, %s20, %s18
  $region1: #{tpu_custom_call.1} parent=0
    #allocation6 [shape = 'u8[2048]{0}', space=vmem, size = 0x800, scoped, tag = 'output window, operand 0']
    #allocation7 [shape = 's32[2]{0}', space=sflag, size = 0x8, scoped, tag = 'scoped memory for tpu_custom_call.1']
    %22 = vsyncpa [#allocation7], 0
    %s23 = scalar_lea.sflag [#allocation7], 1
    %24 = vsyncpa %s23, 0
    loop: start=0, step=1, limit=4
    $region2: #{tpu_custom_call.1} parent=1 // loop_pre_header
      _
    $region3: #{tpu_custom_call.1} parent=1 // loop_header
      %s26 = sphi 0, %s30
      %p27 = scmp.ge.s32.totalorder %s26, 4
      %s36 = sphi 0, %s38
      %s39 = sphi 0, %s36
      %s40 = sphi 0, %s39
      %s56 = sphi 0, %s40
      %s60 = sphi 0, %s60
      %s62 = sphi 0, %s60
      %s63 = sphi 0, %s62
      %s77 = sphi 0, %s63
      %s81 = sphi 0, %s81
      %s83 = sphi 0, %s81
      %s84 = sphi 0, %s83
      %s98 = sphi 0, %s84
      %s102 = sphi 0, %s102
      %s104 = sphi 0, %s102
      %s105 = sphi 0, %s104
      %s119 = sphi 0, %s105
      %s123 = sphi 0, %s123
      %s125 = sphi 0, %s123
      %s126 = sphi 0, %s125
      %s140 = sphi 0, %s126
      %s144 = sphi 0, %s144
      %s146 = sphi 0, %s144
      %s147 = sphi 0, %s146
      %s161 = sphi 0, %s147
      %s165 = sphi 0, %s165
      %s167 = sphi 0, %s165
      %s168 = sphi 0, %s167
      %s182 = sphi 0, %s168
      %s186 = sphi 0, %s186
      %s188 = sphi 0, %s186
      %s189 = sphi 0, %s188
      %s203 = sphi 0, %s189
      %s207 = sphi 0, %s207
      %s209 = sphi 0, %s207
      %s210 = sphi 0, %s209
      %s224 = sphi 0, %s210
      %s228 = sphi 0, %s228
      %s230 = sphi 0, %s228
      %s231 = sphi 0, %s230
      %s245 = sphi 0, %s231
      %s249 = sphi 0, %s249
      %s251 = sphi 0, %s249
      %s252 = sphi 0, %s251
      %s266 = sphi 0, %s252
      %s270 = sphi 0, %s270
      %s272 = sphi 0, %s270
      %s273 = sphi 0, %s272
      %s287 = sphi 0, %s273
      %s291 = sphi 0, %s291
      %s293 = sphi 0, %s291
      %s294 = sphi 0, %s293
      %s308 = sphi 0, %s294
      %s312 = sphi 0, %s312
      %s314 = sphi 0, %s312
      %s315 = sphi 0, %s314
      %s329 = sphi 0, %s315
      %s333 = sphi 0, %s333
      %s335 = sphi 0, %s333
      %s336 = sphi 0, %s335
      %s350 = sphi 0, %s336
      %s354 = sphi 0, %s354
      %s356 = sphi 0, %s354
      %s357 = sphi 0, %s356
      %s371 = sphi 0, %s357
      %s375 = sphi 0, %s375
      %s377 = sphi 0, %s375
      %s378 = sphi 0, %s377
      %s392 = sphi 0, %s378
      %s398 = sphi 0, %s400
      %s401 = sphi 0, %s398
      %s402 = sphi 0, %s401
      %s418 = sphi 0, %s402
    $region4: #{tpu_custom_call.1} parent=1 // loop_header_branch
      %29 = sbr.rel (%p27) target = $region8
    $region5: #{tpu_custom_call.1} parent=1 // loop_body
      %s31 = ssub.s32 %s26, 1
      %s32 = ssub.s32 %s26, 2
      %s33 = sadd.s32 %s26, 1
      %s34 = ssub.s32 %s26, %s33
      %p35 = scmp.eq.s32.totalorder %s34, 0
      %s37 = sadd.s32 %s36, 1
      %s38 = scalar_select %p35, %s36, %s37
      %p41 = pneg %p35
      %p42 = scmp.eq.s32.totalorder %s26, 1
      %p43 = por %p41, %p42
      %p44 = scmp.ne.s32.totalorder %s36, %s39
      %p45 = scmp.eq.s32.totalorder %s26, 0
      %p46 = por %p44, %p45
      %p47 = scmp.ne.s32.totalorder %s36, %s39
      %p48 = scmp.eq.s32.totalorder %s31, 1
      %p49 = por %p47, %p48
      %p50 = scmp.ne.s32.totalorder %s39, %s40
      %p51 = scmp.eq.s32.totalorder %s31, 0
      %p52 = por %p50, %p51
      %p53 = scmp.ne.s32.totalorder %s39, %s40
      %p54 = scmp.eq.s32.totalorder %s32, 1
      %p55 = por %p53, %p54
      %p57 = scmp.ne.s32.totalorder %s40, %s56
      %p58 = scmp.eq.s32.totalorder %s32, 0
      %p59 = por %p57, %p58
      %s61 = sadd.s32 %s60, 1
      %p64 = scmp.eq.s32.totalorder %s26, 1
      %p65 = scmp.ne.s32.totalorder %s60, %s62
      %p66 = scmp.eq.s32.totalorder %s26, 0
      %p67 = por %p65, %p66
      %p68 = scmp.ne.s32.totalorder %s60, %s62
      %p69 = scmp.eq.s32.totalorder %s31, 1
      %p70 = por %p68, %p69
      %p71 = scmp.ne.s32.totalorder %s62, %s63
      %p72 = scmp.eq.s32.totalorder %s31, 0
      %p73 = por %p71, %p72
      %p74 = scmp.ne.s32.totalorder %s62, %s63
      %p75 = scmp.eq.s32.totalorder %s32, 1
      %p76 = por %p74, %p75
      %p78 = scmp.ne.s32.totalorder %s63, %s77
      %p79 = scmp.eq.s32.totalorder %s32, 0
      %p80 = por %p78, %p79
      %s82 = sadd.s32 %s81, 1
      %p85 = scmp.eq.s32.totalorder %s26, 1
      %p86 = scmp.ne.s32.totalorder %s81, %s83
      %p87 = scmp.eq.s32.totalorder %s26, 0
      %p88 = por %p86, %p87
      %p89 = scmp.ne.s32.totalorder %s81, %s83
      %p90 = scmp.eq.s32.totalorder %s31, 1
      %p91 = por %p89, %p90
      %p92 = scmp.ne.s32.totalorder %s83, %s84
      %p93 = scmp.eq.s32.totalorder %s31, 0
      %p94 = por %p92, %p93
      %p95 = scmp.ne.s32.totalorder %s83, %s84
      %p96 = scmp.eq.s32.totalorder %s32, 1
      %p97 = por %p95, %p96
      %p99 = scmp.ne.s32.totalorder %s84, %s98
      %p100 = scmp.eq.s32.totalorder %s32, 0
      %p101 = por %p99, %p100
      %s103 = sadd.s32 %s102, 1
      %p106 = scmp.eq.s32.totalorder %s26, 1
      %p107 = scmp.ne.s32.totalorder %s102, %s104
      %p108 = scmp.eq.s32.totalorder %s26, 0
      %p109 = por %p107, %p108
      %p110 = scmp.ne.s32.totalorder %s102, %s104
      %p111 = scmp.eq.s32.totalorder %s31, 1
      %p112 = por %p110, %p111
      %p113 = scmp.ne.s32.totalorder %s104, %s105
      %p114 = scmp.eq.s32.totalorder %s31, 0
      %p115 = por %p113, %p114
      %p116 = scmp.ne.s32.totalorder %s104, %s105
      %p117 = scmp.eq.s32.totalorder %s32, 1
      %p118 = por %p116, %p117
      %p120 = scmp.ne.s32.totalorder %s105, %s119
      %p121 = scmp.eq.s32.totalorder %s32, 0
      %p122 = por %p120, %p121
      %s124 = sadd.s32 %s123, 1
      %p127 = scmp.eq.s32.totalorder %s26, 1
      %p128 = scmp.ne.s32.totalorder %s123, %s125
      %p129 = scmp.eq.s32.totalorder %s26, 0
      %p130 = por %p128, %p129
      %p131 = scmp.ne.s32.totalorder %s123, %s125
      %p132 = scmp.eq.s32.totalorder %s31, 1
      %p133 = por %p131, %p132
      %p134 = scmp.ne.s32.totalorder %s125, %s126
      %p135 = scmp.eq.s32.totalorder %s31, 0
      %p136 = por %p134, %p135
      %p137 = scmp.ne.s32.totalorder %s125, %s126
      %p138 = scmp.eq.s32.totalorder %s32, 1
      %p139 = por %p137, %p138
      %p141 = scmp.ne.s32.totalorder %s126, %s140
      %p142 = scmp.eq.s32.totalorder %s32, 0
      %p143 = por %p141, %p142
      %s145 = sadd.s32 %s144, 1
      %p148 = scmp.eq.s32.totalorder %s26, 1
      %p149 = scmp.ne.s32.totalorder %s144, %s146
      %p150 = scmp.eq.s32.totalorder %s26, 0
      %p151 = por %p149, %p150
      %p152 = scmp.ne.s32.totalorder %s144, %s146
      %p153 = scmp.eq.s32.totalorder %s31, 1
      %p154 = por %p152, %p153
      %p155 = scmp.ne.s32.totalorder %s146, %s147
      %p156 = scmp.eq.s32.totalorder %s31, 0
      %p157 = por %p155, %p156
      %p158 = scmp.ne.s32.totalorder %s146, %s147
      %p159 = scmp.eq.s32.totalorder %s32, 1
      %p160 = por %p158, %p159
      %p162 = scmp.ne.s32.totalorder %s147, %s161
      %p163 = scmp.eq.s32.totalorder %s32, 0
      %p164 = por %p162, %p163
      %s166 = sadd.s32 %s165, 1
      %p169 = scmp.eq.s32.totalorder %s26, 1
      %p170 = scmp.ne.s32.totalorder %s165, %s167
      %p171 = scmp.eq.s32.totalorder %s26, 0
      %p172 = por %p170, %p171
      %p173 = scmp.ne.s32.totalorder %s165, %s167
      %p174 = scmp.eq.s32.totalorder %s31, 1
      %p175 = por %p173, %p174
      %p176 = scmp.ne.s32.totalorder %s167, %s168
      %p177 = scmp.eq.s32.totalorder %s31, 0
      %p178 = por %p176, %p177
      %p179 = scmp.ne.s32.totalorder %s167, %s168
      %p180 = scmp.eq.s32.totalorder %s32, 1
      %p181 = por %p179, %p180
      %p183 = scmp.ne.s32.totalorder %s168, %s182
      %p184 = scmp.eq.s32.totalorder %s32, 0
      %p185 = por %p183, %p184
      %s187 = sadd.s32 %s186, 1
      %p190 = scmp.eq.s32.totalorder %s26, 1
      %p191 = scmp.ne.s32.totalorder %s186, %s188
      %p192 = scmp.eq.s32.totalorder %s26, 0
      %p193 = por %p191, %p192
      %p194 = scmp.ne.s32.totalorder %s186, %s188
      %p195 = scmp.eq.s32.totalorder %s31, 1
      %p196 = por %p194, %p195
      %p197 = scmp.ne.s32.totalorder %s188, %s189
      %p198 = scmp.eq.s32.totalorder %s31, 0
      %p199 = por %p197, %p198
      %p200 = scmp.ne.s32.totalorder %s188, %s189
      %p201 = scmp.eq.s32.totalorder %s32, 1
      %p202 = por %p200, %p201
      %p204 = scmp.ne.s32.totalorder %s189, %s203
      %p205 = scmp.eq.s32.totalorder %s32, 0
      %p206 = por %p204, %p205
      %s208 = sadd.s32 %s207, 1
      %p211 = scmp.eq.s32.totalorder %s26, 1
      %p212 = scmp.ne.s32.totalorder %s207, %s209
      %p213 = scmp.eq.s32.totalorder %s26, 0
      %p214 = por %p212, %p213
      %p215 = scmp.ne.s32.totalorder %s207, %s209
      %p216 = scmp.eq.s32.totalorder %s31, 1
      %p217 = por %p215, %p216
      %p218 = scmp.ne.s32.totalorder %s209, %s210
      %p219 = scmp.eq.s32.totalorder %s31, 0
      %p220 = por %p218, %p219
      %p221 = scmp.ne.s32.totalorder %s209, %s210
      %p222 = scmp.eq.s32.totalorder %s32, 1
      %p223 = por %p221, %p222
      %p225 = scmp.ne.s32.totalorder %s210, %s224
      %p226 = scmp.eq.s32.totalorder %s32, 0
      %p227 = por %p225, %p226
      %s229 = sadd.s32 %s228, 1
      %p232 = scmp.eq.s32.totalorder %s26, 1
      %p233 = scmp.ne.s32.totalorder %s228, %s230
      %p234 = scmp.eq.s32.totalorder %s26, 0
      %p235 = por %p233, %p234
      %p236 = scmp.ne.s32.totalorder %s228, %s230
      %p237 = scmp.eq.s32.totalorder %s31, 1
      %p238 = por %p236, %p237
      %p239 = scmp.ne.s32.totalorder %s230, %s231
      %p240 = scmp.eq.s32.totalorder %s31, 0
      %p241 = por %p239, %p240
      %p242 = scmp.ne.s32.totalorder %s230, %s231
      %p243 = scmp.eq.s32.totalorder %s32, 1
      %p244 = por %p242, %p243
      %p246 = scmp.ne.s32.totalorder %s231, %s245
      %p247 = scmp.eq.s32.totalorder %s32, 0
      %p248 = por %p246, %p247
      %s250 = sadd.s32 %s249, 1
      %p253 = scmp.eq.s32.totalorder %s26, 1
      %p254 = scmp.ne.s32.totalorder %s249, %s251
      %p255 = scmp.eq.s32.totalorder %s26, 0
      %p256 = por %p254, %p255
      %p257 = scmp.ne.s32.totalorder %s249, %s251
      %p258 = scmp.eq.s32.totalorder %s31, 1
      %p259 = por %p257, %p258
      %p260 = scmp.ne.s32.totalorder %s251, %s252
      %p261 = scmp.eq.s32.totalorder %s31, 0
      %p262 = por %p260, %p261
      %p263 = scmp.ne.s32.totalorder %s251, %s252
      %p264 = scmp.eq.s32.totalorder %s32, 1
      %p265 = por %p263, %p264
      %p267 = scmp.ne.s32.totalorder %s252, %s266
      %p268 = scmp.eq.s32.totalorder %s32, 0
      %p269 = por %p267, %p268
      %s271 = sadd.s32 %s270, 1
      %p274 = scmp.eq.s32.totalorder %s26, 1
      %p275 = scmp.ne.s32.totalorder %s270, %s272
      %p276 = scmp.eq.s32.totalorder %s26, 0
      %p277 = por %p275, %p276
      %p278 = scmp.ne.s32.totalorder %s270, %s272
      %p279 = scmp.eq.s32.totalorder %s31, 1
      %p280 = por %p278, %p279
      %p281 = scmp.ne.s32.totalorder %s272, %s273
      %p282 = scmp.eq.s32.totalorder %s31, 0
      %p283 = por %p281, %p282
      %p284 = scmp.ne.s32.totalorder %s272, %s273
      %p285 = scmp.eq.s32.totalorder %s32, 1
      %p286 = por %p284, %p285
      %p288 = scmp.ne.s32.totalorder %s273, %s287
      %p289 = scmp.eq.s32.totalorder %s32, 0
      %p290 = por %p288, %p289
      %s292 = sadd.s32 %s291, 1
      %p295 = scmp.eq.s32.totalorder %s26, 1
      %p296 = scmp.ne.s32.totalorder %s291, %s293
      %p297 = scmp.eq.s32.totalorder %s26, 0
      %p298 = por %p296, %p297
      %p299 = scmp.ne.s32.totalorder %s291, %s293
      %p300 = scmp.eq.s32.totalorder %s31, 1
      %p301 = por %p299, %p300
      %p302 = scmp.ne.s32.totalorder %s293, %s294
      %p303 = scmp.eq.s32.totalorder %s31, 0
      %p304 = por %p302, %p303
      %p305 = scmp.ne.s32.totalorder %s293, %s294
      %p306 = scmp.eq.s32.totalorder %s32, 1
      %p307 = por %p305, %p306
      %p309 = scmp.ne.s32.totalorder %s294, %s308
      %p310 = scmp.eq.s32.totalorder %s32, 0
      %p311 = por %p309, %p310
      %s313 = sadd.s32 %s312, 1
      %p316 = scmp.eq.s32.totalorder %s26, 1
      %p317 = scmp.ne.s32.totalorder %s312, %s314
      %p318 = scmp.eq.s32.totalorder %s26, 0
      %p319 = por %p317, %p318
      %p320 = scmp.ne.s32.totalorder %s312, %s314
      %p321 = scmp.eq.s32.totalorder %s31, 1
      %p322 = por %p320, %p321
      %p323 = scmp.ne.s32.totalorder %s314, %s315
      %p324 = scmp.eq.s32.totalorder %s31, 0
      %p325 = por %p323, %p324
      %p326 = scmp.ne.s32.totalorder %s314, %s315
      %p327 = scmp.eq.s32.totalorder %s32, 1
      %p328 = por %p326, %p327
      %p330 = scmp.ne.s32.totalorder %s315, %s329
      %p331 = scmp.eq.s32.totalorder %s32, 0
      %p332 = por %p330, %p331
      %s334 = sadd.s32 %s333, 1
      %p337 = scmp.eq.s32.totalorder %s26, 1
      %p338 = scmp.ne.s32.totalorder %s333, %s335
      %p339 = scmp.eq.s32.totalorder %s26, 0
      %p340 = por %p338, %p339
      %p341 = scmp.ne.s32.totalorder %s333, %s335
      %p342 = scmp.eq.s32.totalorder %s31, 1
      %p343 = por %p341, %p342
      %p344 = scmp.ne.s32.totalorder %s335, %s336
      %p345 = scmp.eq.s32.totalorder %s31, 0
      %p346 = por %p344, %p345
      %p347 = scmp.ne.s32.totalorder %s335, %s336
      %p348 = scmp.eq.s32.totalorder %s32, 1
      %p349 = por %p347, %p348
      %p351 = scmp.ne.s32.totalorder %s336, %s350
      %p352 = scmp.eq.s32.totalorder %s32, 0
      %p353 = por %p351, %p352
      %s355 = sadd.s32 %s354, 1
      %p358 = scmp.eq.s32.totalorder %s26, 1
      %p359 = scmp.ne.s32.totalorder %s354, %s356
      %p360 = scmp.eq.s32.totalorder %s26, 0
      %p361 = por %p359, %p360
      %p362 = scmp.ne.s32.totalorder %s354, %s356
      %p363 = scmp.eq.s32.totalorder %s31, 1
      %p364 = por %p362, %p363
      %p365 = scmp.ne.s32.totalorder %s356, %s357
      %p366 = scmp.eq.s32.totalorder %s31, 0
      %p367 = por %p365, %p366
      %p368 = scmp.ne.s32.totalorder %s356, %s357
      %p369 = scmp.eq.s32.totalorder %s32, 1
      %p370 = por %p368, %p369
      %p372 = scmp.ne.s32.totalorder %s357, %s371
      %p373 = scmp.eq.s32.totalorder %s32, 0
      %p374 = por %p372, %p373
      %s376 = sadd.s32 %s375, 1
      %p379 = scmp.eq.s32.totalorder %s26, 1
      %p380 = scmp.ne.s32.totalorder %s375, %s377
      %p381 = scmp.eq.s32.totalorder %s26, 0
      %p382 = por %p380, %p381
      %p383 = scmp.ne.s32.totalorder %s375, %s377
      %p384 = scmp.eq.s32.totalorder %s31, 1
      %p385 = por %p383, %p384
      %p386 = scmp.ne.s32.totalorder %s377, %s378
      %p387 = scmp.eq.s32.totalorder %s31, 0
      %p388 = por %p386, %p387
      %p389 = scmp.ne.s32.totalorder %s377, %s378
      %p390 = scmp.eq.s32.totalorder %s32, 1
      %p391 = por %p389, %p390
      %p393 = scmp.ne.s32.totalorder %s378, %s392
      %p394 = scmp.eq.s32.totalorder %s32, 0
      %p395 = por %p393, %p394
      %s396 = ssub.s32 %s26, %s33
      %p397 = scmp.eq.s32.totalorder %s396, 0
      %s399 = sadd.s32 %s398, 1
      %s400 = scalar_select %p397, %s398, %s399
      %p403 = pneg %p397
      %p404 = scmp.eq.s32.totalorder %s26, 1
      %p405 = por %p403, %p404
      %p406 = scmp.ne.s32.totalorder %s398, %s401
      %p407 = scmp.eq.s32.totalorder %s26, 0
      %p408 = por %p406, %p407
      %p409 = scmp.ne.s32.totalorder %s398, %s401
      %p410 = scmp.eq.s32.totalorder %s31, 1
      %p411 = por %p409, %p410
      %p412 = scmp.ne.s32.totalorder %s401, %s402
      %p413 = scmp.eq.s32.totalorder %s31, 0
      %p414 = por %p412, %p413
      %p415 = scmp.ne.s32.totalorder %s401, %s402
      %p416 = scmp.eq.s32.totalorder %s32, 1
      %p417 = por %p415, %p416
      %p419 = scmp.ne.s32.totalorder %s402, %s418
      %p420 = scmp.eq.s32.totalorder %s32, 0
      %p421 = por %p419, %p420
      %p422 = scmp.le.s32.totalorder 1, %s26
      %p423 = scmp.lt.s32.totalorder %s26, 3
      %p424 = pnand %p422, %p423
      %p425 = pneg %p424
      // Predicated region
      $region9: #{tpu_custom_call.1} parent=5 // pred_check
        _
      $region10: #{tpu_custom_call.1} parent=5 // pred_check_branch
        %427 = sbr.rel (%p424) target = $region12
      $region11: #{tpu_custom_call.1} parent=5 // pred_region
        %s428 = ssub.s32 %s26, 1
        // Predicated region
        $region13: #{tpu_custom_call.1} parent=11 // pred_check
          %p429 = pneg %p73
        $region14: #{tpu_custom_call.1} parent=11 // pred_check_branch
          %431 = sbr.rel (%p429) target = $region16
        $region15: #{tpu_custom_call.1} parent=11 // pred_region
          _
        $region16: #{tpu_custom_call.1} parent=11 // pred_fallthru
          _
        // Predicated region
        $region17: #{tpu_custom_call.1} parent=11 // pred_check
          %p432 = pneg %p94
        $region18: #{tpu_custom_call.1} parent=11 // pred_check_branch
          %434 = sbr.rel (%p432) target = $region20
        $region19: #{tpu_custom_call.1} parent=11 // pred_region
          _
        $region20: #{tpu_custom_call.1} parent=11 // pred_fallthru
          _
        // Predicated region
        $region21: #{tpu_custom_call.1} parent=11 // pred_check
          %p435 = pneg %p115
        $region22: #{tpu_custom_call.1} parent=11 // pred_check_branch
          %437 = sbr.rel (%p435) target = $region24
        $region23: #{tpu_custom_call.1} parent=11 // pred_region
          _
        $region24: #{tpu_custom_call.1} parent=11 // pred_fallthru
          _
        // Predicated region
        $region25: #{tpu_custom_call.1} parent=11 // pred_check
          %p438 = pneg %p136
        $region26: #{tpu_custom_call.1} parent=11 // pred_check_branch
          %440 = sbr.rel (%p438) target = $region28
        $region27: #{tpu_custom_call.1} parent=11 // pred_region
          _
        $region28: #{tpu_custom_call.1} parent=11 // pred_fallthru
          _
        // Predicated region
        $region29: #{tpu_custom_call.1} parent=11 // pred_check
          %p441 = pneg %p157
        $region30: #{tpu_custom_call.1} parent=11 // pred_check_branch
          %443 = sbr.rel (%p441) target = $region32
        $region31: #{tpu_custom_call.1} parent=11 // pred_region
          _
        $region32: #{tpu_custom_call.1} parent=11 // pred_fallthru
          _
        // Predicated region
        $region33: #{tpu_custom_call.1} parent=11 // pred_check
          %p444 = pneg %p178
        $region34: #{tpu_custom_call.1} parent=11 // pred_check_branch
          %446 = sbr.rel (%p444) target = $region36
        $region35: #{tpu_custom_call.1} parent=11 // pred_region
          _
        $region36: #{tpu_custom_call.1} parent=11 // pred_fallthru
          _
        // Predicated region
        $region37: #{tpu_custom_call.1} parent=11 // pred_check
          %p447 = pneg %p199
        $region38: #{tpu_custom_call.1} parent=11 // pred_check_branch
          %449 = sbr.rel (%p447) target = $region40
        $region39: #{tpu_custom_call.1} parent=11 // pred_region
          _
        $region40: #{tpu_custom_call.1} parent=11 // pred_fallthru
          _
        // Predicated region
        $region41: #{tpu_custom_call.1} parent=11 // pred_check
          %p450 = pneg %p220
        $region42: #{tpu_custom_call.1} parent=11 // pred_check_branch
          %452 = sbr.rel (%p450) target = $region44
        $region43: #{tpu_custom_call.1} parent=11 // pred_region
          _
        $region44: #{tpu_custom_call.1} parent=11 // pred_fallthru
          _
        // Predicated region
        $region45: #{tpu_custom_call.1} parent=11 // pred_check
          %p453 = pneg %p241
        $region46: #{tpu_custom_call.1} parent=11 // pred_check_branch
          %455 = sbr.rel (%p453) target = $region48
        $region47: #{tpu_custom_call.1} parent=11 // pred_region
          _
        $region48: #{tpu_custom_call.1} parent=11 // pred_fallthru
          _
        // Predicated region
        $region49: #{tpu_custom_call.1} parent=11 // pred_check
          %p456 = pneg %p262
        $region50: #{tpu_custom_call.1} parent=11 // pred_check_branch
          %458 = sbr.rel (%p456) target = $region52
        $region51: #{tpu_custom_call.1} parent=11 // pred_region
          _
        $region52: #{tpu_custom_call.1} parent=11 // pred_fallthru
          _
        // Predicated region
        $region53: #{tpu_custom_call.1} parent=11 // pred_check
          %p459 = pneg %p283
        $region54: #{tpu_custom_call.1} parent=11 // pred_check_branch
          %461 = sbr.rel (%p459) target = $region56
        $region55: #{tpu_custom_call.1} parent=11 // pred_region
          _
        $region56: #{tpu_custom_call.1} parent=11 // pred_fallthru
          _
        // Predicated region
        $region57: #{tpu_custom_call.1} parent=11 // pred_check
          %p462 = pneg %p304
        $region58: #{tpu_custom_call.1} parent=11 // pred_check_branch
          %464 = sbr.rel (%p462) target = $region60
        $region59: #{tpu_custom_call.1} parent=11 // pred_region
          _
        $region60: #{tpu_custom_call.1} parent=11 // pred_fallthru
          _
        // Predicated region
        $region61: #{tpu_custom_call.1} parent=11 // pred_check
          %p465 = pneg %p325
        $region62: #{tpu_custom_call.1} parent=11 // pred_check_branch
          %467 = sbr.rel (%p465) target = $region64
        $region63: #{tpu_custom_call.1} parent=11 // pred_region
          _
        $region64: #{tpu_custom_call.1} parent=11 // pred_fallthru
          _
        // Predicated region
        $region65: #{tpu_custom_call.1} parent=11 // pred_check
          %p468 = pneg %p346
        $region66: #{tpu_custom_call.1} parent=11 // pred_check_branch
          %470 = sbr.rel (%p468) target = $region68
        $region67: #{tpu_custom_call.1} parent=11 // pred_region
          _
        $region68: #{tpu_custom_call.1} parent=11 // pred_fallthru
          _
        // Predicated region
        $region69: #{tpu_custom_call.1} parent=11 // pred_check
          %p471 = pneg %p367
        $region70: #{tpu_custom_call.1} parent=11 // pred_check_branch
          %473 = sbr.rel (%p471) target = $region72
        $region71: #{tpu_custom_call.1} parent=11 // pred_region
          _
        $region72: #{tpu_custom_call.1} parent=11 // pred_fallthru
          _
        // Predicated region
        $region73: #{tpu_custom_call.1} parent=11 // pred_check
          %p474 = pneg %p388
        $region74: #{tpu_custom_call.1} parent=11 // pred_check_branch
          %476 = sbr.rel (%p474) target = $region76
        $region75: #{tpu_custom_call.1} parent=11 // pred_region
          _
        $region76: #{tpu_custom_call.1} parent=11 // pred_fallthru
          _
      $region12: #{tpu_custom_call.1} parent=5 // pred_fallthru
        _
      %p477 = scmp.lt.s32.totalorder %s26, 2
      // Predicated region
      $region77: #{tpu_custom_call.1} parent=5 // pred_check
        %p478 = pneg %p477
      $region78: #{tpu_custom_call.1} parent=5 // pred_check_branch
        %480 = sbr.rel (%p478) target = $region80
      $region79: #{tpu_custom_call.1} parent=5 // pred_region
        // Predicated region
        $region81: #{tpu_custom_call.1} parent=79 // pred_check
          %p481 = pneg %p46
        $region82: #{tpu_custom_call.1} parent=79 // pred_check_branch
          %483 = sbr.rel (%p481) target = $region84
        $region83: #{tpu_custom_call.1} parent=79 // pred_region
          %p484 = scmp.lt.s32.totalorder %s26, 1
          %s485 = scalar_select %p484, %s26, 1
          %s486 = smul.addr %s485, 3
          %s487 = smul.addr %s486, 4
          %s488 = scalar_lea.vmem %s0, %s487
        $region84: #{tpu_custom_call.1} parent=79 // pred_fallthru
          _
      $region80: #{tpu_custom_call.1} parent=5 // pred_fallthru
        _
      %p489 = scmp.le.s32.totalorder 1, %s26
      %p490 = scmp.lt.s32.totalorder %s26, 3
      %p491 = pnand %p489, %p490
      %p492 = pneg %p491
      // Predicated region
      $region85: #{tpu_custom_call.1} parent=5 // pred_check
        _
      $region86: #{tpu_custom_call.1} parent=5 // pred_check_branch
        %494 = sbr.rel (%p491) target = $region88
      $region87: #{tpu_custom_call.1} parent=5 // pred_region
        %s495 = ssub.s32 %s26, 1
        %p496 = scmp.lt.s32.totalorder %s31, 1
        %s497 = scalar_select %p496, %s31, 1
        %s498 = smul.addr %s497, 3
        %s499 = smul.addr %s498, 4
        %s500 = scalar_lea.vmem %s0, %s499
        %p501 = pneg %p52
        %p502 = pneg %p49
        %p503 = pneg %p73
        %p504 = pneg %p70
        %p505 = pneg %p94
        %p506 = pneg %p91
        %p507 = pneg %p115
        %p508 = pneg %p112
        %p509 = pneg %p136
        %p510 = pneg %p133
        %p511 = pneg %p157
        %p512 = pneg %p154
        %p513 = pneg %p178
        %p514 = pneg %p175
        %p515 = pneg %p199
        %p516 = pneg %p196
        %p517 = pneg %p220
        %p518 = pneg %p217
        %p519 = pneg %p241
        %p520 = pneg %p238
        %p521 = pneg %p262
        %p522 = pneg %p259
        %p523 = pneg %p283
        %p524 = pneg %p280
        %p525 = pneg %p304
        %p526 = pneg %p301
        %p527 = pneg %p325
        %p528 = pneg %p322
        %p529 = pneg %p346
        %p530 = pneg %p343
        %p531 = pneg %p367
        %p532 = pneg %p364
        %p533 = pneg %p388
        %p534 = pneg %p385
        %p535 = pneg %p414
        %p536 = pneg %p411
        %s537 = sand.u32 %s401, 1
        %s538 = scalar_lea.sflag [#allocation7], %s537
        %s539 = sand.u32 %s401, 1
        %s540 = smul.addr %s539, 2
        %s541 = scalar_lea.vmem [#allocation6], %s540
        %p542 = scmp.lt.s32.totalorder %s31, 1
        %s543 = scalar_select %p542, %s31, 1
        %s544 = smul.addr %s543, 3
        %s545 = smul.addr %s544, 4
        %s546 = scalar_lea.vmem %s0, %s545
        %v548 = vld [vmem:[%s546] sm:$0xf]
        %v549 = vld [vmem:[%s546 + $0x4] sm:$0xf]
        %v550 = vld [vmem:[%s546 + $0x8] sm:$0x1]
        %v551 = vld [vmem:[%s1] sm:$0xf]
        %v555 = vunpack.c.l.b16 %v548
        %v556 = vunpack.c.l.b16 %v549
        %v557 = vunpack.c.l.b16 %v550
        %v558 = vpack.c.b16 %v556, %v555
        %v559 = vpack.c.b16 %v557, %v557
        %vm561 = vcmask 146432
        %v563 = vsel %vm561, %v551, 0
        %vm565 = vcmask 1040384
        %v567 = vsel %vm565, %v559, 0
        %569 = vmatprep.subr.bf16.mxu0 0
        %570 = vmatpush1.bf16.msra.mxu0 %v558
        %571 = vmatprep.subr.bf16.mxu0 0
        %572 = vmatpush1.bf16.msra.mxu0 %v567
        %573 = vmatprep.subr.bf16.mxu0 0
        %574 = vmatpush1.bf16.msra.mxu0 0
        %575 = vmatprep.subr.bf16.mxu0 0
        %576 = vmatpush1.bf16.msra.mxu0 0
        %577 = vmatprep.subr.bf16.mxu0 0
        %578 = vmatpush1.bf16.msra.mxu0 0
        %579 = vmatprep.subr.bf16.mxu0 0
        %580 = vmatpush1.bf16.msra.mxu0 0
        %581 = vmatprep.subr.bf16.mxu0 0
        %582 = vmatpush1.bf16.msra.mxu0 0
        %583 = vmatprep.subr.bf16.mxu0 0
        %584 = vmatpush1.bf16.msra.mxu0 0
        %585 = vmatprep.subr.bf16.mxu0 0
        %586 = vmatpush1.bf16.msra.mxu0 0
        %587 = vmatprep.subr.bf16.mxu0 0
        %588 = vmatpush1.bf16.msra.mxu0 0
        %589 = vmatprep.subr.bf16.mxu0 0
        %590 = vmatpush1.bf16.msra.mxu0 0
        %591 = vmatprep.subr.bf16.mxu0 0
        %592 = vmatpush1.bf16.msra.mxu0 0
        %593 = vmatprep.subr.bf16.mxu0 0
        %594 = vmatpush1.bf16.msra.mxu0 0
        %595 = vmatprep.subr.bf16.mxu0 0
        %596 = vmatpush1.bf16.msra.mxu0 0
        %597 = vmatprep.subr.bf16.mxu0 0
        %598 = vmatpush1.bf16.msra.mxu0 0
        %599 = vmatprep.subr.bf16.mxu0 0
        %600 = vmatpush1.bf16.msra.mxu0 0
        %601 = vmatprep.mubr.bf16.mxu0 0
        %602 = vmatmul.mubr.bf16.gmra.mrb[0].mxu0 %v563
        %v603 = vpop.f32.mrb[0].mxu0
        %v604 = vadd.f32 0.0, %v603
        %v605 = vpop.f32.mrb[0].mxu0
        %v606 = vpop.f32.mrb[0].mxu0
        %v607 = vpop.f32.mrb[0].mxu0
        %608 = vdwg.mxu0
        %v609 = vpack.c.bf16 %v604, %v604
        %v610 = vld [vmem:[%s2] sm:$0xf]
        %v611 = vld [vmem:[%s2 + $0x4] sm:$0xf]
        %v612 = vld [vmem:[%s2 + $0x8] sm:$0xf]
        %v613 = vld [vmem:[%s2 + $0xc] sm:$0xf]
        %v614 = vld [vmem:[%s2 + $0x10] sm:$0xf]
        %v615 = vld [vmem:[%s2 + $0x14] sm:$0xf]
        %v616 = vld [vmem:[%s2 + $0x18] sm:$0xf]
        %v617 = vld [vmem:[%s2 + $0x1c] sm:$0xf]
        %v618 = vld [vmem:[%s2 + $0x20] sm:$0xf]
        %s619 = scalar_lea.vmem %s1, 4
        %v620 = vld [vmem:[%s619] sm:$0xf]
        %v622 = vsel %vm561, %v620, 0
        %624 = vmatprep.subr.bf16.mxu0 0
        %625 = vmatpush1.bf16.msra.mxu0 %v558
        %626 = vmatprep.subr.bf16.mxu0 0
        %627 = vmatpush1.bf16.msra.mxu0 %v567
        %628 = vmatprep.subr.bf16.mxu0 0
        %629 = vmatpush1.bf16.msra.mxu0 0
        %630 = vmatprep.subr.bf16.mxu0 0
        %631 = vmatpush1.bf16.msra.mxu0 0
        %632 = vmatprep.subr.bf16.mxu0 0
        %633 = vmatpush1.bf16.msra.mxu0 0
        %634 = vmatprep.subr.bf16.mxu0 0
        %635 = vmatpush1.bf16.msra.mxu0 0
        %636 = vmatprep.subr.bf16.mxu0 0
        %637 = vmatpush1.bf16.msra.mxu0 0
        %638 = vmatprep.subr.bf16.mxu0 0
        %639 = vmatpush1.bf16.msra.mxu0 0
        %640 = vmatprep.subr.bf16.mxu0 0
        %641 = vmatpush1.bf16.msra.mxu0 0
        %642 = vmatprep.subr.bf16.mxu0 0
        %643 = vmatpush1.bf16.msra.mxu0 0
        %644 = vmatprep.subr.bf16.mxu0 0
        %645 = vmatpush1.bf16.msra.mxu0 0
        %646 = vmatprep.subr.bf16.mxu0 0
        %647 = vmatpush1.bf16.msra.mxu0 0
        %648 = vmatprep.subr.bf16.mxu0 0
        %649 = vmatpush1.bf16.msra.mxu0 0
        %650 = vmatprep.subr.bf16.mxu0 0
        %651 = vmatpush1.bf16.msra.mxu0 0
        %652 = vmatprep.subr.bf16.mxu0 0
        %653 = vmatpush1.bf16.msra.mxu0 0
        %654 = vmatprep.subr.bf16.mxu0 0
        %655 = vmatpush1.bf16.msra.mxu0 0
        %656 = vmatprep.mubr.bf16.mxu0 0
        %657 = vmatmul.mubr.bf16.gmra.mrb[0].mxu0 %v622
        %v658 = vpop.f32.mrb[0].mxu0
        %v659 = vadd.f32 0.0, %v658
        %v660 = vpop.f32.mrb[0].mxu0
        %v661 = vpop.f32.mrb[0].mxu0
        %v662 = vpop.f32.mrb[0].mxu0
        %663 = vdwg.mxu0
        %v664 = vpack.c.bf16 %v659, %v659
        %s665 = scalar_lea.vmem %s2, 36
        %v666 = vld [vmem:[%s665] sm:$0xf]
        %v667 = vld [vmem:[%s665 + $0x4] sm:$0xf]
        %v668 = vld [vmem:[%s665 + $0x8] sm:$0xf]
        %v669 = vld [vmem:[%s665 + $0xc] sm:$0xf]
        %v670 = vld [vmem:[%s665 + $0x10] sm:$0xf]
        %v671 = vld [vmem:[%s665 + $0x14] sm:$0xf]
        %v672 = vld [vmem:[%s665 + $0x18] sm:$0xf]
        %v673 = vld [vmem:[%s665 + $0x1c] sm:$0xf]
        %v674 = vld [vmem:[%s665 + $0x20] sm:$0xf]
        %v684 = vunpack.c.l.b16 %v666
        %v685 = vunpack.c.l.b16 %v667
        %v686 = vunpack.c.l.b16 %v668
        %v687 = vunpack.c.l.b16 %v669
        %v688 = vunpack.c.l.b16 %v670
        %v689 = vunpack.c.l.b16 %v671
        %v690 = vunpack.c.l.b16 %v672
        %v691 = vunpack.c.l.b16 %v673
        %v692 = vunpack.c.l.b16 %v674
        %v693 = vpack.c.b16 %v685, %v684
        %v694 = vpack.c.b16 %v687, %v686
        %v695 = vpack.c.b16 %v689, %v688
        %v696 = vpack.c.b16 %v691, %v690
        %v697 = vpack.c.b16 %v692, %v692
        %vm702 = vcmask 588800
        %v704 = vsel %vm702, %v664, 0
        %vm706 = vcmask 1043456
        %v708 = vsel %vm706, %v697, 0
        %710 = vmatprep.subr.bf16.mxu0 0
        %711 = vmatpush1.bf16.msra.mxu0 %v693
        %712 = vmatprep.subr.bf16.mxu0 0
        %713 = vmatpush1.bf16.msra.mxu0 %v694
        %714 = vmatprep.subr.bf16.mxu0 0
        %715 = vmatpush1.bf16.msra.mxu0 %v695
        %716 = vmatprep.subr.bf16.mxu0 0
        %717 = vmatpush1.bf16.msra.mxu0 %v696
        %718 = vmatprep.subr.bf16.mxu0 0
        %719 = vmatpush1.bf16.msra.mxu0 %v708
        %720 = vmatprep.subr.bf16.mxu0 0
        %721 = vmatpush1.bf16.msra.mxu0 0
        %722 = vmatprep.subr.bf16.mxu0 0
        %723 = vmatpush1.bf16.msra.mxu0 0
        %724 = vmatprep.subr.bf16.mxu0 0
        %725 = vmatpush1.bf16.msra.mxu0 0
        %726 = vmatprep.subr.bf16.mxu0 0
        %727 = vmatpush1.bf16.msra.mxu0 0
        %728 = vmatprep.subr.bf16.mxu0 0
        %729 = vmatpush1.bf16.msra.mxu0 0
        %730 = vmatprep.subr.bf16.mxu0 0
        %731 = vmatpush1.bf16.msra.mxu0 0
        %732 = vmatprep.subr.bf16.mxu0 0
        %733 = vmatpush1.bf16.msra.mxu0 0
        %734 = vmatprep.subr.bf16.mxu0 0
        %735 = vmatpush1.bf16.msra.mxu0 0
        %736 = vmatprep.subr.bf16.mxu0 0
        %737 = vmatpush1.bf16.msra.mxu0 0
        %738 = vmatprep.subr.bf16.mxu0 0
        %739 = vmatpush1.bf16.msra.mxu0 0
        %740 = vmatprep.subr.bf16.mxu0 0
        %741 = vmatpush1.bf16.msra.mxu0 0
        %742 = vmatprep.mubr.bf16.mxu0 0
        %743 = vmatmul.mubr.bf16.gmra.mrb[0].mxu0 %v704
        %v744 = vpop.f32.mrb[0].mxu0
        %v745 = vadd.f32 0.0, %v744
        %v746 = vpop.f32.mrb[0].mxu0
        %v747 = vpop.f32.mrb[0].mxu0
        %v748 = vpop.f32.mrb[0].mxu0
        %749 = vdwg.mxu0
        %v759 = vunpack.c.l.b16 %v610
        %v760 = vunpack.c.l.b16 %v611
        %v761 = vunpack.c.l.b16 %v612
        %v762 = vunpack.c.l.b16 %v613
        %v763 = vunpack.c.l.b16 %v614
        %v764 = vunpack.c.l.b16 %v615
        %v765 = vunpack.c.l.b16 %v616
        %v766 = vunpack.c.l.b16 %v617
        %v767 = vunpack.c.l.b16 %v618
        %v768 = vpack.c.b16 %v760, %v759
        %v769 = vpack.c.b16 %v762, %v761
        %v770 = vpack.c.b16 %v764, %v763
        %v771 = vpack.c.b16 %v766, %v765
        %v772 = vpack.c.b16 %v767, %v767
        %v778 = vsel %vm702, %v609, 0
        %v781 = vsel %vm706, %v772, 0
        %783 = vmatprep.subr.bf16.mxu0 0
        %784 = vmatpush1.bf16.msra.mxu0 %v768
        %785 = vmatprep.subr.bf16.mxu0 0
        %786 = vmatpush1.bf16.msra.mxu0 %v769
        %787 = vmatprep.subr.bf16.mxu0 0
        %788 = vmatpush1.bf16.msra.mxu0 %v770
        %789 = vmatprep.subr.bf16.mxu0 0
        %790 = vmatpush1.bf16.msra.mxu0 %v771
        %791 = vmatprep.subr.bf16.mxu0 0
        %792 = vmatpush1.bf16.msra.mxu0 %v781
        %793 = vmatprep.subr.bf16.mxu0 0
        %794 = vmatpush1.bf16.msra.mxu0 0
        %795 = vmatprep.subr.bf16.mxu0 0
        %796 = vmatpush1.bf16.msra.mxu0 0
        %797 = vmatprep.subr.bf16.mxu0 0
        %798 = vmatpush1.bf16.msra.mxu0 0
        %799 = vmatprep.subr.bf16.mxu0 0
        %800 = vmatpush1.bf16.msra.mxu0 0
        %801 = vmatprep.subr.bf16.mxu0 0
        %802 = vmatpush1.bf16.msra.mxu0 0
        %803 = vmatprep.subr.bf16.mxu0 0
        %804 = vmatpush1.bf16.msra.mxu0 0
        %805 = vmatprep.subr.bf16.mxu0 0
        %806 = vmatpush1.bf16.msra.mxu0 0
        %807 = vmatprep.subr.bf16.mxu0 0
        %808 = vmatpush1.bf16.msra.mxu0 0
        %809 = vmatprep.subr.bf16.mxu0 0
        %810 = vmatpush1.bf16.msra.mxu0 0
        %811 = vmatprep.subr.bf16.mxu0 0
        %812 = vmatpush1.bf16.msra.mxu0 0
        %813 = vmatprep.subr.bf16.mxu0 0
        %814 = vmatpush1.bf16.msra.mxu0 0
        %815 = vmatprep.mubr.bf16.mxu0 0
        %816 = vmatmul.mubr.bf16.gmra.mrb[0].mxu0 %v778
        %v817 = vpop.f32.mrb[0].mxu0
        %v818 = vadd.f32 %v745, %v817
        %v819 = vpop.f32.mrb[0].mxu0
        %v820 = vpop.f32.mrb[0].mxu0
        %v821 = vpop.f32.mrb[0].mxu0
        %822 = vdwg.mxu0
        %s823 = scalar_lea.vmem %s1, 8
        %v824 = vld [vmem:[%s823] sm:$0xf]
        %v826 = vsel %vm561, %v824, 0
        %828 = vmatprep.subr.bf16.mxu0 0
        %829 = vmatpush1.bf16.msra.mxu0 %v558
        %830 = vmatprep.subr.bf16.mxu0 0
        %831 = vmatpush1.bf16.msra.mxu0 %v567
        %832 = vmatprep.subr.bf16.mxu0 0
        %833 = vmatpush1.bf16.msra.mxu0 0
        %834 = vmatprep.subr.bf16.mxu0 0
        %835 = vmatpush1.bf16.msra.mxu0 0
        %836 = vmatprep.subr.bf16.mxu0 0
        %837 = vmatpush1.bf16.msra.mxu0 0
        %838 = vmatprep.subr.bf16.mxu0 0
        %839 = vmatpush1.bf16.msra.mxu0 0
        %840 = vmatprep.subr.bf16.mxu0 0
        %841 = vmatpush1.bf16.msra.mxu0 0
        %842 = vmatprep.subr.bf16.mxu0 0
        %843 = vmatpush1.bf16.msra.mxu0 0
        %844 = vmatprep.subr.bf16.mxu0 0
        %845 = vmatpush1.bf16.msra.mxu0 0
        %846 = vmatprep.subr.bf16.mxu0 0
        %847 = vmatpush1.bf16.msra.mxu0 0
        %848 = vmatprep.subr.bf16.mxu0 0
        %849 = vmatpush1.bf16.msra.mxu0 0
        %850 = vmatprep.subr.bf16.mxu0 0
        %851 = vmatpush1.bf16.msra.mxu0 0
        %852 = vmatprep.subr.bf16.mxu0 0
        %853 = vmatpush1.bf16.msra.mxu0 0
        %854 = vmatprep.subr.bf16.mxu0 0
        %855 = vmatpush1.bf16.msra.mxu0 0
        %856 = vmatprep.subr.bf16.mxu0 0
        %857 = vmatpush1.bf16.msra.mxu0 0
        %858 = vmatprep.subr.bf16.mxu0 0
        %859 = vmatpush1.bf16.msra.mxu0 0
        %860 = vmatprep.mubr.bf16.mxu0 0
        %861 = vmatmul.mubr.bf16.gmra.mrb[0].mxu0 %v826
        %v862 = vpop.f32.mrb[0].mxu0
        %v863 = vadd.f32 0.0, %v862
        %v864 = vpop.f32.mrb[0].mxu0
        %v865 = vpop.f32.mrb[0].mxu0
        %v866 = vpop.f32.mrb[0].mxu0
        %867 = vdwg.mxu0
        %v868 = vpack.c.bf16 %v863, %v863
        %s869 = scalar_lea.vmem %s2, 72
        %v870 = vld [vmem:[%s869] sm:$0xf]
        %v871 = vld [vmem:[%s869 + $0x4] sm:$0xf]
        %v872 = vld [vmem:[%s869 + $0x8] sm:$0xf]
        %v873 = vld [vmem:[%s869 + $0xc] sm:$0xf]
        %v874 = vld [vmem:[%s869 + $0x10] sm:$0xf]
        %v875 = vld [vmem:[%s869 + $0x14] sm:$0xf]
        %v876 = vld [vmem:[%s869 + $0x18] sm:$0xf]
        %v877 = vld [vmem:[%s869 + $0x1c] sm:$0xf]
        %v878 = vld [vmem:[%s869 + $0x20] sm:$0xf]
        %v888 = vunpack.c.l.b16 %v870
        %v889 = vunpack.c.l.b16 %v871
        %v890 = vunpack.c.l.b16 %v872
        %v891 = vunpack.c.l.b16 %v873
        %v892 = vunpack.c.l.b16 %v874
        %v893 = vunpack.c.l.b16 %v875
        %v894 = vunpack.c.l.b16 %v876
        %v895 = vunpack.c.l.b16 %v877
        %v896 = vunpack.c.l.b16 %v878
        %v897 = vpack.c.b16 %v889, %v888
        %v898 = vpack.c.b16 %v891, %v890
        %v899 = vpack.c.b16 %v893, %v892
        %v900 = vpack.c.b16 %v895, %v894
        %v901 = vpack.c.b16 %v896, %v896
        %v907 = vsel %vm702, %v868, 0
        %v910 = vsel %vm706, %v901, 0
        %912 = vmatprep.subr.bf16.mxu0 0
        %913 = vmatpush1.bf16.msra.mxu0 %v897
        %914 = vmatprep.subr.bf16.mxu0 0
        %915 = vmatpush1.bf16.msra.mxu0 %v898
        %916 = vmatprep.subr.bf16.mxu0 0
        %917 = vmatpush1.bf16.msra.mxu0 %v899
        %918 = vmatprep.subr.bf16.mxu0 0
        %919 = vmatpush1.bf16.msra.mxu0 %v900
        %920 = vmatprep.subr.bf16.mxu0 0
        %921 = vmatpush1.bf16.msra.mxu0 %v910
        %922 = vmatprep.subr.bf16.mxu0 0
        %923 = vmatpush1.bf16.msra.mxu0 0
        %924 = vmatprep.subr.bf16.mxu0 0
        %925 = vmatpush1.bf16.msra.mxu0 0
        %926 = vmatprep.subr.bf16.mxu0 0
        %927 = vmatpush1.bf16.msra.mxu0 0
        %928 = vmatprep.subr.bf16.mxu0 0
        %929 = vmatpush1.bf16.msra.mxu0 0
        %930 = vmatprep.subr.bf16.mxu0 0
        %931 = vmatpush1.bf16.msra.mxu0 0
        %932 = vmatprep.subr.bf16.mxu0 0
        %933 = vmatpush1.bf16.msra.mxu0 0
        %934 = vmatprep.subr.bf16.mxu0 0
        %935 = vmatpush1.bf16.msra.mxu0 0
        %936 = vmatprep.subr.bf16.mxu0 0
        %937 = vmatpush1.bf16.msra.mxu0 0
        %938 = vmatprep.subr.bf16.mxu0 0
        %939 = vmatpush1.bf16.msra.mxu0 0
        %940 = vmatprep.subr.bf16.mxu0 0
        %941 = vmatpush1.bf16.msra.mxu0 0
        %942 = vmatprep.subr.bf16.mxu0 0
        %943 = vmatpush1.bf16.msra.mxu0 0
        %944 = vmatprep.mubr.bf16.mxu0 0
        %945 = vmatmul.mubr.bf16.gmra.mrb[0].mxu0 %v907
        %v946 = vpop.f32.mrb[0].mxu0
        %v947 = vadd.f32 0.0, %v946
        %v948 = vpop.f32.mrb[0].mxu0
        %v949 = vpop.f32.mrb[0].mxu0
        %v950 = vpop.f32.mrb[0].mxu0
        %951 = vdwg.mxu0
        %v952 = vadd.f32 %v818, %v947
        %s953 = scalar_lea.vmem %s1, 12
        %v954 = vld [vmem:[%s953] sm:$0xf]
        %v956 = vsel %vm561, %v954, 0
        %958 = vmatprep.subr.bf16.mxu0 0
        %959 = vmatpush1.bf16.msra.mxu0 %v558
        %960 = vmatprep.subr.bf16.mxu0 0
        %961 = vmatpush1.bf16.msra.mxu0 %v567
        %962 = vmatprep.subr.bf16.mxu0 0
        %963 = vmatpush1.bf16.msra.mxu0 0
        %964 = vmatprep.subr.bf16.mxu0 0
        %965 = vmatpush1.bf16.msra.mxu0 0
        %966 = vmatprep.subr.bf16.mxu0 0
        %967 = vmatpush1.bf16.msra.mxu0 0
        %968 = vmatprep.subr.bf16.mxu0 0
        %969 = vmatpush1.bf16.msra.mxu0 0
        %970 = vmatprep.subr.bf16.mxu0 0
        %971 = vmatpush1.bf16.msra.mxu0 0
        %972 = vmatprep.subr.bf16.mxu0 0
        %973 = vmatpush1.bf16.msra.mxu0 0
        %974 = vmatprep.subr.bf16.mxu0 0
        %975 = vmatpush1.bf16.msra.mxu0 0
        %976 = vmatprep.subr.bf16.mxu0 0
        %977 = vmatpush1.bf16.msra.mxu0 0
        %978 = vmatprep.subr.bf16.mxu0 0
        %979 = vmatpush1.bf16.msra.mxu0 0
        %980 = vmatprep.subr.bf16.mxu0 0
        %981 = vmatpush1.bf16.msra.mxu0 0
        %982 = vmatprep.subr.bf16.mxu0 0
        %983 = vmatpush1.bf16.msra.mxu0 0
        %984 = vmatprep.subr.bf16.mxu0 0
        %985 = vmatpush1.bf16.msra.mxu0 0
        %986 = vmatprep.subr.bf16.mxu0 0
        %987 = vmatpush1.bf16.msra.mxu0 0
        %988 = vmatprep.subr.bf16.mxu0 0
        %989 = vmatpush1.bf16.msra.mxu0 0
        %990 = vmatprep.mubr.bf16.mxu0 0
        %991 = vmatmul.mubr.bf16.gmra.mrb[0].mxu0 %v956
        %v992 = vpop.f32.mrb[0].mxu0
        %v993 = vadd.f32 0.0, %v992
        %v994 = vpop.f32.mrb[0].mxu0
        %v995 = vpop.f32.mrb[0].mxu0
        %v996 = vpop.f32.mrb[0].mxu0
        %997 = vdwg.mxu0
        %v998 = vpack.c.bf16 %v993, %v993
        %s999 = scalar_lea.vmem %s2, 108
        %v1000 = vld [vmem:[%s999] sm:$0xf]
        %v1001 = vld [vmem:[%s999 + $0x4] sm:$0xf]
        %v1002 = vld [vmem:[%s999 + $0x8] sm:$0xf]
        %v1003 = vld [vmem:[%s999 + $0xc] sm:$0xf]
        %v1004 = vld [vmem:[%s999 + $0x10] sm:$0xf]
        %v1005 = vld [vmem:[%s999 + $0x14] sm:$0xf]
        %v1006 = vld [vmem:[%s999 + $0x18] sm:$0xf]
        %v1007 = vld [vmem:[%s999 + $0x1c] sm:$0xf]
        %v1008 = vld [vmem:[%s999 + $0x20] sm:$0xf]
        %v1018 = vunpack.c.l.b16 %v1000
        %v1019 = vunpack.c.l.b16 %v1001
        %v1020 = vunpack.c.l.b16 %v1002
        %v1021 = vunpack.c.l.b16 %v1003
        %v1022 = vunpack.c.l.b16 %v1004
        %v1023 = vunpack.c.l.b16 %v1005
        %v1024 = vunpack.c.l.b16 %v1006
        %v1025 = vunpack.c.l.b16 %v1007
        %v1026 = vunpack.c.l.b16 %v1008
        %v1027 = vpack.c.b16 %v1019, %v1018
        %v1028 = vpack.c.b16 %v1021, %v1020
        %v1029 = vpack.c.b16 %v1023, %v1022
        %v1030 = vpack.c.b16 %v1025, %v1024
        %v1031 = vpack.c.b16 %v1026, %v1026
        %v1037 = vsel %vm702, %v998, 0
        %v1040 = vsel %vm706, %v1031, 0
        %1042 = vmatprep.subr.bf16.mxu0 0
        %1043 = vmatpush1.bf16.msra.mxu0 %v1027
        %1044 = vmatprep.subr.bf16.mxu0 0
        %1045 = vmatpush1.bf16.msra.mxu0 %v1028
        %1046 = vmatprep.subr.bf16.mxu0 0
        %1047 = vmatpush1.bf16.msra.mxu0 %v1029
        %1048 = vmatprep.subr.bf16.mxu0 0
        %1049 = vmatpush1.bf16.msra.mxu0 %v1030
        %1050 = vmatprep.subr.bf16.mxu0 0
        %1051 = vmatpush1.bf16.msra.mxu0 %v1040
        %1052 = vmatprep.subr.bf16.mxu0 0
        %1053 = vmatpush1.bf16.msra.mxu0 0
        %1054 = vmatprep.subr.bf16.mxu0 0
        %1055 = vmatpush1.bf16.msra.mxu0 0
        %1056 = vmatprep.subr.bf16.mxu0 0
        %1057 = vmatpush1.bf16.msra.mxu0 0
        %1058 = vmatprep.subr.bf16.mxu0 0
        %1059 = vmatpush1.bf16.msra.mxu0 0
        %1060 = vmatprep.subr.bf16.mxu0 0
        %1061 = vmatpush1.bf16.msra.mxu0 0
        %1062 = vmatprep.subr.bf16.mxu0 0
        %1063 = vmatpush1.bf16.msra.mxu0 0
        %1064 = vmatprep.subr.bf16.mxu0 0
        %1065 = vmatpush1.bf16.msra.mxu0 0
        %1066 = vmatprep.subr.bf16.mxu0 0
        %1067 = vmatpush1.bf16.msra.mxu0 0
        %1068 = vmatprep.subr.bf16.mxu0 0
        %1069 = vmatpush1.bf16.msra.mxu0 0
        %1070 = vmatprep.subr.bf16.mxu0 0
        %1071 = vmatpush1.bf16.msra.mxu0 0
        %1072 = vmatprep.subr.bf16.mxu0 0
        %1073 = vmatpush1.bf16.msra.mxu0 0
        %1074 = vmatprep.mubr.bf16.mxu0 0
        %1075 = vmatmul.mubr.bf16.gmra.mrb[0].mxu0 %v1037
        %v1076 = vpop.f32.mrb[0].mxu0
        %v1077 = vadd.f32 0.0, %v1076
        %v1078 = vpop.f32.mrb[0].mxu0
        %v1079 = vpop.f32.mrb[0].mxu0
        %v1080 = vpop.f32.mrb[0].mxu0
        %1081 = vdwg.mxu0
        %v1082 = vadd.f32 %v952, %v1077
        %vm1083 = vcmask 785408
        %1084 = vst.msk [vmem:[#allocation2] sm:$0xff] %vm1083, 0.0
        %vm1085 = vcmask 779264
        %1086 = vst.msk [vmem:[#allocation2 + $0x8] sm:$0x3] %vm1085, 0.0
        %v1087 = vld [vmem:[%s3] sm:$0x1]
        %v1089 = vlaneseq
        %v1090 = vshrl.u32 %v1089, 7
        %v1091 = vsub.s32 0, %v1090
        %v1092 = vrot.slane %v1087, %v1091
        %v1094 = vadd.f32 %v1082, %v1092
        %vm1095 = vcmp.gt.f32.partialorder %v1094, 0.0
        %v1096 = vmul.f32 %v1094, 0.2
        %v1097 = vsel %vm1095, %v1094, %v1096
        %1099 = vrot.lane.b32.xlu0 %v1097, 16
        %v1100 = vpop.permute.xlu0 %1099
        %vm1102 = vcmask 654464
        %1103 = vst.msk [vmem:[#allocation2 + $0x1] sm:$0xff] %vm1102, %v1100
        %v1104 = vld [vmem:[#allocation2] sm:$0xff]
        %v1105 = vld [vmem:[#allocation2 + $0x8] sm:$0x3]
        %v1106 = vpack.c.bf16 %v1105, %v1104
        %v1107 = vld [vmem:[%s4] sm:$0x3]
        %vm1108 = vcmask 80896
        %v1110 = vsel %vm1108, %v1107, 0
        %vm1112 = vcmask 1044480
        %v1114 = vsel %vm1112, %v1106, 0
        %1116 = vmatprep.subr.bf16.mxu0 0
        %1117 = vmatpush1.bf16.msra.mxu0 %v1114
        %1118 = vmatprep.subr.bf16.mxu0 0
        %1119 = vmatpush1.bf16.msra.mxu0 0
        %1120 = vmatprep.subr.bf16.mxu0 0
        %1121 = vmatpush1.bf16.msra.mxu0 0
        %1122 = vmatprep.subr.bf16.mxu0 0
        %1123 = vmatpush1.bf16.msra.mxu0 0
        %1124 = vmatprep.subr.bf16.mxu0 0
        %1125 = vmatpush1.bf16.msra.mxu0 0
        %1126 = vmatprep.subr.bf16.mxu0 0
        %1127 = vmatpush1.bf16.msra.mxu0 0
        %1128 = vmatprep.subr.bf16.mxu0 0
        %1129 = vmatpush1.bf16.msra.mxu0 0
        %1130 = vmatprep.subr.bf16.mxu0 0
        %1131 = vmatpush1.bf16.msra.mxu0 0
        %1132 = vmatprep.subr.bf16.mxu0 0
        %1133 = vmatpush1.bf16.msra.mxu0 0
        %1134 = vmatprep.subr.bf16.mxu0 0
        %1135 = vmatpush1.bf16.msra.mxu0 0
        %1136 = vmatprep.subr.bf16.mxu0 0
        %1137 = vmatpush1.bf16.msra.mxu0 0
        %1138 = vmatprep.subr.bf16.mxu0 0
        %1139 = vmatpush1.bf16.msra.mxu0 0
        %1140 = vmatprep.subr.bf16.mxu0 0
        %1141 = vmatpush1.bf16.msra.mxu0 0
        %1142 = vmatprep.subr.bf16.mxu0 0
        %1143 = vmatpush1.bf16.msra.mxu0 0
        %1144 = vmatprep.subr.bf16.mxu0 0
        %1145 = vmatpush1.bf16.msra.mxu0 0
        %1146 = vmatprep.subr.bf16.mxu0 0
        %1147 = vmatpush1.bf16.msra.mxu0 0
        %1148 = vmatprep.mubr.bf16.mxu0 0
        %1149 = vmatmul.mubr.bf16.gmra.mrb[0].mxu0 %v1110
        %v1150 = vpop.f32.mrb[0].mxu0
        %v1151 = vadd.f32 0.0, %v1150
        %v1152 = vpop.f32.mrb[0].mxu0
        %v1153 = vpop.f32.mrb[0].mxu0
        %v1154 = vpop.f32.mrb[0].mxu0
        %1155 = vdwg.mxu0
        %v1156 = vpack.c.bf16 %v1151, %v1151
        %v1157 = vld [vmem:[%s5] sm:$0xf]
        %v1158 = vld [vmem:[%s5 + $0x4] sm:$0xf]
        %v1159 = vld [vmem:[%s5 + $0x8] sm:$0xf]
        %v1160 = vld [vmem:[%s5 + $0xc] sm:$0xf]
        %v1161 = vld [vmem:[%s5 + $0x10] sm:$0xf]
        %v1162 = vld [vmem:[%s5 + $0x14] sm:$0xf]
        %v1163 = vld [vmem:[%s5 + $0x18] sm:$0xf]
        %v1164 = vld [vmem:[%s5 + $0x1c] sm:$0xf]
        %v1165 = vld [vmem:[%s5 + $0x20] sm:$0xf]
        %v1166 = vld [vmem:[%s5 + $0x24] sm:$0xf]
        %v1167 = vld [vmem:[%s5 + $0x28] sm:$0xf]
        %v1168 = vld [vmem:[%s5 + $0x2c] sm:$0xf]
        %s1169 = scalar_lea.vmem %s4, 2
        %v1170 = vld [vmem:[%s1169] sm:$0x3]
        %v1172 = vsel %vm1108, %v1170, 0
        %1174 = vmatprep.subr.bf16.mxu0 0
        %1175 = vmatpush1.bf16.msra.mxu0 %v1114
        %1176 = vmatprep.subr.bf16.mxu0 0
        %1177 = vmatpush1.bf16.msra.mxu0 0
        %1178 = vmatprep.subr.bf16.mxu0 0
        %1179 = vmatpush1.bf16.msra.mxu0 0
        %1180 = vmatprep.subr.bf16.mxu0 0
        %1181 = vmatpush1.bf16.msra.mxu0 0
        %1182 = vmatprep.subr.bf16.mxu0 0
        %1183 = vmatpush1.bf16.msra.mxu0 0
        %1184 = vmatprep.subr.bf16.mxu0 0
        %1185 = vmatpush1.bf16.msra.mxu0 0
        %1186 = vmatprep.subr.bf16.mxu0 0
        %1187 = vmatpush1.bf16.msra.mxu0 0
        %1188 = vmatprep.subr.bf16.mxu0 0
        %1189 = vmatpush1.bf16.msra.mxu0 0
        %1190 = vmatprep.subr.bf16.mxu0 0
        %1191 = vmatpush1.bf16.msra.mxu0 0
        %1192 = vmatprep.subr.bf16.mxu0 0
        %1193 = vmatpush1.bf16.msra.mxu0 0
        %1194 = vmatprep.subr.bf16.mxu0 0
        %1195 = vmatpush1.bf16.msra.mxu0 0
        %1196 = vmatprep.subr.bf16.mxu0 0
        %1197 = vmatpush1.bf16.msra.mxu0 0
        %1198 = vmatprep.subr.bf16.mxu0 0
        %1199 = vmatpush1.bf16.msra.mxu0 0
        %1200 = vmatprep.subr.bf16.mxu0 0
        %1201 = vmatpush1.bf16.msra.mxu0 0
        %1202 = vmatprep.subr.bf16.mxu0 0
        %1203 = vmatpush1.bf16.msra.mxu0 0
        %1204 = vmatprep.subr.bf16.mxu0 0
        %1205 = vmatpush1.bf16.msra.mxu0 0
        %1206 = vmatprep.mubr.bf16.mxu0 0
        %1207 = vmatmul.mubr.bf16.gmra.mrb[0].mxu0 %v1172
        %v1208 = vpop.f32.mrb[0].mxu0
        %v1209 = vadd.f32 0.0, %v1208
        %v1210 = vpop.f32.mrb[0].mxu0
        %v1211 = vpop.f32.mrb[0].mxu0
        %v1212 = vpop.f32.mrb[0].mxu0
        %1213 = vdwg.mxu0
        %v1214 = vpack.c.bf16 %v1209, %v1209
        %s1215 = scalar_lea.vmem %s5, 48
        %v1216 = vld [vmem:[%s1215] sm:$0xf]
        %v1217 = vld [vmem:[%s1215 + $0x4] sm:$0xf]
        %v1218 = vld [vmem:[%s1215 + $0x8] sm:$0xf]
        %v1219 = vld [vmem:[%s1215 + $0xc] sm:$0xf]
        %v1220 = vld [vmem:[%s1215 + $0x10] sm:$0xf]
        %v1221 = vld [vmem:[%s1215 + $0x14] sm:$0xf]
        %v1222 = vld [vmem:[%s1215 + $0x18] sm:$0xf]
        %v1223 = vld [vmem:[%s1215 + $0x1c] sm:$0xf]
        %v1224 = vld [vmem:[%s1215 + $0x20] sm:$0xf]
        %v1225 = vld [vmem:[%s1215 + $0x24] sm:$0xf]
        %v1226 = vld [vmem:[%s1215 + $0x28] sm:$0xf]
        %v1227 = vld [vmem:[%s1215 + $0x2c] sm:$0xf]
        %v1240 = vunpack.c.l.b16 %v1216
        %v1241 = vunpack.c.l.b16 %v1217
        %v1242 = vunpack.c.l.b16 %v1218
        %v1243 = vunpack.c.l.b16 %v1219
        %v1244 = vunpack.c.l.b16 %v1220
        %v1245 = vunpack.c.l.b16 %v1221
        %v1246 = vunpack.c.l.b16 %v1222
        %v1247 = vunpack.c.l.b16 %v1223
        %v1248 = vunpack.c.l.b16 %v1224
        %v1249 = vunpack.c.l.b16 %v1225
        %v1250 = vunpack.c.l.b16 %v1226
        %v1251 = vunpack.c.l.b16 %v1227
        %v1252 = vpack.c.b16 %v1241, %v1240
        %v1253 = vpack.c.b16 %v1243, %v1242
        %v1254 = vpack.c.b16 %v1245, %v1244
        %v1255 = vpack.c.b16 %v1247, %v1246
        %v1256 = vpack.c.b16 %v1249, %v1248
        %v1257 = vpack.c.b16 %v1251, %v1250
        %v1265 = vsel %vm1083, %v1214, 0
        %1267 = vmatprep.subr.bf16.mxu0 0
        %1268 = vmatpush1.bf16.msra.mxu0 %v1252
        %1269 = vmatprep.subr.bf16.mxu0 0
        %1270 = vmatpush1.bf16.msra.mxu0 %v1253
        %1271 = vmatprep.subr.bf16.mxu0 0
        %1272 = vmatpush1.bf16.msra.mxu0 %v1254
        %1273 = vmatprep.subr.bf16.mxu0 0
        %1274 = vmatpush1.bf16.msra.mxu0 %v1255
        %1275 = vmatprep.subr.bf16.mxu0 0
        %1276 = vmatpush1.bf16.msra.mxu0 %v1256
        %1277 = vmatprep.subr.bf16.mxu0 0
        %1278 = vmatpush1.bf16.msra.mxu0 %v1257
        %1279 = vmatprep.subr.bf16.mxu0 0
        %1280 = vmatpush1.bf16.msra.mxu0 0
        %1281 = vmatprep.subr.bf16.mxu0 0
        %1282 = vmatpush1.bf16.msra.mxu0 0
        %1283 = vmatprep.subr.bf16.mxu0 0
        %1284 = vmatpush1.bf16.msra.mxu0 0
        %1285 = vmatprep.subr.bf16.mxu0 0
        %1286 = vmatpush1.bf16.msra.mxu0 0
        %1287 = vmatprep.subr.bf16.mxu0 0
        %1288 = vmatpush1.bf16.msra.mxu0 0
        %1289 = vmatprep.subr.bf16.mxu0 0
        %1290 = vmatpush1.bf16.msra.mxu0 0
        %1291 = vmatprep.subr.bf16.mxu0 0
        %1292 = vmatpush1.bf16.msra.mxu0 0
        %1293 = vmatprep.subr.bf16.mxu0 0
        %1294 = vmatpush1.bf16.msra.mxu0 0
        %1295 = vmatprep.subr.bf16.mxu0 0
        %1296 = vmatpush1.bf16.msra.mxu0 0
        %1297 = vmatprep.subr.bf16.mxu0 0
        %1298 = vmatpush1.bf16.msra.mxu0 0
        %1299 = vmatprep.mubr.bf16.mxu0 0
        %1300 = vmatmul.mubr.bf16.gmra.mrb[0].mxu0 %v1265
        %v1301 = vpop.f32.mrb[0].mxu0
        %v1302 = vadd.f32 0.0, %v1301
        %v1303 = vpop.f32.mrb[0].mxu0
        %v1304 = vpop.f32.mrb[0].mxu0
        %v1305 = vpop.f32.mrb[0].mxu0
        %1306 = vdwg.mxu0
        %v1319 = vunpack.c.l.b16 %v1157
        %v1320 = vunpack.c.l.b16 %v1158
        %v1321 = vunpack.c.l.b16 %v1159
        %v1322 = vunpack.c.l.b16 %v1160
        %v1323 = vunpack.c.l.b16 %v1161
        %v1324 = vunpack.c.l.b16 %v1162
        %v1325 = vunpack.c.l.b16 %v1163
        %v1326 = vunpack.c.l.b16 %v1164
        %v1327 = vunpack.c.l.b16 %v1165
        %v1328 = vunpack.c.l.b16 %v1166
        %v1329 = vunpack.c.l.b16 %v1167
        %v1330 = vunpack.c.l.b16 %v1168
        %v1331 = vpack.c.b16 %v1320, %v1319
        %v1332 = vpack.c.b16 %v1322, %v1321
        %v1333 = vpack.c.b16 %v1324, %v1323
        %v1334 = vpack.c.b16 %v1326, %v1325
        %v1335 = vpack.c.b16 %v1328, %v1327
        %v1336 = vpack.c.b16 %v1330, %v1329
        %v1344 = vsel %vm1083, %v1156, 0
        %1346 = vmatprep.subr.bf16.mxu0 0
        %1347 = vmatpush1.bf16.msra.mxu0 %v1331
        %1348 = vmatprep.subr.bf16.mxu0 0
        %1349 = vmatpush1.bf16.msra.mxu0 %v1332
        %1350 = vmatprep.subr.bf16.mxu0 0
        %1351 = vmatpush1.bf16.msra.mxu0 %v1333
        %1352 = vmatprep.subr.bf16.mxu0 0
        %1353 = vmatpush1.bf16.msra.mxu0 %v1334
        %1354 = vmatprep.subr.bf16.mxu0 0
        %1355 = vmatpush1.bf16.msra.mxu0 %v1335
        %1356 = vmatprep.subr.bf16.mxu0 0
        %1357 = vmatpush1.bf16.msra.mxu0 %v1336
        %1358 = vmatprep.subr.bf16.mxu0 0
        %1359 = vmatpush1.bf16.msra.mxu0 0
        %1360 = vmatprep.subr.bf16.mxu0 0
        %1361 = vmatpush1.bf16.msra.mxu0 0
        %1362 = vmatprep.subr.bf16.mxu0 0
        %1363 = vmatpush1.bf16.msra.mxu0 0
        %1364 = vmatprep.subr.bf16.mxu0 0
        %1365 = vmatpush1.bf16.msra.mxu0 0
        %1366 = vmatprep.subr.bf16.mxu0 0
        %1367 = vmatpush1.bf16.msra.mxu0 0
        %1368 = vmatprep.subr.bf16.mxu0 0
        %1369 = vmatpush1.bf16.msra.mxu0 0
        %1370 = vmatprep.subr.bf16.mxu0 0
        %1371 = vmatpush1.bf16.msra.mxu0 0
        %1372 = vmatprep.subr.bf16.mxu0 0
        %1373 = vmatpush1.bf16.msra.mxu0 0
        %1374 = vmatprep.subr.bf16.mxu0 0
        %1375 = vmatpush1.bf16.msra.mxu0 0
        %1376 = vmatprep.subr.bf16.mxu0 0
        %1377 = vmatpush1.bf16.msra.mxu0 0
        %1378 = vmatprep.mubr.bf16.mxu0 0
        %1379 = vmatmul.mubr.bf16.gmra.mrb[0].mxu0 %v1344
        %v1380 = vpop.f32.mrb[0].mxu0
        %v1381 = vadd.f32 %v1302, %v1380
        %v1382 = vpop.f32.mrb[0].mxu0
        %v1383 = vpop.f32.mrb[0].mxu0
        %v1384 = vpop.f32.mrb[0].mxu0
        %1385 = vdwg.mxu0
        %s1386 = scalar_lea.vmem %s4, 4
        %v1387 = vld [vmem:[%s1386] sm:$0x3]
        %v1389 = vsel %vm1108, %v1387, 0
        %1391 = vmatprep.subr.bf16.mxu0 0
        %1392 = vmatpush1.bf16.msra.mxu0 %v1114
        %1393 = vmatprep.subr.bf16.mxu0 0
        %1394 = vmatpush1.bf16.msra.mxu0 0
        %1395 = vmatprep.subr.bf16.mxu0 0
        %1396 = vmatpush1.bf16.msra.mxu0 0
        %1397 = vmatprep.subr.bf16.mxu0 0
        %1398 = vmatpush1.bf16.msra.mxu0 0
        %1399 = vmatprep.subr.bf16.mxu0 0
        %1400 = vmatpush1.bf16.msra.mxu0 0
        %1401 = vmatprep.subr.bf16.mxu0 0
        %1402 = vmatpush1.bf16.msra.mxu0 0
        %1403 = vmatprep.subr.bf16.mxu0 0
        %1404 = vmatpush1.bf16.msra.mxu0 0
        %1405 = vmatprep.subr.bf16.mxu0 0
        %1406 = vmatpush1.bf16.msra.mxu0 0
        %1407 = vmatprep.subr.bf16.mxu0 0
        %1408 = vmatpush1.bf16.msra.mxu0 0
        %1409 = vmatprep.subr.bf16.mxu0 0
        %1410 = vmatpush1.bf16.msra.mxu0 0
        %1411 = vmatprep.subr.bf16.mxu0 0
        %1412 = vmatpush1.bf16.msra.mxu0 0
        %1413 = vmatprep.subr.bf16.mxu0 0
        %1414 = vmatpush1.bf16.msra.mxu0 0
        %1415 = vmatprep.subr.bf16.mxu0 0
        %1416 = vmatpush1.bf16.msra.mxu0 0
        %1417 = vmatprep.subr.bf16.mxu0 0
        %1418 = vmatpush1.bf16.msra.mxu0 0
        %1419 = vmatprep.subr.bf16.mxu0 0
        %1420 = vmatpush1.bf16.msra.mxu0 0
        %1421 = vmatprep.subr.bf16.mxu0 0
        %1422 = vmatpush1.bf16.msra.mxu0 0
        %1423 = vmatprep.mubr.bf16.mxu0 0
        %1424 = vmatmul.mubr.bf16.gmra.mrb[0].mxu0 %v1389
        %v1425 = vpop.f32.mrb[0].mxu0
        %v1426 = vadd.f32 0.0, %v1425
        %v1427 = vpop.f32.mrb[0].mxu0
        %v1428 = vpop.f32.mrb[0].mxu0
        %v1429 = vpop.f32.mrb[0].mxu0
        %1430 = vdwg.mxu0
        %v1431 = vpack.c.bf16 %v1426, %v1426
        %s1432 = scalar_lea.vmem %s5, 96
        %v1433 = vld [vmem:[%s1432] sm:$0xf]
        %v1434 = vld [vmem:[%s1432 + $0x4] sm:$0xf]
        %v1435 = vld [vmem:[%s1432 + $0x8] sm:$0xf]
        %v1436 = vld [vmem:[%s1432 + $0xc] sm:$0xf]
        %v1437 = vld [vmem:[%s1432 + $0x10] sm:$0xf]
        %v1438 = vld [vmem:[%s1432 + $0x14] sm:$0xf]
        %v1439 = vld [vmem:[%s1432 + $0x18] sm:$0xf]
        %v1440 = vld [vmem:[%s1432 + $0x1c] sm:$0xf]
        %v1441 = vld [vmem:[%s1432 + $0x20] sm:$0xf]
        %v1442 = vld [vmem:[%s1432 + $0x24] sm:$0xf]
        %v1443 = vld [vmem:[%s1432 + $0x28] sm:$0xf]
        %v1444 = vld [vmem:[%s1432 + $0x2c] sm:$0xf]
        %v1457 = vunpack.c.l.b16 %v1433
        %v1458 = vunpack.c.l.b16 %v1434
        %v1459 = vunpack.c.l.b16 %v1435
        %v1460 = vunpack.c.l.b16 %v1436
        %v1461 = vunpack.c.l.b16 %v1437
        %v1462 = vunpack.c.l.b16 %v1438
        %v1463 = vunpack.c.l.b16 %v1439
        %v1464 = vunpack.c.l.b16 %v1440
        %v1465 = vunpack.c.l.b16 %v1441
        %v1466 = vunpack.c.l.b16 %v1442
        %v1467 = vunpack.c.l.b16 %v1443
        %v1468 = vunpack.c.l.b16 %v1444
        %v1469 = vpack.c.b16 %v1458, %v1457
        %v1470 = vpack.c.b16 %v1460, %v1459
        %v1471 = vpack.c.b16 %v1462, %v1461
        %v1472 = vpack.c.b16 %v1464, %v1463
        %v1473 = vpack.c.b16 %v1466, %v1465
        %v1474 = vpack.c.b16 %v1468, %v1467
        %v1482 = vsel %vm1083, %v1431, 0
        %1484 = vmatprep.subr.bf16.mxu0 0
        %1485 = vmatpush1.bf16.msra.mxu0 %v1469
        %1486 = vmatprep.subr.bf16.mxu0 0
        %1487 = vmatpush1.bf16.msra.mxu0 %v1470
        %1488 = vmatprep.subr.bf16.mxu0 0
        %1489 = vmatpush1.bf16.msra.mxu0 %v1471
        %1490 = vmatprep.subr.bf16.mxu0 0
        %1491 = vmatpush1.bf16.msra.mxu0 %v1472
        %1492 = vmatprep.subr.bf16.mxu0 0
        %1493 = vmatpush1.bf16.msra.mxu0 %v1473
        %1494 = vmatprep.subr.bf16.mxu0 0
        %1495 = vmatpush1.bf16.msra.mxu0 %v1474
        %1496 = vmatprep.subr.bf16.mxu0 0
        %1497 = vmatpush1.bf16.msra.mxu0 0
        %1498 = vmatprep.subr.bf16.mxu0 0
        %1499 = vmatpush1.bf16.msra.mxu0 0
        %1500 = vmatprep.subr.bf16.mxu0 0
        %1501 = vmatpush1.bf16.msra.mxu0 0
        %1502 = vmatprep.subr.bf16.mxu0 0
        %1503 = vmatpush1.bf16.msra.mxu0 0
        %1504 = vmatprep.subr.bf16.mxu0 0
        %1505 = vmatpush1.bf16.msra.mxu0 0
        %1506 = vmatprep.subr.bf16.mxu0 0
        %1507 = vmatpush1.bf16.msra.mxu0 0
        %1508 = vmatprep.subr.bf16.mxu0 0
        %1509 = vmatpush1.bf16.msra.mxu0 0
        %1510 = vmatprep.subr.bf16.mxu0 0
        %1511 = vmatpush1.bf16.msra.mxu0 0
        %1512 = vmatprep.subr.bf16.mxu0 0
        %1513 = vmatpush1.bf16.msra.mxu0 0
        %1514 = vmatprep.subr.bf16.mxu0 0
        %1515 = vmatpush1.bf16.msra.mxu0 0
        %1516 = vmatprep.mubr.bf16.mxu0 0
        %1517 = vmatmul.mubr.bf16.gmra.mrb[0].mxu0 %v1482
        %v1518 = vpop.f32.mrb[0].mxu0
        %v1519 = vadd.f32 0.0, %v1518
        %v1520 = vpop.f32.mrb[0].mxu0
        %v1521 = vpop.f32.mrb[0].mxu0
        %v1522 = vpop.f32.mrb[0].mxu0
        %1523 = vdwg.mxu0
        %v1524 = vadd.f32 %v1381, %v1519
        %s1525 = scalar_lea.vmem %s4, 6
        %v1526 = vld [vmem:[%s1525] sm:$0x3]
        %v1528 = vsel %vm1108, %v1526, 0
        %1530 = vmatprep.subr.bf16.mxu0 0
        %1531 = vmatpush1.bf16.msra.mxu0 %v1114
        %1532 = vmatprep.subr.bf16.mxu0 0
        %1533 = vmatpush1.bf16.msra.mxu0 0
        %1534 = vmatprep.subr.bf16.mxu0 0
        %1535 = vmatpush1.bf16.msra.mxu0 0
        %1536 = vmatprep.subr.bf16.mxu0 0
        %1537 = vmatpush1.bf16.msra.mxu0 0
        %1538 = vmatprep.subr.bf16.mxu0 0
        %1539 = vmatpush1.bf16.msra.mxu0 0
        %1540 = vmatprep.subr.bf16.mxu0 0
        %1541 = vmatpush1.bf16.msra.mxu0 0
        %1542 = vmatprep.subr.bf16.mxu0 0
        %1543 = vmatpush1.bf16.msra.mxu0 0
        %1544 = vmatprep.subr.bf16.mxu0 0
        %1545 = vmatpush1.bf16.msra.mxu0 0
        %1546 = vmatprep.subr.bf16.mxu0 0
        %1547 = vmatpush1.bf16.msra.mxu0 0
        %1548 = vmatprep.subr.bf16.mxu0 0
        %1549 = vmatpush1.bf16.msra.mxu0 0
        %1550 = vmatprep.subr.bf16.mxu0 0
        %1551 = vmatpush1.bf16.msra.mxu0 0
        %1552 = vmatprep.subr.bf16.mxu0 0
        %1553 = vmatpush1.bf16.msra.mxu0 0
        %1554 = vmatprep.subr.bf16.mxu0 0
        %1555 = vmatpush1.bf16.msra.mxu0 0
        %1556 = vmatprep.subr.bf16.mxu0 0
        %1557 = vmatpush1.bf16.msra.mxu0 0
        %1558 = vmatprep.subr.bf16.mxu0 0
        %1559 = vmatpush1.bf16.msra.mxu0 0
        %1560 = vmatprep.subr.bf16.mxu0 0
        %1561 = vmatpush1.bf16.msra.mxu0 0
        %1562 = vmatprep.mubr.bf16.mxu0 0
        %1563 = vmatmul.mubr.bf16.gmra.mrb[0].mxu0 %v1528
        %v1564 = vpop.f32.mrb[0].mxu0
        %v1565 = vadd.f32 0.0, %v1564
        %v1566 = vpop.f32.mrb[0].mxu0
        %v1567 = vpop.f32.mrb[0].mxu0
        %v1568 = vpop.f32.mrb[0].mxu0
        %1569 = vdwg.mxu0
        %v1570 = vpack.c.bf16 %v1565, %v1565
        %s1571 = scalar_lea.vmem %s5, 144
        %v1572 = vld [vmem:[%s1571] sm:$0xf]
        %v1573 = vld [vmem:[%s1571 + $0x4] sm:$0xf]
        %v1574 = vld [vmem:[%s1571 + $0x8] sm:$0xf]
        %v1575 = vld [vmem:[%s1571 + $0xc] sm:$0xf]
        %v1576 = vld [vmem:[%s1571 + $0x10] sm:$0xf]
        %v1577 = vld [vmem:[%s1571 + $0x14] sm:$0xf]
        %v1578 = vld [vmem:[%s1571 + $0x18] sm:$0xf]
        %v1579 = vld [vmem:[%s1571 + $0x1c] sm:$0xf]
        %v1580 = vld [vmem:[%s1571 + $0x20] sm:$0xf]
        %v1581 = vld [vmem:[%s1571 + $0x24] sm:$0xf]
        %v1582 = vld [vmem:[%s1571 + $0x28] sm:$0xf]
        %v1583 = vld [vmem:[%s1571 + $0x2c] sm:$0xf]
        %v1596 = vunpack.c.l.b16 %v1572
        %v1597 = vunpack.c.l.b16 %v1573
        %v1598 = vunpack.c.l.b16 %v1574
        %v1599 = vunpack.c.l.b16 %v1575
        %v1600 = vunpack.c.l.b16 %v1576
        %v1601 = vunpack.c.l.b16 %v1577
        %v1602 = vunpack.c.l.b16 %v1578
        %v1603 = vunpack.c.l.b16 %v1579
        %v1604 = vunpack.c.l.b16 %v1580
        %v1605 = vunpack.c.l.b16 %v1581
        %v1606 = vunpack.c.l.b16 %v1582
        %v1607 = vunpack.c.l.b16 %v1583
        %v1608 = vpack.c.b16 %v1597, %v1596
        %v1609 = vpack.c.b16 %v1599, %v1598
        %v1610 = vpack.c.b16 %v1601, %v1600
        %v1611 = vpack.c.b16 %v1603, %v1602
        %v1612 = vpack.c.b16 %v1605, %v1604
        %v1613 = vpack.c.b16 %v1607, %v1606
        %v1621 = vsel %vm1083, %v1570, 0
        %1623 = vmatprep.subr.bf16.mxu0 0
        %1624 = vmatpush1.bf16.msra.mxu0 %v1608
        %1625 = vmatprep.subr.bf16.mxu0 0
        %1626 = vmatpush1.bf16.msra.mxu0 %v1609
        %1627 = vmatprep.subr.bf16.mxu0 0
        %1628 = vmatpush1.bf16.msra.mxu0 %v1610
        %1629 = vmatprep.subr.bf16.mxu0 0
        %1630 = vmatpush1.bf16.msra.mxu0 %v1611
        %1631 = vmatprep.subr.bf16.mxu0 0
        %1632 = vmatpush1.bf16.msra.mxu0 %v1612
        %1633 = vmatprep.subr.bf16.mxu0 0
        %1634 = vmatpush1.bf16.msra.mxu0 %v1613
        %1635 = vmatprep.subr.bf16.mxu0 0
        %1636 = vmatpush1.bf16.msra.mxu0 0
        %1637 = vmatprep.subr.bf16.mxu0 0
        %1638 = vmatpush1.bf16.msra.mxu0 0
        %1639 = vmatprep.subr.bf16.mxu0 0
        %1640 = vmatpush1.bf16.msra.mxu0 0
        %1641 = vmatprep.subr.bf16.mxu0 0
        %1642 = vmatpush1.bf16.msra.mxu0 0
        %1643 = vmatprep.subr.bf16.mxu0 0
        %1644 = vmatpush1.bf16.msra.mxu0 0
        %1645 = vmatprep.subr.bf16.mxu0 0
        %1646 = vmatpush1.bf16.msra.mxu0 0
        %1647 = vmatprep.subr.bf16.mxu0 0
        %1648 = vmatpush1.bf16.msra.mxu0 0
        %1649 = vmatprep.subr.bf16.mxu0 0
        %1650 = vmatpush1.bf16.msra.mxu0 0
        %1651 = vmatprep.subr.bf16.mxu0 0
        %1652 = vmatpush1.bf16.msra.mxu0 0
        %1653 = vmatprep.subr.bf16.mxu0 0
        %1654 = vmatpush1.bf16.msra.mxu0 0
        %1655 = vmatprep.mubr.bf16.mxu0 0
        %1656 = vmatmul.mubr.bf16.gmra.mrb[0].mxu0 %v1621
        %v1657 = vpop.f32.mrb[0].mxu0
        %v1658 = vadd.f32 0.0, %v1657
        %v1659 = vpop.f32.mrb[0].mxu0
        %v1660 = vpop.f32.mrb[0].mxu0
        %v1661 = vpop.f32.mrb[0].mxu0
        %1662 = vdwg.mxu0
        %v1663 = vadd.f32 %v1524, %v1658
        %vm1664 = vcmask 914432
        %1665 = vst.msk [vmem:[#allocation3] sm:$0x3f] %vm1664, 0.0
        %vm1666 = vcmask 650240
        %v1667 = vsel %vm1666, %v1663, 0.0
        %v1668 = vrot.slane %v1667, 4
        %v1669 = vadd.f32 %v1667, %v1668
        %v1670 = vrot.slane %v1669, 2
        %v1671 = vadd.f32 %v1669, %v1670
        %v1672 = vrot.slane %v1671, 1
        %v1673 = vadd.f32 %v1671, %v1672
        %v1674 = vmul.f32 %v1663, %v1663
        %v1675 = vsel %vm1666, %v1674, 0.0
        %v1676 = vrot.slane %v1675, 4
        %v1677 = vadd.f32 %v1675, %v1676
        %v1678 = vrot.slane %v1677, 2
        %v1679 = vadd.f32 %v1677, %v1678
        %v1680 = vrot.slane %v1679, 1
        %v1681 = vadd.f32 %v1679, %v1680
        %1683 = vrot.lane.b32.xlu0 %v1673, 112
        %v1684 = vpop.permute.xlu0 %1683
        %v1686 = vadd.f32 %v1673, %v1684
        %1688 = vrot.lane.b32.xlu0 %v1681, 112
        %v1689 = vpop.permute.xlu0 %1688
        %v1691 = vadd.f32 %v1681, %v1689
        %1692 = vrot.lane.b32.xlu0 %v1673, 96
        %v1693 = vpop.permute.xlu0 %1692
        %v1695 = vadd.f32 %v1686, %v1693
        %1696 = vrot.lane.b32.xlu0 %v1681, 96
        %v1697 = vpop.permute.xlu0 %1696
        %v1699 = vadd.f32 %v1691, %v1697
        %1700 = vrot.lane.b32.xlu0 %v1673, 80
        %v1701 = vpop.permute.xlu0 %1700
        %v1703 = vadd.f32 %v1695, %v1701
        %1704 = vrot.lane.b32.xlu0 %v1681, 80
        %v1705 = vpop.permute.xlu0 %1704
        %v1707 = vadd.f32 %v1699, %v1705
        %1708 = vrot.lane.b32.xlu0 %v1673, 64
        %v1709 = vpop.permute.xlu0 %1708
        %v1711 = vadd.f32 %v1703, %v1709
        %1712 = vrot.lane.b32.xlu0 %v1681, 64
        %v1713 = vpop.permute.xlu0 %1712
        %v1715 = vadd.f32 %v1707, %v1713
        %v1716 = vmul.f32 %v1711, 0.05
        %v1717 = vmul.f32 %v1715, 0.05
        %v1718 = vmul.f32 %v1716, %v1716
        %v1719 = vsub.f32 %v1717, %v1718
        %v1720 = vmax.f32 %v1719, 0.0
        %v1721 = vld [vmem:[%s6] sm:$0x1]
        %v1722 = vadd.f32 %v1720, 1e-05
        %v1723 = vrsqrt.pop %v1722
        %v1724 = vmul.f32 %v1721, %v1723
        %v1725 = vld [vmem:[%s7] sm:$0x1]
        %v1726 = vmul.f32 %v1716, %v1724
        %v1727 = vsub.f32 %v1725, %v1726
        %v1729 = vlaneseq
        %v1730 = vshrl.u32 %v1729, 7
        %v1731 = vsub.s32 0, %v1730
        %v1732 = vrot.slane %v1724, %v1731
        %v1734 = vmul.f32 %v1663, %v1732
        %v1736 = vlaneseq
        %v1737 = vshrl.u32 %v1736, 7
        %v1738 = vsub.s32 0, %v1737
        %v1739 = vrot.slane %v1727, %v1738
        %v1741 = vadd.f32 %v1734, %v1739
        %vm1742 = vcmp.gt.f32.partialorder %v1741, 0.0
        %v1743 = vmul.f32 %v1741, 0.2
        %v1744 = vsel %vm1742, %v1741, %v1743
        %1746 = vrot.lane.b32.xlu0 %v1744, 16
        %v1747 = vpop.permute.xlu0 %1746
        %vm1749 = vcmask 257152
        %1750 = vst.msk [vmem:[#allocation3 + $0x1] sm:$0xf] %vm1749, %v1747
        %1751 = vrot.lane.b32.xlu0 %v1732, 16
        %v1752 = vpop.permute.xlu0 %1751
        %v1754 = vmul.f32 %v1663, %v1752
        %1755 = vrot.lane.b32.xlu0 %v1739, 16
        %v1756 = vpop.permute.xlu0 %1755
        %v1758 = vadd.f32 %v1754, %v1756
        %vm1759 = vcmp.gt.f32.partialorder %v1758, 0.0
        %v1760 = vmul.f32 %v1758, 0.2
        %v1761 = vsel %vm1759, %v1758, %v1760
        %1763 = vrot.lane.b32.xlu0 %v1761, 16
        %v1764 = vpop.permute.xlu0 %1763
        %vm1766 = vcmask 388352
        %1767 = vst.msk [vmem:[#allocation3 + $0x1] sm:$0xf] %vm1766, %v1764
        %1768 = vrot.lane.b32.xlu0 %v1732, 32
        %v1769 = vpop.permute.xlu0 %1768
        %v1771 = vmul.f32 %v1663, %v1769
        %1772 = vrot.lane.b32.xlu0 %v1739, 32
        %v1773 = vpop.permute.xlu0 %1772
        %v1775 = vadd.f32 %v1771, %v1773
        %vm1776 = vcmp.gt.f32.partialorder %v1775, 0.0
        %v1777 = vmul.f32 %v1775, 0.2
        %v1778 = vsel %vm1776, %v1775, %v1777
        %1780 = vrot.lane.b32.xlu0 %v1778, 16
        %v1781 = vpop.permute.xlu0 %1780
        %vm1783 = vcmask 519552
        %1784 = vst.msk [vmem:[#allocation3 + $0x1] sm:$0xf] %vm1783, %v1781
        %1785 = vrot.lane.b32.xlu0 %v1732, 48
        %v1786 = vpop.permute.xlu0 %1785
        %v1788 = vmul.f32 %v1663, %v1786
        %1789 = vrot.lane.b32.xlu0 %v1739, 48
        %v1790 = vpop.permute.xlu0 %1789
        %v1792 = vadd.f32 %v1788, %v1790
        %vm1793 = vcmp.gt.f32.partialorder %v1792, 0.0
        %v1794 = vmul.f32 %v1792, 0.2
        %v1795 = vsel %vm1793, %v1792, %v1794
        %1797 = vrot.lane.b32.xlu0 %v1795, 16
        %v1798 = vpop.permute.xlu0 %1797
        %vm1800 = vcmask 650752
        %1801 = vst.msk [vmem:[#allocation3 + $0x1] sm:$0xf] %vm1800, %v1798
        %1802 = vrot.lane.b32.xlu0 %v1732, 64
        %v1803 = vpop.permute.xlu0 %1802
        %v1805 = vmul.f32 %v1663, %v1803
        %1806 = vrot.lane.b32.xlu0 %v1739, 64
        %v1807 = vpop.permute.xlu0 %1806
        %v1809 = vadd.f32 %v1805, %v1807
        %vm1810 = vcmp.gt.f32.partialorder %v1809, 0.0
        %v1811 = vmul.f32 %v1809, 0.2
        %v1812 = vsel %vm1810, %v1809, %v1811
        %1814 = vrot.lane.b32.xlu0 %v1812, 16
        %v1815 = vpop.permute.xlu0 %1814
        %vm1817 = vcmask 781952
        %1818 = vst.msk [vmem:[#allocation3 + $0x1] sm:$0xf] %vm1817, %v1815
        %v1819 = vld [vmem:[#allocation3] sm:$0x3f]
        %v1820 = vpack.c.bf16 %v1819, %v1819
        %v1821 = vld [vmem:[%s8] sm:$0x1]
        %vm1822 = vcmask 48128
        %v1824 = vsel %vm1822, %v1821, 0
        %vm1826 = vcmask 1042432
        %v1828 = vsel %vm1826, %v1820, 0
        %1830 = vmatprep.subr.bf16.mxu0 0
        %1831 = vmatpush1.bf16.msra.mxu0 %v1828
        %1832 = vmatprep.subr.bf16.mxu0 0
        %1833 = vmatpush1.bf16.msra.mxu0 0
        %1834 = vmatprep.subr.bf16.mxu0 0
        %1835 = vmatpush1.bf16.msra.mxu0 0
        %1836 = vmatprep.subr.bf16.mxu0 0
        %1837 = vmatpush1.bf16.msra.mxu0 0
        %1838 = vmatprep.subr.bf16.mxu0 0
        %1839 = vmatpush1.bf16.msra.mxu0 0
        %1840 = vmatprep.subr.bf16.mxu0 0
        %1841 = vmatpush1.bf16.msra.mxu0 0
        %1842 = vmatprep.subr.bf16.mxu0 0
        %1843 = vmatpush1.bf16.msra.mxu0 0
        %1844 = vmatprep.subr.bf16.mxu0 0
        %1845 = vmatpush1.bf16.msra.mxu0 0
        %1846 = vmatprep.subr.bf16.mxu0 0
        %1847 = vmatpush1.bf16.msra.mxu0 0
        %1848 = vmatprep.subr.bf16.mxu0 0
        %1849 = vmatpush1.bf16.msra.mxu0 0
        %1850 = vmatprep.subr.bf16.mxu0 0
        %1851 = vmatpush1.bf16.msra.mxu0 0
        %1852 = vmatprep.subr.bf16.mxu0 0
        %1853 = vmatpush1.bf16.msra.mxu0 0
        %1854 = vmatprep.subr.bf16.mxu0 0
        %1855 = vmatpush1.bf16.msra.mxu0 0
        %1856 = vmatprep.subr.bf16.mxu0 0
        %1857 = vmatpush1.bf16.msra.mxu0 0
        %1858 = vmatprep.subr.bf16.mxu0 0
        %1859 = vmatpush1.bf16.msra.mxu0 0
        %1860 = vmatprep.subr.bf16.mxu0 0
        %1861 = vmatpush1.bf16.msra.mxu0 0
        %1862 = vmatprep.mubr.bf16.mxu0 0
        %1863 = vmatmul.mubr.bf16.gmra.mrb[0].mxu0 %v1824
        %v1864 = vpop.f32.mrb[0].mxu0
        %v1865 = vadd.f32 0.0, %v1864
        %v1866 = vpop.f32.mrb[0].mxu0
        %v1867 = vpop.f32.mrb[0].mxu0
        %v1868 = vpop.f32.mrb[0].mxu0
        %1869 = vdwg.mxu0
        %v1870 = vpack.c.bf16 %v1865, %v1865
        %v1871 = vld [vmem:[%s9] sm:$0xf]
        %v1872 = vld [vmem:[%s9 + $0x4] sm:$0xf]
        %v1873 = vld [vmem:[%s9 + $0x8] sm:$0xf]
        %v1874 = vld [vmem:[%s9 + $0xc] sm:$0xf]
        %v1875 = vld [vmem:[%s9 + $0x10] sm:$0xf]
        %v1876 = vld [vmem:[%s9 + $0x14] sm:$0xf]
        %v1877 = vld [vmem:[%s9 + $0x18] sm:$0xf]
        %v1878 = vld [vmem:[%s9 + $0x1c] sm:$0xf]
        %v1879 = vld [vmem:[%s9 + $0x20] sm:$0xf]
        %v1880 = vld [vmem:[%s9 + $0x24] sm:$0xf]
        %v1881 = vld [vmem:[%s9 + $0x28] sm:$0xf]
        %v1882 = vld [vmem:[%s9 + $0x2c] sm:$0xf]
        %v1883 = vld [vmem:[%s9 + $0x30] sm:$0xf]
        %v1884 = vld [vmem:[%s9 + $0x34] sm:$0xf]
        %s1885 = scalar_lea.vmem %s8, 1
        %v1886 = vld [vmem:[%s1885] sm:$0x1]
        %v1888 = vsel %vm1822, %v1886, 0
        %1890 = vmatprep.subr.bf16.mxu0 0
        %1891 = vmatpush1.bf16.msra.mxu0 %v1828
        %1892 = vmatprep.subr.bf16.mxu0 0
        %1893 = vmatpush1.bf16.msra.mxu0 0
        %1894 = vmatprep.subr.bf16.mxu0 0
        %1895 = vmatpush1.bf16.msra.mxu0 0
        %1896 = vmatprep.subr.bf16.mxu0 0
        %1897 = vmatpush1.bf16.msra.mxu0 0
        %1898 = vmatprep.subr.bf16.mxu0 0
        %1899 = vmatpush1.bf16.msra.mxu0 0
        %1900 = vmatprep.subr.bf16.mxu0 0
        %1901 = vmatpush1.bf16.msra.mxu0 0
        %1902 = vmatprep.subr.bf16.mxu0 0
        %1903 = vmatpush1.bf16.msra.mxu0 0
        %1904 = vmatprep.subr.bf16.mxu0 0
        %1905 = vmatpush1.bf16.msra.mxu0 0
        %1906 = vmatprep.subr.bf16.mxu0 0
        %1907 = vmatpush1.bf16.msra.mxu0 0
        %1908 = vmatprep.subr.bf16.mxu0 0
        %1909 = vmatpush1.bf16.msra.mxu0 0
        %1910 = vmatprep.subr.bf16.mxu0 0
        %1911 = vmatpush1.bf16.msra.mxu0 0
        %1912 = vmatprep.subr.bf16.mxu0 0
        %1913 = vmatpush1.bf16.msra.mxu0 0
        %1914 = vmatprep.subr.bf16.mxu0 0
        %1915 = vmatpush1.bf16.msra.mxu0 0
        %1916 = vmatprep.subr.bf16.mxu0 0
        %1917 = vmatpush1.bf16.msra.mxu0 0
        %1918 = vmatprep.subr.bf16.mxu0 0
        %1919 = vmatpush1.bf16.msra.mxu0 0
        %1920 = vmatprep.subr.bf16.mxu0 0
        %1921 = vmatpush1.bf16.msra.mxu0 0
        %1922 = vmatprep.mubr.bf16.mxu0 0
        %1923 = vmatmul.mubr.bf16.gmra.mrb[0].mxu0 %v1888
        %v1924 = vpop.f32.mrb[0].mxu0
        %v1925 = vadd.f32 0.0, %v1924
        %v1926 = vpop.f32.mrb[0].mxu0
        %v1927 = vpop.f32.mrb[0].mxu0
        %v1928 = vpop.f32.mrb[0].mxu0
        %1929 = vdwg.mxu0
        %v1930 = vpack.c.bf16 %v1925, %v1925
        %s1931 = scalar_lea.vmem %s9, 56
        %v1932 = vld [vmem:[%s1931] sm:$0xf]
        %v1933 = vld [vmem:[%s1931 + $0x4] sm:$0xf]
        %v1934 = vld [vmem:[%s1931 + $0x8] sm:$0xf]
        %v1935 = vld [vmem:[%s1931 + $0xc] sm:$0xf]
        %v1936 = vld [vmem:[%s1931 + $0x10] sm:$0xf]
        %v1937 = vld [vmem:[%s1931 + $0x14] sm:$0xf]
        %v1938 = vld [vmem:[%s1931 + $0x18] sm:$0xf]
        %v1939 = vld [vmem:[%s1931 + $0x1c] sm:$0xf]
        %v1940 = vld [vmem:[%s1931 + $0x20] sm:$0xf]
        %v1941 = vld [vmem:[%s1931 + $0x24] sm:$0xf]
        %v1942 = vld [vmem:[%s1931 + $0x28] sm:$0xf]
        %v1943 = vld [vmem:[%s1931 + $0x2c] sm:$0xf]
        %v1944 = vld [vmem:[%s1931 + $0x30] sm:$0xf]
        %v1945 = vld [vmem:[%s1931 + $0x34] sm:$0xf]
        %v1960 = vunpack.c.l.b16 %v1932
        %v1961 = vunpack.c.l.b16 %v1933
        %v1962 = vunpack.c.l.b16 %v1934
        %v1963 = vunpack.c.l.b16 %v1935
        %v1964 = vunpack.c.l.b16 %v1936
        %v1965 = vunpack.c.l.b16 %v1937
        %v1966 = vunpack.c.l.b16 %v1938
        %v1967 = vunpack.c.l.b16 %v1939
        %v1968 = vunpack.c.l.b16 %v1940
        %v1969 = vunpack.c.l.b16 %v1941
        %v1970 = vunpack.c.l.b16 %v1942
        %v1971 = vunpack.c.l.b16 %v1943
        %v1972 = vunpack.c.l.b16 %v1944
        %v1973 = vunpack.c.l.b16 %v1945
        %v1974 = vpack.c.b16 %v1961, %v1960
        %v1975 = vpack.c.b16 %v1963, %v1962
        %v1976 = vpack.c.b16 %v1965, %v1964
        %v1977 = vpack.c.b16 %v1967, %v1966
        %v1978 = vpack.c.b16 %v1969, %v1968
        %v1979 = vpack.c.b16 %v1971, %v1970
        %v1980 = vpack.c.b16 %v1973, %v1972
        %vm1988 = vcmask 916480
        %v1990 = vsel %vm1988, %v1930, 0
        %1992 = vmatprep.subr.bf16.mxu0 0
        %1993 = vmatpush1.bf16.msra.mxu0 %v1974
        %1994 = vmatprep.subr.bf16.mxu0 0
        %1995 = vmatpush1.bf16.msra.mxu0 %v1975
        %1996 = vmatprep.subr.bf16.mxu0 0
        %1997 = vmatpush1.bf16.msra.mxu0 %v1976
        %1998 = vmatprep.subr.bf16.mxu0 0
        %1999 = vmatpush1.bf16.msra.mxu0 %v1977
        %2000 = vmatprep.subr.bf16.mxu0 0
        %2001 = vmatpush1.bf16.msra.mxu0 %v1978
        %2002 = vmatprep.subr.bf16.mxu0 0
        %2003 = vmatpush1.bf16.msra.mxu0 %v1979
        %2004 = vmatprep.subr.bf16.mxu0 0
        %2005 = vmatpush1.bf16.msra.mxu0 %v1980
        %2006 = vmatprep.subr.bf16.mxu0 0
        %2007 = vmatpush1.bf16.msra.mxu0 0
        %2008 = vmatprep.subr.bf16.mxu0 0
        %2009 = vmatpush1.bf16.msra.mxu0 0
        %2010 = vmatprep.subr.bf16.mxu0 0
        %2011 = vmatpush1.bf16.msra.mxu0 0
        %2012 = vmatprep.subr.bf16.mxu0 0
        %2013 = vmatpush1.bf16.msra.mxu0 0
        %2014 = vmatprep.subr.bf16.mxu0 0
        %2015 = vmatpush1.bf16.msra.mxu0 0
        %2016 = vmatprep.subr.bf16.mxu0 0
        %2017 = vmatpush1.bf16.msra.mxu0 0
        %2018 = vmatprep.subr.bf16.mxu0 0
        %2019 = vmatpush1.bf16.msra.mxu0 0
        %2020 = vmatprep.subr.bf16.mxu0 0
        %2021 = vmatpush1.bf16.msra.mxu0 0
        %2022 = vmatprep.subr.bf16.mxu0 0
        %2023 = vmatpush1.bf16.msra.mxu0 0
        %2024 = vmatprep.mubr.bf16.mxu0 0
        %2025 = vmatmul.mubr.bf16.gmra.mrb[0].mxu0 %v1990
        %v2026 = vpop.f32.mrb[0].mxu0
        %v2027 = vadd.f32 0.0, %v2026
        %v2028 = vpop.f32.mrb[0].mxu0
        %v2029 = vpop.f32.mrb[0].mxu0
        %v2030 = vpop.f32.mrb[0].mxu0
        %2031 = vdwg.mxu0
        %v2046 = vunpack.c.l.b16 %v1871
        %v2047 = vunpack.c.l.b16 %v1872
        %v2048 = vunpack.c.l.b16 %v1873
        %v2049 = vunpack.c.l.b16 %v1874
        %v2050 = vunpack.c.l.b16 %v1875
        %v2051 = vunpack.c.l.b16 %v1876
        %v2052 = vunpack.c.l.b16 %v1877
        %v2053 = vunpack.c.l.b16 %v1878
        %v2054 = vunpack.c.l.b16 %v1879
        %v2055 = vunpack.c.l.b16 %v1880
        %v2056 = vunpack.c.l.b16 %v1881
        %v2057 = vunpack.c.l.b16 %v1882
        %v2058 = vunpack.c.l.b16 %v1883
        %v2059 = vunpack.c.l.b16 %v1884
        %v2060 = vpack.c.b16 %v2047, %v2046
        %v2061 = vpack.c.b16 %v2049, %v2048
        %v2062 = vpack.c.b16 %v2051, %v2050
        %v2063 = vpack.c.b16 %v2053, %v2052
        %v2064 = vpack.c.b16 %v2055, %v2054
        %v2065 = vpack.c.b16 %v2057, %v2056
        %v2066 = vpack.c.b16 %v2059, %v2058
        %v2075 = vsel %vm1988, %v1870, 0
        %2077 = vmatprep.subr.bf16.mxu0 0
        %2078 = vmatpush1.bf16.msra.mxu0 %v2060
        %2079 = vmatprep.subr.bf16.mxu0 0
        %2080 = vmatpush1.bf16.msra.mxu0 %v2061
        %2081 = vmatprep.subr.bf16.mxu0 0
        %2082 = vmatpush1.bf16.msra.mxu0 %v2062
        %2083 = vmatprep.subr.bf16.mxu0 0
        %2084 = vmatpush1.bf16.msra.mxu0 %v2063
        %2085 = vmatprep.subr.bf16.mxu0 0
        %2086 = vmatpush1.bf16.msra.mxu0 %v2064
        %2087 = vmatprep.subr.bf16.mxu0 0
        %2088 = vmatpush1.bf16.msra.mxu0 %v2065
        %2089 = vmatprep.subr.bf16.mxu0 0
        %2090 = vmatpush1.bf16.msra.mxu0 %v2066
        %2091 = vmatprep.subr.bf16.mxu0 0
        %2092 = vmatpush1.bf16.msra.mxu0 0
        %2093 = vmatprep.subr.bf16.mxu0 0
        %2094 = vmatpush1.bf16.msra.mxu0 0
        %2095 = vmatprep.subr.bf16.mxu0 0
        %2096 = vmatpush1.bf16.msra.mxu0 0
        %2097 = vmatprep.subr.bf16.mxu0 0
        %2098 = vmatpush1.bf16.msra.mxu0 0
        %2099 = vmatprep.subr.bf16.mxu0 0
        %2100 = vmatpush1.bf16.msra.mxu0 0
        %2101 = vmatprep.subr.bf16.mxu0 0
        %2102 = vmatpush1.bf16.msra.mxu0 0
        %2103 = vmatprep.subr.bf16.mxu0 0
        %2104 = vmatpush1.bf16.msra.mxu0 0
        %2105 = vmatprep.subr.bf16.mxu0 0
        %2106 = vmatpush1.bf16.msra.mxu0 0
        %2107 = vmatprep.subr.bf16.mxu0 0
        %2108 = vmatpush1.bf16.msra.mxu0 0
        %2109 = vmatprep.mubr.bf16.mxu0 0
        %2110 = vmatmul.mubr.bf16.gmra.mrb[0].mxu0 %v2075
        %v2111 = vpop.f32.mrb[0].mxu0
        %v2112 = vadd.f32 %v2027, %v2111
        %v2113 = vpop.f32.mrb[0].mxu0
        %v2114 = vpop.f32.mrb[0].mxu0
        %v2115 = vpop.f32.mrb[0].mxu0
        %2116 = vdwg.mxu0
        %s2117 = scalar_lea.vmem %s8, 2
        %v2118 = vld [vmem:[%s2117] sm:$0x1]
        %v2120 = vsel %vm1822, %v2118, 0
        %2122 = vmatprep.subr.bf16.mxu0 0
        %2123 = vmatpush1.bf16.msra.mxu0 %v1828
        %2124 = vmatprep.subr.bf16.mxu0 0
        %2125 = vmatpush1.bf16.msra.mxu0 0
        %2126 = vmatprep.subr.bf16.mxu0 0
        %2127 = vmatpush1.bf16.msra.mxu0 0
        %2128 = vmatprep.subr.bf16.mxu0 0
        %2129 = vmatpush1.bf16.msra.mxu0 0
        %2130 = vmatprep.subr.bf16.mxu0 0
        %2131 = vmatpush1.bf16.msra.mxu0 0
        %2132 = vmatprep.subr.bf16.mxu0 0
        %2133 = vmatpush1.bf16.msra.mxu0 0
        %2134 = vmatprep.subr.bf16.mxu0 0
        %2135 = vmatpush1.bf16.msra.mxu0 0
        %2136 = vmatprep.subr.bf16.mxu0 0
        %2137 = vmatpush1.bf16.msra.mxu0 0
        %2138 = vmatprep.subr.bf16.mxu0 0
        %2139 = vmatpush1.bf16.msra.mxu0 0
        %2140 = vmatprep.subr.bf16.mxu0 0
        %2141 = vmatpush1.bf16.msra.mxu0 0
        %2142 = vmatprep.subr.bf16.mxu0 0
        %2143 = vmatpush1.bf16.msra.mxu0 0
        %2144 = vmatprep.subr.bf16.mxu0 0
        %2145 = vmatpush1.bf16.msra.mxu0 0
        %2146 = vmatprep.subr.bf16.mxu0 0
        %2147 = vmatpush1.bf16.msra.mxu0 0
        %2148 = vmatprep.subr.bf16.mxu0 0
        %2149 = vmatpush1.bf16.msra.mxu0 0
        %2150 = vmatprep.subr.bf16.mxu0 0
        %2151 = vmatpush1.bf16.msra.mxu0 0
        %2152 = vmatprep.subr.bf16.mxu0 0
        %2153 = vmatpush1.bf16.msra.mxu0 0
        %2154 = vmatprep.mubr.bf16.mxu0 0
        %2155 = vmatmul.mubr.bf16.gmra.mrb[0].mxu0 %v2120
        %v2156 = vpop.f32.mrb[0].mxu0
        %v2157 = vadd.f32 0.0, %v2156
        %v2158 = vpop.f32.mrb[0].mxu0
        %v2159 = vpop.f32.mrb[0].mxu0
        %v2160 = vpop.f32.mrb[0].mxu0
        %2161 = vdwg.mxu0
        %v2162 = vpack.c.bf16 %v2157, %v2157
        %s2163 = scalar_lea.vmem %s9, 112
        %v2164 = vld [vmem:[%s2163] sm:$0xf]
        %v2165 = vld [vmem:[%s2163 + $0x4] sm:$0xf]
        %v2166 = vld [vmem:[%s2163 + $0x8] sm:$0xf]
        %v2167 = vld [vmem:[%s2163 + $0xc] sm:$0xf]
        %v2168 = vld [vmem:[%s2163 + $0x10] sm:$0xf]
        %v2169 = vld [vmem:[%s2163 + $0x14] sm:$0xf]
        %v2170 = vld [vmem:[%s2163 + $0x18] sm:$0xf]
        %v2171 = vld [vmem:[%s2163 + $0x1c] sm:$0xf]
        %v2172 = vld [vmem:[%s2163 + $0x20] sm:$0xf]
        %v2173 = vld [vmem:[%s2163 + $0x24] sm:$0xf]
        %v2174 = vld [vmem:[%s2163 + $0x28] sm:$0xf]
        %v2175 = vld [vmem:[%s2163 + $0x2c] sm:$0xf]
        %v2176 = vld [vmem:[%s2163 + $0x30] sm:$0xf]
        %v2177 = vld [vmem:[%s2163 + $0x34] sm:$0xf]
        %v2192 = vunpack.c.l.b16 %v2164
        %v2193 = vunpack.c.l.b16 %v2165
        %v2194 = vunpack.c.l.b16 %v2166
        %v2195 = vunpack.c.l.b16 %v2167
        %v2196 = vunpack.c.l.b16 %v2168
        %v2197 = vunpack.c.l.b16 %v2169
        %v2198 = vunpack.c.l.b16 %v2170
        %v2199 = vunpack.c.l.b16 %v2171
        %v2200 = vunpack.c.l.b16 %v2172
        %v2201 = vunpack.c.l.b16 %v2173
        %v2202 = vunpack.c.l.b16 %v2174
        %v2203 = vunpack.c.l.b16 %v2175
        %v2204 = vunpack.c.l.b16 %v2176
        %v2205 = vunpack.c.l.b16 %v2177
        %v2206 = vpack.c.b16 %v2193, %v2192
        %v2207 = vpack.c.b16 %v2195, %v2194
        %v2208 = vpack.c.b16 %v2197, %v2196
        %v2209 = vpack.c.b16 %v2199, %v2198
        %v2210 = vpack.c.b16 %v2201, %v2200
        %v2211 = vpack.c.b16 %v2203, %v2202
        %v2212 = vpack.c.b16 %v2205, %v2204
        %v2221 = vsel %vm1988, %v2162, 0
        %2223 = vmatprep.subr.bf16.mxu0 0
        %2224 = vmatpush1.bf16.msra.mxu0 %v2206
        %2225 = vmatprep.subr.bf16.mxu0 0
        %2226 = vmatpush1.bf16.msra.mxu0 %v2207
        %2227 = vmatprep.subr.bf16.mxu0 0
        %2228 = vmatpush1.bf16.msra.mxu0 %v2208
        %2229 = vmatprep.subr.bf16.mxu0 0
        %2230 = vmatpush1.bf16.msra.mxu0 %v2209
        %2231 = vmatprep.subr.bf16.mxu0 0
        %2232 = vmatpush1.bf16.msra.mxu0 %v2210
        %2233 = vmatprep.subr.bf16.mxu0 0
        %2234 = vmatpush1.bf16.msra.mxu0 %v2211
        %2235 = vmatprep.subr.bf16.mxu0 0
        %2236 = vmatpush1.bf16.msra.mxu0 %v2212
        %2237 = vmatprep.subr.bf16.mxu0 0
        %2238 = vmatpush1.bf16.msra.mxu0 0
        %2239 = vmatprep.subr.bf16.mxu0 0
        %2240 = vmatpush1.bf16.msra.mxu0 0
        %2241 = vmatprep.subr.bf16.mxu0 0
        %2242 = vmatpush1.bf16.msra.mxu0 0
        %2243 = vmatprep.subr.bf16.mxu0 0
        %2244 = vmatpush1.bf16.msra.mxu0 0
        %2245 = vmatprep.subr.bf16.mxu0 0
        %2246 = vmatpush1.bf16.msra.mxu0 0
        %2247 = vmatprep.subr.bf16.mxu0 0
        %2248 = vmatpush1.bf16.msra.mxu0 0
        %2249 = vmatprep.subr.bf16.mxu0 0
        %2250 = vmatpush1.bf16.msra.mxu0 0
        %2251 = vmatprep.subr.bf16.mxu0 0
        %2252 = vmatpush1.bf16.msra.mxu0 0
        %2253 = vmatprep.subr.bf16.mxu0 0
        %2254 = vmatpush1.bf16.msra.mxu0 0
        %2255 = vmatprep.mubr.bf16.mxu0 0
        %2256 = vmatmul.mubr.bf16.gmra.mrb[0].mxu0 %v2221
        %v2257 = vpop.f32.mrb[0].mxu0
        %v2258 = vadd.f32 0.0, %v2257
        %v2259 = vpop.f32.mrb[0].mxu0
        %v2260 = vpop.f32.mrb[0].mxu0
        %v2261 = vpop.f32.mrb[0].mxu0
        %2262 = vdwg.mxu0
        %v2263 = vadd.f32 %v2112, %v2258
        %s2264 = scalar_lea.vmem %s8, 3
        %v2265 = vld [vmem:[%s2264] sm:$0x1]
        %v2267 = vsel %vm1822, %v2265, 0
        %2269 = vmatprep.subr.bf16.mxu0 0
        %2270 = vmatpush1.bf16.msra.mxu0 %v1828
        %2271 = vmatprep.subr.bf16.mxu0 0
        %2272 = vmatpush1.bf16.msra.mxu0 0
        %2273 = vmatprep.subr.bf16.mxu0 0
        %2274 = vmatpush1.bf16.msra.mxu0 0
        %2275 = vmatprep.subr.bf16.mxu0 0
        %2276 = vmatpush1.bf16.msra.mxu0 0
        %2277 = vmatprep.subr.bf16.mxu0 0
        %2278 = vmatpush1.bf16.msra.mxu0 0
        %2279 = vmatprep.subr.bf16.mxu0 0
        %2280 = vmatpush1.bf16.msra.mxu0 0
        %2281 = vmatprep.subr.bf16.mxu0 0
        %2282 = vmatpush1.bf16.msra.mxu0 0
        %2283 = vmatprep.subr.bf16.mxu0 0
        %2284 = vmatpush1.bf16.msra.mxu0 0
        %2285 = vmatprep.subr.bf16.mxu0 0
        %2286 = vmatpush1.bf16.msra.mxu0 0
        %2287 = vmatprep.subr.bf16.mxu0 0
        %2288 = vmatpush1.bf16.msra.mxu0 0
        %2289 = vmatprep.subr.bf16.mxu0 0
        %2290 = vmatpush1.bf16.msra.mxu0 0
        %2291 = vmatprep.subr.bf16.mxu0 0
        %2292 = vmatpush1.bf16.msra.mxu0 0
        %2293 = vmatprep.subr.bf16.mxu0 0
        %2294 = vmatpush1.bf16.msra.mxu0 0
        %2295 = vmatprep.subr.bf16.mxu0 0
        %2296 = vmatpush1.bf16.msra.mxu0 0
        %2297 = vmatprep.subr.bf16.mxu0 0
        %2298 = vmatpush1.bf16.msra.mxu0 0
        %2299 = vmatprep.subr.bf16.mxu0 0
        %2300 = vmatpush1.bf16.msra.mxu0 0
        %2301 = vmatprep.mubr.bf16.mxu0 0
        %2302 = vmatmul.mubr.bf16.gmra.mrb[0].mxu0 %v2267
        %v2303 = vpop.f32.mrb[0].mxu0
        %v2304 = vadd.f32 0.0, %v2303
        %v2305 = vpop.f32.mrb[0].mxu0
        %v2306 = vpop.f32.mrb[0].mxu0
        %v2307 = vpop.f32.mrb[0].mxu0
        %2308 = vdwg.mxu0
        %v2309 = vpack.c.bf16 %v2304, %v2304
        %s2310 = scalar_lea.vmem %s9, 168
        %v2311 = vld [vmem:[%s2310] sm:$0xf]
        %v2312 = vld [vmem:[%s2310 + $0x4] sm:$0xf]
        %v2313 = vld [vmem:[%s2310 + $0x8] sm:$0xf]
        %v2314 = vld [vmem:[%s2310 + $0xc] sm:$0xf]
        %v2315 = vld [vmem:[%s2310 + $0x10] sm:$0xf]
        %v2316 = vld [vmem:[%s2310 + $0x14] sm:$0xf]
        %v2317 = vld [vmem:[%s2310 + $0x18] sm:$0xf]
        %v2318 = vld [vmem:[%s2310 + $0x1c] sm:$0xf]
        %v2319 = vld [vmem:[%s2310 + $0x20] sm:$0xf]
        %v2320 = vld [vmem:[%s2310 + $0x24] sm:$0xf]
        %v2321 = vld [vmem:[%s2310 + $0x28] sm:$0xf]
        %v2322 = vld [vmem:[%s2310 + $0x2c] sm:$0xf]
        %v2323 = vld [vmem:[%s2310 + $0x30] sm:$0xf]
        %v2324 = vld [vmem:[%s2310 + $0x34] sm:$0xf]
        %v2339 = vunpack.c.l.b16 %v2311
        %v2340 = vunpack.c.l.b16 %v2312
        %v2341 = vunpack.c.l.b16 %v2313
        %v2342 = vunpack.c.l.b16 %v2314
        %v2343 = vunpack.c.l.b16 %v2315
        %v2344 = vunpack.c.l.b16 %v2316
        %v2345 = vunpack.c.l.b16 %v2317
        %v2346 = vunpack.c.l.b16 %v2318
        %v2347 = vunpack.c.l.b16 %v2319
        %v2348 = vunpack.c.l.b16 %v2320
        %v2349 = vunpack.c.l.b16 %v2321
        %v2350 = vunpack.c.l.b16 %v2322
        %v2351 = vunpack.c.l.b16 %v2323
        %v2352 = vunpack.c.l.b16 %v2324
        %v2353 = vpack.c.b16 %v2340, %v2339
        %v2354 = vpack.c.b16 %v2342, %v2341
        %v2355 = vpack.c.b16 %v2344, %v2343
        %v2356 = vpack.c.b16 %v2346, %v2345
        %v2357 = vpack.c.b16 %v2348, %v2347
        %v2358 = vpack.c.b16 %v2350, %v2349
        %v2359 = vpack.c.b16 %v2352, %v2351
        %v2368 = vsel %vm1988, %v2309, 0
        %2370 = vmatprep.subr.bf16.mxu0 0
        %2371 = vmatpush1.bf16.msra.mxu0 %v2353
        %2372 = vmatprep.subr.bf16.mxu0 0
        %2373 = vmatpush1.bf16.msra.mxu0 %v2354
        %2374 = vmatprep.subr.bf16.mxu0 0
        %2375 = vmatpush1.bf16.msra.mxu0 %v2355
        %2376 = vmatprep.subr.bf16.mxu0 0
        %2377 = vmatpush1.bf16.msra.mxu0 %v2356
        %2378 = vmatprep.subr.bf16.mxu0 0
        %2379 = vmatpush1.bf16.msra.mxu0 %v2357
        %2380 = vmatprep.subr.bf16.mxu0 0
        %2381 = vmatpush1.bf16.msra.mxu0 %v2358
        %2382 = vmatprep.subr.bf16.mxu0 0
        %2383 = vmatpush1.bf16.msra.mxu0 %v2359
        %2384 = vmatprep.subr.bf16.mxu0 0
        %2385 = vmatpush1.bf16.msra.mxu0 0
        %2386 = vmatprep.subr.bf16.mxu0 0
        %2387 = vmatpush1.bf16.msra.mxu0 0
        %2388 = vmatprep.subr.bf16.mxu0 0
        %2389 = vmatpush1.bf16.msra.mxu0 0
        %2390 = vmatprep.subr.bf16.mxu0 0
        %2391 = vmatpush1.bf16.msra.mxu0 0
        %2392 = vmatprep.subr.bf16.mxu0 0
        %2393 = vmatpush1.bf16.msra.mxu0 0
        %2394 = vmatprep.subr.bf16.mxu0 0
        %2395 = vmatpush1.bf16.msra.mxu0 0
        %2396 = vmatprep.subr.bf16.mxu0 0
        %2397 = vmatpush1.bf16.msra.mxu0 0
        %2398 = vmatprep.subr.bf16.mxu0 0
        %2399 = vmatpush1.bf16.msra.mxu0 0
        %2400 = vmatprep.subr.bf16.mxu0 0
        %2401 = vmatpush1.bf16.msra.mxu0 0
        %2402 = vmatprep.mubr.bf16.mxu0 0
        %2403 = vmatmul.mubr.bf16.gmra.mrb[0].mxu0 %v2368
        %v2404 = vpop.f32.mrb[0].mxu0
        %v2405 = vadd.f32 0.0, %v2404
        %v2406 = vpop.f32.mrb[0].mxu0
        %v2407 = vpop.f32.mrb[0].mxu0
        %v2408 = vpop.f32.mrb[0].mxu0
        %2409 = vdwg.mxu0
        %v2410 = vadd.f32 %v2263, %v2405
        %2411 = vst [vmem:[#allocation4] sm:$0x3f] 0.0
        %vm2412 = vcmask 521216
        %2413 = vst.msk [vmem:[#allocation4 + $0x8] sm:$0x3f] %vm2412, 0.0
        %vm2414 = vcmask 517120
        %v2415 = vsel %vm2414, %v2410, 0.0
        %v2416 = vrot.slane %v2415, 4
        %v2417 = vadd.f32 %v2415, %v2416
        %v2418 = vrot.slane %v2417, 2
        %v2419 = vadd.f32 %v2417, %v2418
        %v2420 = vrot.slane %v2419, 1
        %v2421 = vadd.f32 %v2419, %v2420
        %v2422 = vmul.f32 %v2410, %v2410
        %v2423 = vsel %vm2414, %v2422, 0.0
        %v2424 = vrot.slane %v2423, 4
        %v2425 = vadd.f32 %v2423, %v2424
        %v2426 = vrot.slane %v2425, 2
        %v2427 = vadd.f32 %v2425, %v2426
        %v2428 = vrot.slane %v2427, 1
        %v2429 = vadd.f32 %v2427, %v2428
        %2431 = vrot.lane.b32.xlu0 %v2421, 96
        %v2432 = vpop.permute.xlu0 %2431
        %v2434 = vadd.f32 %v2421, %v2432
        %2436 = vrot.lane.b32.xlu0 %v2429, 96
        %v2437 = vpop.permute.xlu0 %2436
        %v2439 = vadd.f32 %v2429, %v2437
        %v2440 = vmul.f32 %v2434, 0.25
        %v2441 = vmul.f32 %v2439, 0.25
        %v2442 = vmul.f32 %v2440, %v2440
        %v2443 = vsub.f32 %v2441, %v2442
        %v2444 = vmax.f32 %v2443, 0.0
        %v2445 = vld [vmem:[%s10] sm:$0x1]
        %v2446 = vadd.f32 %v2444, 1e-05
        %v2447 = vrsqrt.pop %v2446
        %v2448 = vmul.f32 %v2445, %v2447
        %v2449 = vld [vmem:[%s11] sm:$0x1]
        %v2450 = vmul.f32 %v2440, %v2448
        %v2451 = vsub.f32 %v2449, %v2450
        %v2453 = vlaneseq
        %v2454 = vshrl.u32 %v2453, 7
        %v2455 = vsub.s32 0, %v2454
        %v2456 = vrot.slane %v2448, %v2455
        %v2458 = vmul.f32 %v2410, %v2456
        %v2460 = vlaneseq
        %v2461 = vshrl.u32 %v2460, 7
        %v2462 = vsub.s32 0, %v2461
        %v2463 = vrot.slane %v2451, %v2462
        %v2465 = vadd.f32 %v2458, %v2463
        %vm2466 = vcmp.gt.f32.partialorder %v2465, 0.0
        %v2467 = vmul.f32 %v2465, 0.2
        %v2468 = vsel %vm2466, %v2465, %v2467
        %v2470 = vrot.slane %v2468, 6
        %2471 = vrot.lane.b32.xlu0 %v2470, 64
        %v2472 = vpop.permute.xlu0 %2471
        %vm2474 = vcmask 781826
        %2475 = vst.msk [vmem:[#allocation4] sm:$0xc] %vm2474, %v2472
        %2476 = vrot.lane.b32.xlu0 %v2456, 32
        %v2477 = vpop.permute.xlu0 %2476
        %v2479 = vmul.f32 %v2410, %v2477
        %2480 = vrot.lane.b32.xlu0 %v2463, 32
        %v2481 = vpop.permute.xlu0 %2480
        %v2483 = vadd.f32 %v2479, %v2481
        %vm2484 = vcmp.gt.f32.partialorder %v2483, 0.0
        %v2485 = vmul.f32 %v2483, 0.2
        %v2486 = vsel %vm2484, %v2483, %v2485
        %v2488 = vrot.slane %v2486, 6
        %2489 = vrot.lane.b32.xlu0 %v2488, 64
        %v2490 = vpop.permute.xlu0 %2489
        %vm2492 = vcmask 1044226
        %2493 = vst.msk [vmem:[#allocation4] sm:$0xc] %vm2492, %v2490
        %v2494 = vld [vmem:[#allocation4] sm:$0x3f]
        %v2495 = vld [vmem:[#allocation4 + $0x8] sm:$0x3f]
        %v2496 = vpack.c.bf16 %v2494, %v2494
        %v2497 = vpack.c.bf16 %v2495, %v2495
        %v2498 = vld [vmem:[%s12] sm:$0xff]
        %v2499 = vld [vmem:[%s12 + $0x8] sm:$0xff]
        %v2500 = vld [vmem:[%s12 + $0x10] sm:$0xff]
        %v2501 = vld [vmem:[%s12 + $0x18] sm:$0xff]
        %v2502 = vld [vmem:[%s12 + $0x20] sm:$0xff]
        %v2503 = vld [vmem:[%s12 + $0x28] sm:$0xff]
        %v2504 = vld [vmem:[%s12 + $0x30] sm:$0xff]
        %v2505 = vld [vmem:[%s12 + $0x38] sm:$0xff]
        %v2506 = vld [vmem:[%s12 + $0x40] sm:$0xff]
        %v2507 = vld [vmem:[%s12 + $0x48] sm:$0xff]
        %v2508 = vld [vmem:[%s12 + $0x50] sm:$0xff]
        %v2509 = vld [vmem:[%s12 + $0x58] sm:$0xff]
        %v2510 = vld [vmem:[%s12 + $0x60] sm:$0xff]
        %v2511 = vld [vmem:[%s12 + $0x68] sm:$0xff]
        %v2512 = vld [vmem:[%s12 + $0x70] sm:$0xff]
        %v2513 = vld [vmem:[%s12 + $0x78] sm:$0xff]
        %v2514 = vld [vmem:[%s12 + $0x80] sm:$0xff]
        %v2515 = vld [vmem:[%s12 + $0x88] sm:$0xff]
        %v2516 = vld [vmem:[%s12 + $0x90] sm:$0xff]
        %v2517 = vld [vmem:[%s12 + $0x98] sm:$0xff]
        %v2518 = vld [vmem:[%s12 + $0xa0] sm:$0xff]
        %v2519 = vld [vmem:[%s12 + $0xa8] sm:$0xff]
        %v2520 = vld [vmem:[%s12 + $0xb0] sm:$0xff]
        %v2521 = vld [vmem:[%s12 + $0xb8] sm:$0xff]
        %s2522 = scalar_lea.vmem %s12, 192
        %v2523 = vld [vmem:[%s2522] sm:$0xff]
        %v2524 = vld [vmem:[%s2522 + $0x8] sm:$0xff]
        %v2525 = vld [vmem:[%s2522 + $0x10] sm:$0xff]
        %v2526 = vld [vmem:[%s2522 + $0x18] sm:$0xff]
        %v2527 = vld [vmem:[%s2522 + $0x20] sm:$0xff]
        %v2528 = vld [vmem:[%s2522 + $0x28] sm:$0xff]
        %v2529 = vld [vmem:[%s2522 + $0x30] sm:$0xff]
        %v2530 = vld [vmem:[%s2522 + $0x38] sm:$0xff]
        %v2531 = vld [vmem:[%s2522 + $0x40] sm:$0xff]
        %v2532 = vld [vmem:[%s2522 + $0x48] sm:$0xff]
        %v2533 = vld [vmem:[%s2522 + $0x50] sm:$0xff]
        %v2534 = vld [vmem:[%s2522 + $0x58] sm:$0xff]
        %v2535 = vld [vmem:[%s2522 + $0x60] sm:$0xff]
        %v2536 = vld [vmem:[%s2522 + $0x68] sm:$0xff]
        %v2537 = vld [vmem:[%s2522 + $0x70] sm:$0xff]
        %v2538 = vld [vmem:[%s2522 + $0x78] sm:$0xff]
        %v2539 = vld [vmem:[%s2522 + $0x80] sm:$0xff]
        %v2540 = vld [vmem:[%s2522 + $0x88] sm:$0xff]
        %v2541 = vld [vmem:[%s2522 + $0x90] sm:$0xff]
        %v2542 = vld [vmem:[%s2522 + $0x98] sm:$0xff]
        %v2543 = vld [vmem:[%s2522 + $0xa0] sm:$0xff]
        %v2544 = vld [vmem:[%s2522 + $0xa8] sm:$0xff]
        %v2545 = vld [vmem:[%s2522 + $0xb0] sm:$0xff]
        %v2546 = vld [vmem:[%s2522 + $0xb8] sm:$0xff]
        %v2548 = vshrl.u32 %v2496, 16
        %v2550 = vshll.u32 %v2496, 16
        %v2552 = vrot.slane %v2550, 1
        %v2553 = vor.u32 %v2548, %v2552
        %v2555 = vshrl.u32 %v2497, 16
        %v2557 = vshll.u32 %v2497, 16
        %v2559 = vrot.slane %v2557, 1
        %v2560 = vor.u32 %v2555, %v2559
        %v2586 = vunpack.c.l.b16 %v2523
        %v2587 = vunpack.c.h.b16 %v2523
        %v2588 = vunpack.c.l.b16 %v2524
        %v2589 = vunpack.c.h.b16 %v2524
        %v2590 = vunpack.c.l.b16 %v2525
        %v2591 = vunpack.c.h.b16 %v2525
        %v2592 = vunpack.c.l.b16 %v2526
        %v2593 = vunpack.c.h.b16 %v2526
        %v2594 = vunpack.c.l.b16 %v2527
        %v2595 = vunpack.c.h.b16 %v2527
        %v2596 = vunpack.c.l.b16 %v2528
        %v2597 = vunpack.c.h.b16 %v2528
        %v2598 = vunpack.c.l.b16 %v2529
        %v2599 = vunpack.c.h.b16 %v2529
        %v2600 = vunpack.c.l.b16 %v2530
        %v2601 = vunpack.c.h.b16 %v2530
        %v2602 = vunpack.c.l.b16 %v2531
        %v2603 = vunpack.c.h.b16 %v2531
        %v2604 = vunpack.c.l.b16 %v2532
        %v2605 = vunpack.c.h.b16 %v2532
        %v2606 = vunpack.c.l.b16 %v2533
        %v2607 = vunpack.c.h.b16 %v2533
        %v2608 = vunpack.c.l.b16 %v2534
        %v2609 = vunpack.c.h.b16 %v2534
        %v2610 = vunpack.c.l.b16 %v2535
        %v2611 = vunpack.c.h.b16 %v2535
        %v2612 = vunpack.c.l.b16 %v2536
        %v2613 = vunpack.c.h.b16 %v2536
        %v2614 = vunpack.c.l.b16 %v2537
        %v2615 = vunpack.c.h.b16 %v2537
        %v2616 = vunpack.c.l.b16 %v2538
        %v2617 = vunpack.c.h.b16 %v2538
        %v2618 = vunpack.c.l.b16 %v2539
        %v2619 = vunpack.c.h.b16 %v2539
        %v2620 = vunpack.c.l.b16 %v2540
        %v2621 = vunpack.c.h.b16 %v2540
        %v2622 = vunpack.c.l.b16 %v2541
        %v2623 = vunpack.c.h.b16 %v2541
        %v2624 = vunpack.c.l.b16 %v2542
        %v2625 = vunpack.c.h.b16 %v2542
        %v2626 = vunpack.c.l.b16 %v2543
        %v2627 = vunpack.c.h.b16 %v2543
        %v2628 = vunpack.c.l.b16 %v2544
        %v2629 = vunpack.c.h.b16 %v2544
        %v2630 = vunpack.c.l.b16 %v2545
        %v2631 = vunpack.c.h.b16 %v2545
        %v2632 = vunpack.c.l.b16 %v2546
        %v2633 = vunpack.c.h.b16 %v2546
        %v2634 = vpack.c.b16 %v2588, %v2586
        %v2635 = vpack.c.b16 %v2589, %v2587
        %v2636 = vpack.c.b16 %v2592, %v2590
        %v2637 = vpack.c.b16 %v2593, %v2591
        %v2638 = vpack.c.b16 %v2596, %v2594
        %v2639 = vpack.c.b16 %v2597, %v2595
        %v2640 = vpack.c.b16 %v2600, %v2598
        %v2641 = vpack.c.b16 %v2601, %v2599
        %v2642 = vpack.c.b16 %v2604, %v2602
        %v2643 = vpack.c.b16 %v2605, %v2603
        %v2644 = vpack.c.b16 %v2608, %v2606
        %v2645 = vpack.c.b16 %v2609, %v2607
        %v2646 = vpack.c.b16 %v2612, %v2610
        %v2647 = vpack.c.b16 %v2613, %v2611
        %v2648 = vpack.c.b16 %v2616, %v2614
        %v2649 = vpack.c.b16 %v2617, %v2615
        %v2650 = vpack.c.b16 %v2620, %v2618
        %v2651 = vpack.c.b16 %v2621, %v2619
        %v2652 = vpack.c.b16 %v2624, %v2622
        %v2653 = vpack.c.b16 %v2625, %v2623
        %v2654 = vpack.c.b16 %v2628, %v2626
        %v2655 = vpack.c.b16 %v2629, %v2627
        %v2656 = vpack.c.b16 %v2632, %v2630
        %v2657 = vpack.c.b16 %v2633, %v2631
        %vm2682 = vcmask 523264
        %v2684 = vsel %vm2682, %v2560, 0
        %2686 = vmatprep.subr.bf16.mxu0 %v2635
        %2687 = vmatpush1.bf16.msra.mxu0 %v2634
        %2688 = vmatprep.subr.bf16.mxu0 %v2637
        %2689 = vmatpush1.bf16.msra.mxu0 %v2636
        %2690 = vmatprep.subr.bf16.mxu0 %v2639
        %2691 = vmatpush1.bf16.msra.mxu0 %v2638
        %2692 = vmatprep.subr.bf16.mxu0 %v2641
        %2693 = vmatpush1.bf16.msra.mxu0 %v2640
        %2694 = vmatprep.subr.bf16.mxu0 %v2643
        %2695 = vmatpush1.bf16.msra.mxu0 %v2642
        %2696 = vmatprep.subr.bf16.mxu0 %v2645
        %2697 = vmatpush1.bf16.msra.mxu0 %v2644
        %2698 = vmatprep.subr.bf16.mxu0 %v2647
        %2699 = vmatpush1.bf16.msra.mxu0 %v2646
        %2700 = vmatprep.subr.bf16.mxu0 %v2649
        %2701 = vmatpush1.bf16.msra.mxu0 %v2648
        %2702 = vmatprep.subr.bf16.mxu0 %v2651
        %2703 = vmatpush1.bf16.msra.mxu0 %v2650
        %2704 = vmatprep.subr.bf16.mxu0 %v2653
        %2705 = vmatpush1.bf16.msra.mxu0 %v2652
        %2706 = vmatprep.subr.bf16.mxu0 %v2655
        %2707 = vmatpush1.bf16.msra.mxu0 %v2654
        %2708 = vmatprep.subr.bf16.mxu0 %v2657
        %2709 = vmatpush1.bf16.msra.mxu0 %v2656
        %2710 = vmatprep.subr.bf16.mxu0 0
        %2711 = vmatpush1.bf16.msra.mxu0 0
        %2712 = vmatprep.subr.bf16.mxu0 0
        %2713 = vmatpush1.bf16.msra.mxu0 0
        %2714 = vmatprep.subr.bf16.mxu0 0
        %2715 = vmatpush1.bf16.msra.mxu0 0
        %2716 = vmatprep.subr.bf16.mxu0 0
        %2717 = vmatpush1.bf16.msra.mxu0 0
        %2718 = vmatprep.mubr.bf16.mxu0 %v2684
        %2719 = vmatmul.mubr.bf16.gmra.mrb[0].mxu0 %v2553
        %v2720 = vpop.f32.mrb[0].mxu0
        %v2721 = vadd.f32 0.0, %v2720
        %v2722 = vpop.f32.mrb[0].mxu0
        %v2723 = vadd.f32 0.0, %v2722
        %v2724 = vpop.f32.mrb[0].mxu0
        %v2725 = vpop.f32.mrb[0].mxu0
        %2726 = vdwg.mxu0
        %v2751 = vunpack.c.l.b16 %v2498
        %v2752 = vunpack.c.h.b16 %v2498
        %v2753 = vunpack.c.l.b16 %v2499
        %v2754 = vunpack.c.h.b16 %v2499
        %v2755 = vunpack.c.l.b16 %v2500
        %v2756 = vunpack.c.h.b16 %v2500
        %v2757 = vunpack.c.l.b16 %v2501
        %v2758 = vunpack.c.h.b16 %v2501
        %v2759 = vunpack.c.l.b16 %v2502
        %v2760 = vunpack.c.h.b16 %v2502
        %v2761 = vunpack.c.l.b16 %v2503
        %v2762 = vunpack.c.h.b16 %v2503
        %v2763 = vunpack.c.l.b16 %v2504
        %v2764 = vunpack.c.h.b16 %v2504
        %v2765 = vunpack.c.l.b16 %v2505
        %v2766 = vunpack.c.h.b16 %v2505
        %v2767 = vunpack.c.l.b16 %v2506
        %v2768 = vunpack.c.h.b16 %v2506
        %v2769 = vunpack.c.l.b16 %v2507
        %v2770 = vunpack.c.h.b16 %v2507
        %v2771 = vunpack.c.l.b16 %v2508
        %v2772 = vunpack.c.h.b16 %v2508
        %v2773 = vunpack.c.l.b16 %v2509
        %v2774 = vunpack.c.h.b16 %v2509
        %v2775 = vunpack.c.l.b16 %v2510
        %v2776 = vunpack.c.h.b16 %v2510
        %v2777 = vunpack.c.l.b16 %v2511
        %v2778 = vunpack.c.h.b16 %v2511
        %v2779 = vunpack.c.l.b16 %v2512
        %v2780 = vunpack.c.h.b16 %v2512
        %v2781 = vunpack.c.l.b16 %v2513
        %v2782 = vunpack.c.h.b16 %v2513
        %v2783 = vunpack.c.l.b16 %v2514
        %v2784 = vunpack.c.h.b16 %v2514
        %v2785 = vunpack.c.l.b16 %v2515
        %v2786 = vunpack.c.h.b16 %v2515
        %v2787 = vunpack.c.l.b16 %v2516
        %v2788 = vunpack.c.h.b16 %v2516
        %v2789 = vunpack.c.l.b16 %v2517
        %v2790 = vunpack.c.h.b16 %v2517
        %v2791 = vunpack.c.l.b16 %v2518
        %v2792 = vunpack.c.h.b16 %v2518
        %v2793 = vunpack.c.l.b16 %v2519
        %v2794 = vunpack.c.h.b16 %v2519
        %v2795 = vunpack.c.l.b16 %v2520
        %v2796 = vunpack.c.h.b16 %v2520
        %v2797 = vunpack.c.l.b16 %v2521
        %v2798 = vunpack.c.h.b16 %v2521
        %v2799 = vpack.c.b16 %v2753, %v2751
        %v2800 = vpack.c.b16 %v2754, %v2752
        %v2801 = vpack.c.b16 %v2757, %v2755
        %v2802 = vpack.c.b16 %v2758, %v2756
        %v2803 = vpack.c.b16 %v2761, %v2759
        %v2804 = vpack.c.b16 %v2762, %v2760
        %v2805 = vpack.c.b16 %v2765, %v2763
        %v2806 = vpack.c.b16 %v2766, %v2764
        %v2807 = vpack.c.b16 %v2769, %v2767
        %v2808 = vpack.c.b16 %v2770, %v2768
        %v2809 = vpack.c.b16 %v2773, %v2771
        %v2810 = vpack.c.b16 %v2774, %v2772
        %v2811 = vpack.c.b16 %v2777, %v2775
        %v2812 = vpack.c.b16 %v2778, %v2776
        %v2813 = vpack.c.b16 %v2781, %v2779
        %v2814 = vpack.c.b16 %v2782, %v2780
        %v2815 = vpack.c.b16 %v2785, %v2783
        %v2816 = vpack.c.b16 %v2786, %v2784
        %v2817 = vpack.c.b16 %v2789, %v2787
        %v2818 = vpack.c.b16 %v2790, %v2788
        %v2819 = vpack.c.b16 %v2793, %v2791
        %v2820 = vpack.c.b16 %v2794, %v2792
        %v2821 = vpack.c.b16 %v2797, %v2795
        %v2822 = vpack.c.b16 %v2798, %v2796
        %v2847 = vsel %vm2682, %v2497, 0
        %2849 = vmatprep.subr.bf16.mxu0 %v2800
        %2850 = vmatpush1.bf16.msra.mxu0 %v2799
        %2851 = vmatprep.subr.bf16.mxu0 %v2802
        %2852 = vmatpush1.bf16.msra.mxu0 %v2801
        %2853 = vmatprep.subr.bf16.mxu0 %v2804
        %2854 = vmatpush1.bf16.msra.mxu0 %v2803
        %2855 = vmatprep.subr.bf16.mxu0 %v2806
        %2856 = vmatpush1.bf16.msra.mxu0 %v2805
        %2857 = vmatprep.subr.bf16.mxu0 %v2808
        %2858 = vmatpush1.bf16.msra.mxu0 %v2807
        %2859 = vmatprep.subr.bf16.mxu0 %v2810
        %2860 = vmatpush1.bf16.msra.mxu0 %v2809
        %2861 = vmatprep.subr.bf16.mxu0 %v2812
        %2862 = vmatpush1.bf16.msra.mxu0 %v2811
        %2863 = vmatprep.subr.bf16.mxu0 %v2814
        %2864 = vmatpush1.bf16.msra.mxu0 %v2813
        %2865 = vmatprep.subr.bf16.mxu0 %v2816
        %2866 = vmatpush1.bf16.msra.mxu0 %v2815
        %2867 = vmatprep.subr.bf16.mxu0 %v2818
        %2868 = vmatpush1.bf16.msra.mxu0 %v2817
        %2869 = vmatprep.subr.bf16.mxu0 %v2820
        %2870 = vmatpush1.bf16.msra.mxu0 %v2819
        %2871 = vmatprep.subr.bf16.mxu0 %v2822
        %2872 = vmatpush1.bf16.msra.mxu0 %v2821
        %2873 = vmatprep.subr.bf16.mxu0 0
        %2874 = vmatpush1.bf16.msra.mxu0 0
        %2875 = vmatprep.subr.bf16.mxu0 0
        %2876 = vmatpush1.bf16.msra.mxu0 0
        %2877 = vmatprep.subr.bf16.mxu0 0
        %2878 = vmatpush1.bf16.msra.mxu0 0
        %2879 = vmatprep.subr.bf16.mxu0 0
        %2880 = vmatpush1.bf16.msra.mxu0 0
        %2881 = vmatprep.mubr.bf16.mxu0 %v2847
        %2882 = vmatmul.mubr.bf16.gmra.mrb[0].mxu0 %v2496
        %v2883 = vpop.f32.mrb[0].mxu0
        %v2884 = vadd.f32 %v2721, %v2883
        %v2885 = vpop.f32.mrb[0].mxu0
        %v2886 = vadd.f32 %v2723, %v2885
        %v2887 = vpop.f32.mrb[0].mxu0
        %v2888 = vpop.f32.mrb[0].mxu0
        %2889 = vdwg.mxu0
        %s2890 = scalar_lea.vmem %s12, 384
        %v2891 = vld [vmem:[%s2890] sm:$0xff]
        %v2892 = vld [vmem:[%s2890 + $0x8] sm:$0xff]
        %v2893 = vld [vmem:[%s2890 + $0x10] sm:$0xff]
        %v2894 = vld [vmem:[%s2890 + $0x18] sm:$0xff]
        %v2895 = vld [vmem:[%s2890 + $0x20] sm:$0xff]
        %v2896 = vld [vmem:[%s2890 + $0x28] sm:$0xff]
        %v2897 = vld [vmem:[%s2890 + $0x30] sm:$0xff]
        %v2898 = vld [vmem:[%s2890 + $0x38] sm:$0xff]
        %v2899 = vld [vmem:[%s2890 + $0x40] sm:$0xff]
        %v2900 = vld [vmem:[%s2890 + $0x48] sm:$0xff]
        %v2901 = vld [vmem:[%s2890 + $0x50] sm:$0xff]
        %v2902 = vld [vmem:[%s2890 + $0x58] sm:$0xff]
        %v2903 = vld [vmem:[%s2890 + $0x60] sm:$0xff]
        %v2904 = vld [vmem:[%s2890 + $0x68] sm:$0xff]
        %v2905 = vld [vmem:[%s2890 + $0x70] sm:$0xff]
        %v2906 = vld [vmem:[%s2890 + $0x78] sm:$0xff]
        %v2907 = vld [vmem:[%s2890 + $0x80] sm:$0xff]
        %v2908 = vld [vmem:[%s2890 + $0x88] sm:$0xff]
        %v2909 = vld [vmem:[%s2890 + $0x90] sm:$0xff]
        %v2910 = vld [vmem:[%s2890 + $0x98] sm:$0xff]
        %v2911 = vld [vmem:[%s2890 + $0xa0] sm:$0xff]
        %v2912 = vld [vmem:[%s2890 + $0xa8] sm:$0xff]
        %v2913 = vld [vmem:[%s2890 + $0xb0] sm:$0xff]
        %v2914 = vld [vmem:[%s2890 + $0xb8] sm:$0xff]
        %v2917 = vrot.slane %v2496, 1
        %v2918 = vrot.slane %v2497, 1
        %v2944 = vunpack.c.l.b16 %v2891
        %v2945 = vunpack.c.h.b16 %v2891
        %v2946 = vunpack.c.l.b16 %v2892
        %v2947 = vunpack.c.h.b16 %v2892
        %v2948 = vunpack.c.l.b16 %v2893
        %v2949 = vunpack.c.h.b16 %v2893
        %v2950 = vunpack.c.l.b16 %v2894
        %v2951 = vunpack.c.h.b16 %v2894
        %v2952 = vunpack.c.l.b16 %v2895
        %v2953 = vunpack.c.h.b16 %v2895
        %v2954 = vunpack.c.l.b16 %v2896
        %v2955 = vunpack.c.h.b16 %v2896
        %v2956 = vunpack.c.l.b16 %v2897
        %v2957 = vunpack.c.h.b16 %v2897
        %v2958 = vunpack.c.l.b16 %v2898
        %v2959 = vunpack.c.h.b16 %v2898
        %v2960 = vunpack.c.l.b16 %v2899
        %v2961 = vunpack.c.h.b16 %v2899
        %v2962 = vunpack.c.l.b16 %v2900
        %v2963 = vunpack.c.h.b16 %v2900
        %v2964 = vunpack.c.l.b16 %v2901
        %v2965 = vunpack.c.h.b16 %v2901
        %v2966 = vunpack.c.l.b16 %v2902
        %v2967 = vunpack.c.h.b16 %v2902
        %v2968 = vunpack.c.l.b16 %v2903
        %v2969 = vunpack.c.h.b16 %v2903
        %v2970 = vunpack.c.l.b16 %v2904
        %v2971 = vunpack.c.h.b16 %v2904
        %v2972 = vunpack.c.l.b16 %v2905
        %v2973 = vunpack.c.h.b16 %v2905
        %v2974 = vunpack.c.l.b16 %v2906
        %v2975 = vunpack.c.h.b16 %v2906
        %v2976 = vunpack.c.l.b16 %v2907
        %v2977 = vunpack.c.h.b16 %v2907
        %v2978 = vunpack.c.l.b16 %v2908
        %v2979 = vunpack.c.h.b16 %v2908
        %v2980 = vunpack.c.l.b16 %v2909
        %v2981 = vunpack.c.h.b16 %v2909
        %v2982 = vunpack.c.l.b16 %v2910
        %v2983 = vunpack.c.h.b16 %v2910
        %v2984 = vunpack.c.l.b16 %v2911
        %v2985 = vunpack.c.h.b16 %v2911
        %v2986 = vunpack.c.l.b16 %v2912
        %v2987 = vunpack.c.h.b16 %v2912
        %v2988 = vunpack.c.l.b16 %v2913
        %v2989 = vunpack.c.h.b16 %v2913
        %v2990 = vunpack.c.l.b16 %v2914
        %v2991 = vunpack.c.h.b16 %v2914
        %v2992 = vpack.c.b16 %v2946, %v2944
        %v2993 = vpack.c.b16 %v2947, %v2945
        %v2994 = vpack.c.b16 %v2950, %v2948
        %v2995 = vpack.c.b16 %v2951, %v2949
        %v2996 = vpack.c.b16 %v2954, %v2952
        %v2997 = vpack.c.b16 %v2955, %v2953
        %v2998 = vpack.c.b16 %v2958, %v2956
        %v2999 = vpack.c.b16 %v2959, %v2957
        %v3000 = vpack.c.b16 %v2962, %v2960
        %v3001 = vpack.c.b16 %v2963, %v2961
        %v3002 = vpack.c.b16 %v2966, %v2964
        %v3003 = vpack.c.b16 %v2967, %v2965
        %v3004 = vpack.c.b16 %v2970, %v2968
        %v3005 = vpack.c.b16 %v2971, %v2969
        %v3006 = vpack.c.b16 %v2974, %v2972
        %v3007 = vpack.c.b16 %v2975, %v2973
        %v3008 = vpack.c.b16 %v2978, %v2976
        %v3009 = vpack.c.b16 %v2979, %v2977
        %v3010 = vpack.c.b16 %v2982, %v2980
        %v3011 = vpack.c.b16 %v2983, %v2981
        %v3012 = vpack.c.b16 %v2986, %v2984
        %v3013 = vpack.c.b16 %v2987, %v2985
        %v3014 = vpack.c.b16 %v2990, %v2988
        %v3015 = vpack.c.b16 %v2991, %v2989
        %v3041 = vsel %vm2682, %v2918, 0
        %3043 = vmatprep.subr.bf16.mxu0 %v2993
        %3044 = vmatpush1.bf16.msra.mxu0 %v2992
        %3045 = vmatprep.subr.bf16.mxu0 %v2995
        %3046 = vmatpush1.bf16.msra.mxu0 %v2994
        %3047 = vmatprep.subr.bf16.mxu0 %v2997
        %3048 = vmatpush1.bf16.msra.mxu0 %v2996
        %3049 = vmatprep.subr.bf16.mxu0 %v2999
        %3050 = vmatpush1.bf16.msra.mxu0 %v2998
        %3051 = vmatprep.subr.bf16.mxu0 %v3001
        %3052 = vmatpush1.bf16.msra.mxu0 %v3000
        %3053 = vmatprep.subr.bf16.mxu0 %v3003
        %3054 = vmatpush1.bf16.msra.mxu0 %v3002
        %3055 = vmatprep.subr.bf16.mxu0 %v3005
        %3056 = vmatpush1.bf16.msra.mxu0 %v3004
        %3057 = vmatprep.subr.bf16.mxu0 %v3007
        %3058 = vmatpush1.bf16.msra.mxu0 %v3006
        %3059 = vmatprep.subr.bf16.mxu0 %v3009
        %3060 = vmatpush1.bf16.msra.mxu0 %v3008
        %3061 = vmatprep.subr.bf16.mxu0 %v3011
        %3062 = vmatpush1.bf16.msra.mxu0 %v3010
        %3063 = vmatprep.subr.bf16.mxu0 %v3013
        %3064 = vmatpush1.bf16.msra.mxu0 %v3012
        %3065 = vmatprep.subr.bf16.mxu0 %v3015
        %3066 = vmatpush1.bf16.msra.mxu0 %v3014
        %3067 = vmatprep.subr.bf16.mxu0 0
        %3068 = vmatpush1.bf16.msra.mxu0 0
        %3069 = vmatprep.subr.bf16.mxu0 0
        %3070 = vmatpush1.bf16.msra.mxu0 0
        %3071 = vmatprep.subr.bf16.mxu0 0
        %3072 = vmatpush1.bf16.msra.mxu0 0
        %3073 = vmatprep.subr.bf16.mxu0 0
        %3074 = vmatpush1.bf16.msra.mxu0 0
        %3075 = vmatprep.mubr.bf16.mxu0 %v3041
        %3076 = vmatmul.mubr.bf16.gmra.mrb[0].mxu0 %v2917
        %v3077 = vpop.f32.mrb[0].mxu0
        %v3078 = vadd.f32 0.0, %v3077
        %v3079 = vpop.f32.mrb[0].mxu0
        %v3080 = vadd.f32 0.0, %v3079
        %v3081 = vpop.f32.mrb[0].mxu0
        %v3082 = vpop.f32.mrb[0].mxu0
        %3083 = vdwg.mxu0
        %v3084 = vadd.f32 %v2884, %v3078
        %v3085 = vadd.f32 %v2886, %v3080
        %s3086 = scalar_lea.vmem %s12, 576
        %v3087 = vld [vmem:[%s3086] sm:$0xff]
        %v3088 = vld [vmem:[%s3086 + $0x8] sm:$0xff]
        %v3089 = vld [vmem:[%s3086 + $0x10] sm:$0xff]
        %v3090 = vld [vmem:[%s3086 + $0x18] sm:$0xff]
        %v3091 = vld [vmem:[%s3086 + $0x20] sm:$0xff]
        %v3092 = vld [vmem:[%s3086 + $0x28] sm:$0xff]
        %v3093 = vld [vmem:[%s3086 + $0x30] sm:$0xff]
        %v3094 = vld [vmem:[%s3086 + $0x38] sm:$0xff]
        %v3095 = vld [vmem:[%s3086 + $0x40] sm:$0xff]
        %v3096 = vld [vmem:[%s3086 + $0x48] sm:$0xff]
        %v3097 = vld [vmem:[%s3086 + $0x50] sm:$0xff]
        %v3098 = vld [vmem:[%s3086 + $0x58] sm:$0xff]
        %v3099 = vld [vmem:[%s3086 + $0x60] sm:$0xff]
        %v3100 = vld [vmem:[%s3086 + $0x68] sm:$0xff]
        %v3101 = vld [vmem:[%s3086 + $0x70] sm:$0xff]
        %v3102 = vld [vmem:[%s3086 + $0x78] sm:$0xff]
        %v3103 = vld [vmem:[%s3086 + $0x80] sm:$0xff]
        %v3104 = vld [vmem:[%s3086 + $0x88] sm:$0xff]
        %v3105 = vld [vmem:[%s3086 + $0x90] sm:$0xff]
        %v3106 = vld [vmem:[%s3086 + $0x98] sm:$0xff]
        %v3107 = vld [vmem:[%s3086 + $0xa0] sm:$0xff]
        %v3108 = vld [vmem:[%s3086 + $0xa8] sm:$0xff]
        %v3109 = vld [vmem:[%s3086 + $0xb0] sm:$0xff]
        %v3110 = vld [vmem:[%s3086 + $0xb8] sm:$0xff]
        %v3111 = vrot.slane %v2548, 1
        %v3112 = vrot.slane %v2550, 2
        %v3113 = vor.u32 %v3111, %v3112
        %v3114 = vrot.slane %v2555, 1
        %v3115 = vrot.slane %v2557, 2
        %v3116 = vor.u32 %v3114, %v3115
        %v3142 = vunpack.c.l.b16 %v3087
        %v3143 = vunpack.c.h.b16 %v3087
        %v3144 = vunpack.c.l.b16 %v3088
        %v3145 = vunpack.c.h.b16 %v3088
        %v3146 = vunpack.c.l.b16 %v3089
        %v3147 = vunpack.c.h.b16 %v3089
        %v3148 = vunpack.c.l.b16 %v3090
        %v3149 = vunpack.c.h.b16 %v3090
        %v3150 = vunpack.c.l.b16 %v3091
        %v3151 = vunpack.c.h.b16 %v3091
        %v3152 = vunpack.c.l.b16 %v3092
        %v3153 = vunpack.c.h.b16 %v3092
        %v3154 = vunpack.c.l.b16 %v3093
        %v3155 = vunpack.c.h.b16 %v3093
        %v3156 = vunpack.c.l.b16 %v3094
        %v3157 = vunpack.c.h.b16 %v3094
        %v3158 = vunpack.c.l.b16 %v3095
        %v3159 = vunpack.c.h.b16 %v3095
        %v3160 = vunpack.c.l.b16 %v3096
        %v3161 = vunpack.c.h.b16 %v3096
        %v3162 = vunpack.c.l.b16 %v3097
        %v3163 = vunpack.c.h.b16 %v3097
        %v3164 = vunpack.c.l.b16 %v3098
        %v3165 = vunpack.c.h.b16 %v3098
        %v3166 = vunpack.c.l.b16 %v3099
        %v3167 = vunpack.c.h.b16 %v3099
        %v3168 = vunpack.c.l.b16 %v3100
        %v3169 = vunpack.c.h.b16 %v3100
        %v3170 = vunpack.c.l.b16 %v3101
        %v3171 = vunpack.c.h.b16 %v3101
        %v3172 = vunpack.c.l.b16 %v3102
        %v3173 = vunpack.c.h.b16 %v3102
        %v3174 = vunpack.c.l.b16 %v3103
        %v3175 = vunpack.c.h.b16 %v3103
        %v3176 = vunpack.c.l.b16 %v3104
        %v3177 = vunpack.c.h.b16 %v3104
        %v3178 = vunpack.c.l.b16 %v3105
        %v3179 = vunpack.c.h.b16 %v3105
        %v3180 = vunpack.c.l.b16 %v3106
        %v3181 = vunpack.c.h.b16 %v3106
        %v3182 = vunpack.c.l.b16 %v3107
        %v3183 = vunpack.c.h.b16 %v3107
        %v3184 = vunpack.c.l.b16 %v3108
        %v3185 = vunpack.c.h.b16 %v3108
        %v3186 = vunpack.c.l.b16 %v3109
        %v3187 = vunpack.c.h.b16 %v3109
        %v3188 = vunpack.c.l.b16 %v3110
        %v3189 = vunpack.c.h.b16 %v3110
        %v3190 = vpack.c.b16 %v3144, %v3142
        %v3191 = vpack.c.b16 %v3145, %v3143
        %v3192 = vpack.c.b16 %v3148, %v3146
        %v3193 = vpack.c.b16 %v3149, %v3147
        %v3194 = vpack.c.b16 %v3152, %v3150
        %v3195 = vpack.c.b16 %v3153, %v3151
        %v3196 = vpack.c.b16 %v3156, %v3154
        %v3197 = vpack.c.b16 %v3157, %v3155
        %v3198 = vpack.c.b16 %v3160, %v3158
        %v3199 = vpack.c.b16 %v3161, %v3159
        %v3200 = vpack.c.b16 %v3164, %v3162
        %v3201 = vpack.c.b16 %v3165, %v3163
        %v3202 = vpack.c.b16 %v3168, %v3166
        %v3203 = vpack.c.b16 %v3169, %v3167
        %v3204 = vpack.c.b16 %v3172, %v3170
        %v3205 = vpack.c.b16 %v3173, %v3171
        %v3206 = vpack.c.b16 %v3176, %v3174
        %v3207 = vpack.c.b16 %v3177, %v3175
        %v3208 = vpack.c.b16 %v3180, %v3178
        %v3209 = vpack.c.b16 %v3181, %v3179
        %v3210 = vpack.c.b16 %v3184, %v3182
        %v3211 = vpack.c.b16 %v3185, %v3183
        %v3212 = vpack.c.b16 %v3188, %v3186
        %v3213 = vpack.c.b16 %v3189, %v3187
        %v3239 = vsel %vm2682, %v3116, 0
        %3241 = vmatprep.subr.bf16.mxu0 %v3191
        %3242 = vmatpush1.bf16.msra.mxu0 %v3190
        %3243 = vmatprep.subr.bf16.mxu0 %v3193
        %3244 = vmatpush1.bf16.msra.mxu0 %v3192
        %3245 = vmatprep.subr.bf16.mxu0 %v3195
        %3246 = vmatpush1.bf16.msra.mxu0 %v3194
        %3247 = vmatprep.subr.bf16.mxu0 %v3197
        %3248 = vmatpush1.bf16.msra.mxu0 %v3196
        %3249 = vmatprep.subr.bf16.mxu0 %v3199
        %3250 = vmatpush1.bf16.msra.mxu0 %v3198
        %3251 = vmatprep.subr.bf16.mxu0 %v3201
        %3252 = vmatpush1.bf16.msra.mxu0 %v3200
        %3253 = vmatprep.subr.bf16.mxu0 %v3203
        %3254 = vmatpush1.bf16.msra.mxu0 %v3202
        %3255 = vmatprep.subr.bf16.mxu0 %v3205
        %3256 = vmatpush1.bf16.msra.mxu0 %v3204
        %3257 = vmatprep.subr.bf16.mxu0 %v3207
        %3258 = vmatpush1.bf16.msra.mxu0 %v3206
        %3259 = vmatprep.subr.bf16.mxu0 %v3209
        %3260 = vmatpush1.bf16.msra.mxu0 %v3208
        %3261 = vmatprep.subr.bf16.mxu0 %v3211
        %3262 = vmatpush1.bf16.msra.mxu0 %v3210
        %3263 = vmatprep.subr.bf16.mxu0 %v3213
        %3264 = vmatpush1.bf16.msra.mxu0 %v3212
        %3265 = vmatprep.subr.bf16.mxu0 0
        %3266 = vmatpush1.bf16.msra.mxu0 0
        %3267 = vmatprep.subr.bf16.mxu0 0
        %3268 = vmatpush1.bf16.msra.mxu0 0
        %3269 = vmatprep.subr.bf16.mxu0 0
        %3270 = vmatpush1.bf16.msra.mxu0 0
        %3271 = vmatprep.subr.bf16.mxu0 0
        %3272 = vmatpush1.bf16.msra.mxu0 0
        %3273 = vmatprep.mubr.bf16.mxu0 %v3239
        %3274 = vmatmul.mubr.bf16.gmra.mrb[0].mxu0 %v3113
        %v3275 = vpop.f32.mrb[0].mxu0
        %v3276 = vadd.f32 0.0, %v3275
        %v3277 = vpop.f32.mrb[0].mxu0
        %v3278 = vadd.f32 0.0, %v3277
        %v3279 = vpop.f32.mrb[0].mxu0
        %v3280 = vpop.f32.mrb[0].mxu0
        %3281 = vdwg.mxu0
        %v3282 = vadd.f32 %v3084, %v3276
        %v3283 = vadd.f32 %v3085, %v3278
        %3284 = vst [vmem:[#allocation5] sm:$0x1f] 0.0
        %3285 = vst [vmem:[#allocation5 + $0x8] sm:$0x1f] 0.0
        %vm3286 = vcmask 520192
        %3287 = vst.msk [vmem:[#allocation5 + $0x10] sm:$0x1f] %vm3286, 0.0
        %v3288 = vsel %vm1826, %v3282, 0.0
        %v3289 = vrot.slane %v3288, 4
        %v3290 = vadd.f32 %v3288, %v3289
        %v3291 = vrot.slane %v3290, 2
        %v3292 = vadd.f32 %v3290, %v3291
        %v3293 = vrot.slane %v3292, 1
        %v3294 = vadd.f32 %v3292, %v3293
        %vm3295 = vcmask 518144
        %v3296 = vsel %vm3295, %v3283, 0.0
        %v3297 = vrot.slane %v3296, 4
        %v3298 = vadd.f32 %v3296, %v3297
        %v3299 = vrot.slane %v3298, 2
        %v3300 = vadd.f32 %v3298, %v3299
        %v3301 = vrot.slane %v3300, 1
        %v3302 = vadd.f32 %v3300, %v3301
        %v3303 = vmul.f32 %v3282, %v3282
        %v3304 = vmul.f32 %v3283, %v3283
        %v3305 = vsel %vm1826, %v3303, 0.0
        %v3306 = vrot.slane %v3305, 4
        %v3307 = vadd.f32 %v3305, %v3306
        %v3308 = vrot.slane %v3307, 2
        %v3309 = vadd.f32 %v3307, %v3308
        %v3310 = vrot.slane %v3309, 1
        %v3311 = vadd.f32 %v3309, %v3310
        %v3312 = vsel %vm3295, %v3304, 0.0
        %v3313 = vrot.slane %v3312, 4
        %v3314 = vadd.f32 %v3312, %v3313
        %v3315 = vrot.slane %v3314, 2
        %v3316 = vadd.f32 %v3314, %v3315
        %v3317 = vrot.slane %v3316, 1
        %v3318 = vadd.f32 %v3316, %v3317
        %3320 = vrot.lane.b32.xlu0 %v3294, 64
        %v3321 = vpop.permute.xlu0 %3320
        %v3323 = vadd.f32 %v3294, %v3321
        %3325 = vrot.lane.b32.xlu0 %v3311, 64
        %v3326 = vpop.permute.xlu0 %3325
        %v3328 = vadd.f32 %v3311, %v3326
        %v3329 = vadd.f32 %v3323, %v3302
        %v3330 = vadd.f32 %v3328, %v3318
        %v3331 = vmul.f32 %v3329, 0.11111111
        %v3332 = vmul.f32 %v3330, 0.11111111
        %v3333 = vmul.f32 %v3331, %v3331
        %v3334 = vsub.f32 %v3332, %v3333
        %v3335 = vmax.f32 %v3334, 0.0
        %v3336 = vld [vmem:[%s13] sm:$0x1]
        %v3337 = vadd.f32 %v3335, 1e-05
        %v3338 = vrsqrt.pop %v3337
        %v3339 = vmul.f32 %v3336, %v3338
        %v3340 = vld [vmem:[%s14] sm:$0x1]
        %v3341 = vmul.f32 %v3331, %v3339
        %v3342 = vsub.f32 %v3340, %v3341
        %v3344 = vlaneseq
        %v3345 = vshrl.u32 %v3344, 7
        %v3346 = vsub.s32 0, %v3345
        %v3347 = vrot.slane %v3339, %v3346
        %v3349 = vmul.f32 %v3282, %v3347
        %v3351 = vlaneseq
        %v3352 = vshrl.u32 %v3351, 7
        %v3353 = vsub.s32 0, %v3352
        %v3354 = vrot.slane %v3342, %v3353
        %v3356 = vadd.f32 %v3349, %v3354
        %vm3357 = vcmp.gt.f32.partialorder %v3356, 0.0
        %v3358 = vmul.f32 %v3356, 0.2
        %v3359 = vsel %vm3357, %v3356, %v3358
        %v3361 = vrot.slane %v3359, 7
        %3362 = vrot.lane.b32.xlu0 %v3361, 64
        %v3363 = vpop.permute.xlu0 %3362
        %vm3365 = vcmask 1043969
        %3366 = vst.msk [vmem:[#allocation5] sm:$0xe] %vm3365, %v3363
        %3367 = vrot.lane.b32.xlu0 %v3347, 64
        %v3368 = vpop.permute.xlu0 %3367
        %v3370 = vmul.f32 %v3282, %v3368
        %3371 = vrot.lane.b32.xlu0 %v3354, 64
        %v3372 = vpop.permute.xlu0 %3371
        %v3374 = vadd.f32 %v3370, %v3372
        %vm3375 = vcmp.gt.f32.partialorder %v3374, 0.0
        %v3376 = vmul.f32 %v3374, 0.2
        %v3377 = vsel %vm3375, %v3374, %v3376
        %v3379 = vrot.slane %v3377, 7
        %3380 = vrot.lane.b32.xlu0 %v3379, 64
        %v3381 = vpop.permute.xlu0 %3380
        %vm3383 = vcmask 519169
        %3384 = vst.msk [vmem:[#allocation5 + $0x8] sm:$0xe] %vm3383, %v3381
        %v3385 = vmul.f32 %v3283, %v3347
        %v3386 = vadd.f32 %v3385, %v3354
        %vm3387 = vcmp.gt.f32.partialorder %v3386, 0.0
        %v3388 = vmul.f32 %v3386, 0.2
        %v3389 = vsel %vm3387, %v3386, %v3388
        %v3391 = vrot.slane %v3389, 7
        %3392 = vrot.lane.b32.xlu0 %v3391, 64
        %v3393 = vpop.permute.xlu0 %3392
        %3395 = vst.msk [vmem:[#allocation5 + $0x8] sm:$0xe] %vm3365, %v3393
        %v3396 = vld [vmem:[#allocation5] sm:$0x1f]
        %v3397 = vld [vmem:[#allocation5 + $0x8] sm:$0x1f]
        %v3398 = vld [vmem:[#allocation5 + $0x10] sm:$0x1f]
        %v3399 = vpack.c.bf16 %v3396, %v3396
        %v3400 = vpack.c.bf16 %v3397, %v3397
        %v3401 = vpack.c.bf16 %v3398, %v3398
        %v3402 = vld [vmem:[%s15] sm:$0xf]
        %v3403 = vld [vmem:[%s15 + $0x4] sm:$0xf]
        %v3404 = vld [vmem:[%s15 + $0x8] sm:$0xf]
        %v3405 = vld [vmem:[%s15 + $0xc] sm:$0xf]
        %v3406 = vld [vmem:[%s15 + $0x10] sm:$0xf]
        %v3407 = vld [vmem:[%s15 + $0x14] sm:$0xf]
        %v3408 = vld [vmem:[%s15 + $0x18] sm:$0xf]
        %v3409 = vld [vmem:[%s15 + $0x1c] sm:$0xf]
        %v3410 = vld [vmem:[%s15 + $0x20] sm:$0xf]
        %v3411 = vld [vmem:[%s15 + $0x24] sm:$0xf]
        %v3412 = vld [vmem:[%s15 + $0x28] sm:$0xf]
        %v3413 = vld [vmem:[%s15 + $0x2c] sm:$0xf]
        %v3414 = vld [vmem:[%s15 + $0x30] sm:$0xf]
        %v3415 = vld [vmem:[%s15 + $0x34] sm:$0xf]
        %v3416 = vld [vmem:[%s15 + $0x38] sm:$0xf]
        %v3417 = vld [vmem:[%s15 + $0x3c] sm:$0xf]
        %v3418 = vld [vmem:[%s15 + $0x40] sm:$0xf]
        %v3419 = vld [vmem:[%s15 + $0x44] sm:$0xf]
        %v3420 = vld [vmem:[%s15 + $0x48] sm:$0xf]
        %v3421 = vld [vmem:[%s15 + $0x4c] sm:$0xf]
        %v3422 = vld [vmem:[%s15 + $0x50] sm:$0xf]
        %v3423 = vld [vmem:[%s15 + $0x54] sm:$0xf]
        %v3424 = vld [vmem:[%s15 + $0x58] sm:$0xf]
        %v3425 = vld [vmem:[%s15 + $0x5c] sm:$0xf]
        %v3426 = vld [vmem:[%s15 + $0x60] sm:$0xf]
        %v3427 = vld [vmem:[%s15 + $0x64] sm:$0xf]
        %v3428 = vld [vmem:[%s15 + $0x68] sm:$0xf]
        %v3429 = vld [vmem:[%s15 + $0x6c] sm:$0xf]
        %v3430 = vld [vmem:[%s15 + $0x70] sm:$0xf]
        %v3431 = vld [vmem:[%s15 + $0x74] sm:$0xf]
        %v3432 = vld [vmem:[%s15 + $0x78] sm:$0xf]
        %v3433 = vld [vmem:[%s15 + $0x7c] sm:$0xf]
        %v3434 = vld [vmem:[%s15 + $0x80] sm:$0xf]
        %v3435 = vld [vmem:[%s15 + $0x84] sm:$0xf]
        %v3436 = vld [vmem:[%s15 + $0x88] sm:$0xf]
        %v3437 = vld [vmem:[%s15 + $0x8c] sm:$0xf]
        %v3438 = vld [vmem:[%s15 + $0x90] sm:$0xf]
        %v3439 = vld [vmem:[%s15 + $0x94] sm:$0xf]
        %v3440 = vld [vmem:[%s15 + $0x98] sm:$0xf]
        %v3441 = vld [vmem:[%s15 + $0x9c] sm:$0xf]
        %s3442 = scalar_lea.vmem %s15, 160
        %v3443 = vld [vmem:[%s3442] sm:$0xf]
        %v3444 = vld [vmem:[%s3442 + $0x4] sm:$0xf]
        %v3445 = vld [vmem:[%s3442 + $0x8] sm:$0xf]
        %v3446 = vld [vmem:[%s3442 + $0xc] sm:$0xf]
        %v3447 = vld [vmem:[%s3442 + $0x10] sm:$0xf]
        %v3448 = vld [vmem:[%s3442 + $0x14] sm:$0xf]
        %v3449 = vld [vmem:[%s3442 + $0x18] sm:$0xf]
        %v3450 = vld [vmem:[%s3442 + $0x1c] sm:$0xf]
        %v3451 = vld [vmem:[%s3442 + $0x20] sm:$0xf]
        %v3452 = vld [vmem:[%s3442 + $0x24] sm:$0xf]
        %v3453 = vld [vmem:[%s3442 + $0x28] sm:$0xf]
        %v3454 = vld [vmem:[%s3442 + $0x2c] sm:$0xf]
        %v3455 = vld [vmem:[%s3442 + $0x30] sm:$0xf]
        %v3456 = vld [vmem:[%s3442 + $0x34] sm:$0xf]
        %v3457 = vld [vmem:[%s3442 + $0x38] sm:$0xf]
        %v3458 = vld [vmem:[%s3442 + $0x3c] sm:$0xf]
        %v3459 = vld [vmem:[%s3442 + $0x40] sm:$0xf]
        %v3460 = vld [vmem:[%s3442 + $0x44] sm:$0xf]
        %v3461 = vld [vmem:[%s3442 + $0x48] sm:$0xf]
        %v3462 = vld [vmem:[%s3442 + $0x4c] sm:$0xf]
        %v3463 = vld [vmem:[%s3442 + $0x50] sm:$0xf]
        %v3464 = vld [vmem:[%s3442 + $0x54] sm:$0xf]
        %v3465 = vld [vmem:[%s3442 + $0x58] sm:$0xf]
        %v3466 = vld [vmem:[%s3442 + $0x5c] sm:$0xf]
        %v3467 = vld [vmem:[%s3442 + $0x60] sm:$0xf]
        %v3468 = vld [vmem:[%s3442 + $0x64] sm:$0xf]
        %v3469 = vld [vmem:[%s3442 + $0x68] sm:$0xf]
        %v3470 = vld [vmem:[%s3442 + $0x6c] sm:$0xf]
        %v3471 = vld [vmem:[%s3442 + $0x70] sm:$0xf]
        %v3472 = vld [vmem:[%s3442 + $0x74] sm:$0xf]
        %v3473 = vld [vmem:[%s3442 + $0x78] sm:$0xf]
        %v3474 = vld [vmem:[%s3442 + $0x7c] sm:$0xf]
        %v3475 = vld [vmem:[%s3442 + $0x80] sm:$0xf]
        %v3476 = vld [vmem:[%s3442 + $0x84] sm:$0xf]
        %v3477 = vld [vmem:[%s3442 + $0x88] sm:$0xf]
        %v3478 = vld [vmem:[%s3442 + $0x8c] sm:$0xf]
        %v3479 = vld [vmem:[%s3442 + $0x90] sm:$0xf]
        %v3480 = vld [vmem:[%s3442 + $0x94] sm:$0xf]
        %v3481 = vld [vmem:[%s3442 + $0x98] sm:$0xf]
        %v3482 = vld [vmem:[%s3442 + $0x9c] sm:$0xf]
        %v3484 = vshrl.u32 %v3399, 16
        %v3486 = vshll.u32 %v3399, 16
        %v3488 = vrot.slane %v3486, 1
        %v3489 = vor.u32 %v3484, %v3488
        %v3491 = vshrl.u32 %v3400, 16
        %v3493 = vshll.u32 %v3400, 16
        %v3495 = vrot.slane %v3493, 1
        %v3496 = vor.u32 %v3491, %v3495
        %v3498 = vshrl.u32 %v3401, 16
        %v3500 = vshll.u32 %v3401, 16
        %v3502 = vrot.slane %v3500, 1
        %v3503 = vor.u32 %v3498, %v3502
        %v3546 = vunpack.c.l.b16 %v3443
        %v3547 = vunpack.c.l.b16 %v3444
        %v3548 = vunpack.c.l.b16 %v3445
        %v3549 = vunpack.c.l.b16 %v3446
        %v3550 = vunpack.c.l.b16 %v3447
        %v3551 = vunpack.c.l.b16 %v3448
        %v3552 = vunpack.c.l.b16 %v3449
        %v3553 = vunpack.c.l.b16 %v3450
        %v3554 = vunpack.c.l.b16 %v3451
        %v3555 = vunpack.c.l.b16 %v3452
        %v3556 = vunpack.c.l.b16 %v3453
        %v3557 = vunpack.c.l.b16 %v3454
        %v3558 = vunpack.c.l.b16 %v3455
        %v3559 = vunpack.c.l.b16 %v3456
        %v3560 = vunpack.c.l.b16 %v3457
        %v3561 = vunpack.c.l.b16 %v3458
        %v3562 = vunpack.c.l.b16 %v3459
        %v3563 = vunpack.c.l.b16 %v3460
        %v3564 = vunpack.c.l.b16 %v3461
        %v3565 = vunpack.c.l.b16 %v3462
        %v3566 = vunpack.c.l.b16 %v3463
        %v3567 = vunpack.c.l.b16 %v3464
        %v3568 = vunpack.c.l.b16 %v3465
        %v3569 = vunpack.c.l.b16 %v3466
        %v3570 = vunpack.c.l.b16 %v3467
        %v3571 = vunpack.c.l.b16 %v3468
        %v3572 = vunpack.c.l.b16 %v3469
        %v3573 = vunpack.c.l.b16 %v3470
        %v3574 = vunpack.c.l.b16 %v3471
        %v3575 = vunpack.c.l.b16 %v3472
        %v3576 = vunpack.c.l.b16 %v3473
        %v3577 = vunpack.c.l.b16 %v3474
        %v3578 = vunpack.c.l.b16 %v3475
        %v3579 = vunpack.c.l.b16 %v3476
        %v3580 = vunpack.c.l.b16 %v3477
        %v3581 = vunpack.c.l.b16 %v3478
        %v3582 = vunpack.c.l.b16 %v3479
        %v3583 = vunpack.c.l.b16 %v3480
        %v3584 = vunpack.c.l.b16 %v3481
        %v3585 = vunpack.c.l.b16 %v3482
        %v3586 = vpack.c.b16 %v3547, %v3546
        %v3587 = vpack.c.b16 %v3549, %v3548
        %v3588 = vpack.c.b16 %v3551, %v3550
        %v3589 = vpack.c.b16 %v3553, %v3552
        %v3590 = vpack.c.b16 %v3555, %v3554
        %v3591 = vpack.c.b16 %v3557, %v3556
        %v3592 = vpack.c.b16 %v3559, %v3558
        %v3593 = vpack.c.b16 %v3561, %v3560
        %v3594 = vpack.c.b16 %v3563, %v3562
        %v3595 = vpack.c.b16 %v3565, %v3564
        %v3596 = vpack.c.b16 %v3567, %v3566
        %v3597 = vpack.c.b16 %v3569, %v3568
        %v3598 = vpack.c.b16 %v3571, %v3570
        %v3599 = vpack.c.b16 %v3573, %v3572
        %v3600 = vpack.c.b16 %v3575, %v3574
        %v3601 = vpack.c.b16 %v3577, %v3576
        %v3602 = vpack.c.b16 %v3579, %v3578
        %v3603 = vpack.c.b16 %v3581, %v3580
        %v3604 = vpack.c.b16 %v3583, %v3582
        %v3605 = vpack.c.b16 %v3585, %v3584
        %v3627 = vsel %vm2682, %v3503, 0
        %3629 = vmatprep.subr.bf16.mxu0 0
        %3630 = vmatpush1.bf16.msra.mxu0 %v3586
        %3631 = vmatprep.subr.bf16.mxu0 0
        %3632 = vmatpush1.bf16.msra.mxu0 %v3587
        %3633 = vmatprep.subr.bf16.mxu0 0
        %3634 = vmatpush1.bf16.msra.mxu0 %v3588
        %3635 = vmatprep.subr.bf16.mxu0 0
        %3636 = vmatpush1.bf16.msra.mxu0 %v3589
        %3637 = vmatprep.subr.bf16.mxu0 0
        %3638 = vmatpush1.bf16.msra.mxu0 %v3590
        %3639 = vmatprep.subr.bf16.mxu0 0
        %3640 = vmatpush1.bf16.msra.mxu0 %v3591
        %3641 = vmatprep.subr.bf16.mxu0 0
        %3642 = vmatpush1.bf16.msra.mxu0 %v3592
        %3643 = vmatprep.subr.bf16.mxu0 0
        %3644 = vmatpush1.bf16.msra.mxu0 %v3593
        %3645 = vmatprep.subr.bf16.mxu0 0
        %3646 = vmatpush1.bf16.msra.mxu0 %v3594
        %3647 = vmatprep.subr.bf16.mxu0 0
        %3648 = vmatpush1.bf16.msra.mxu0 %v3595
        %3649 = vmatprep.subr.bf16.mxu0 0
        %3650 = vmatpush1.bf16.msra.mxu0 %v3596
        %3651 = vmatprep.subr.bf16.mxu0 0
        %3652 = vmatpush1.bf16.msra.mxu0 %v3597
        %3653 = vmatprep.subr.bf16.mxu0 0
        %3654 = vmatpush1.bf16.msra.mxu0 %v3598
        %3655 = vmatprep.subr.bf16.mxu0 0
        %3656 = vmatpush1.bf16.msra.mxu0 %v3599
        %3657 = vmatprep.subr.bf16.mxu0 0
        %3658 = vmatpush1.bf16.msra.mxu0 %v3600
        %3659 = vmatprep.subr.bf16.mxu0 0
        %3660 = vmatpush1.bf16.msra.mxu0 %v3601
        %3661 = vmatprep.mubr.bf16.mxu0 %v3496
        %3662 = vmatmul.mubr.bf16.gmra.mrb[0].mxu0 %v3489
        %v3663 = vpop.f32.mrb[0].mxu0
        %v3664 = vadd.f32 0.0, %v3663
        %v3665 = vpop.f32.mrb[0].mxu0
        %v3666 = vpop.f32.mrb[0].mxu0
        %v3667 = vpop.f32.mrb[0].mxu0
        %3668 = vdwg.mxu0
        %3669 = vmatprep.subr.bf16.mxu0 0
        %3670 = vmatpush1.bf16.msra.mxu0 %v3602
        %3671 = vmatprep.subr.bf16.mxu0 0
        %3672 = vmatpush1.bf16.msra.mxu0 %v3603
        %3673 = vmatprep.subr.bf16.mxu0 0
        %3674 = vmatpush1.bf16.msra.mxu0 %v3604
        %3675 = vmatprep.subr.bf16.mxu0 0
        %3676 = vmatpush1.bf16.msra.mxu0 %v3605
        %3677 = vmatprep.subr.bf16.mxu0 0
        %3678 = vmatpush1.bf16.msra.mxu0 0
        %3679 = vmatprep.subr.bf16.mxu0 0
        %3680 = vmatpush1.bf16.msra.mxu0 0
        %3681 = vmatprep.subr.bf16.mxu0 0
        %3682 = vmatpush1.bf16.msra.mxu0 0
        %3683 = vmatprep.subr.bf16.mxu0 0
        %3684 = vmatpush1.bf16.msra.mxu0 0
        %3685 = vmatprep.subr.bf16.mxu0 0
        %3686 = vmatpush1.bf16.msra.mxu0 0
        %3687 = vmatprep.subr.bf16.mxu0 0
        %3688 = vmatpush1.bf16.msra.mxu0 0
        %3689 = vmatprep.subr.bf16.mxu0 0
        %3690 = vmatpush1.bf16.msra.mxu0 0
        %3691 = vmatprep.subr.bf16.mxu0 0
        %3692 = vmatpush1.bf16.msra.mxu0 0
        %3693 = vmatprep.subr.bf16.mxu0 0
        %3694 = vmatpush1.bf16.msra.mxu0 0
        %3695 = vmatprep.subr.bf16.mxu0 0
        %3696 = vmatpush1.bf16.msra.mxu0 0
        %3697 = vmatprep.subr.bf16.mxu0 0
        %3698 = vmatpush1.bf16.msra.mxu0 0
        %3699 = vmatprep.subr.bf16.mxu0 0
        %3700 = vmatpush1.bf16.msra.mxu0 0
        %3701 = vmatprep.mubr.bf16.mxu0 0
        %3702 = vmatmul.mubr.bf16.gmra.mrb[0].mxu0 %v3627
        %v3703 = vpop.f32.mrb[0].mxu0
        %v3704 = vadd.f32 %v3664, %v3703
        %v3705 = vpop.f32.mrb[0].mxu0
        %v3706 = vpop.f32.mrb[0].mxu0
        %v3707 = vpop.f32.mrb[0].mxu0
        %3708 = vdwg.mxu0
        %v3749 = vunpack.c.l.b16 %v3402
        %v3750 = vunpack.c.l.b16 %v3403
        %v3751 = vunpack.c.l.b16 %v3404
        %v3752 = vunpack.c.l.b16 %v3405
        %v3753 = vunpack.c.l.b16 %v3406
        %v3754 = vunpack.c.l.b16 %v3407
        %v3755 = vunpack.c.l.b16 %v3408
        %v3756 = vunpack.c.l.b16 %v3409
        %v3757 = vunpack.c.l.b16 %v3410
        %v3758 = vunpack.c.l.b16 %v3411
        %v3759 = vunpack.c.l.b16 %v3412
        %v3760 = vunpack.c.l.b16 %v3413
        %v3761 = vunpack.c.l.b16 %v3414
        %v3762 = vunpack.c.l.b16 %v3415
        %v3763 = vunpack.c.l.b16 %v3416
        %v3764 = vunpack.c.l.b16 %v3417
        %v3765 = vunpack.c.l.b16 %v3418
        %v3766 = vunpack.c.l.b16 %v3419
        %v3767 = vunpack.c.l.b16 %v3420
        %v3768 = vunpack.c.l.b16 %v3421
        %v3769 = vunpack.c.l.b16 %v3422
        %v3770 = vunpack.c.l.b16 %v3423
        %v3771 = vunpack.c.l.b16 %v3424
        %v3772 = vunpack.c.l.b16 %v3425
        %v3773 = vunpack.c.l.b16 %v3426
        %v3774 = vunpack.c.l.b16 %v3427
        %v3775 = vunpack.c.l.b16 %v3428
        %v3776 = vunpack.c.l.b16 %v3429
        %v3777 = vunpack.c.l.b16 %v3430
        %v3778 = vunpack.c.l.b16 %v3431
        %v3779 = vunpack.c.l.b16 %v3432
        %v3780 = vunpack.c.l.b16 %v3433
        %v3781 = vunpack.c.l.b16 %v3434
        %v3782 = vunpack.c.l.b16 %v3435
        %v3783 = vunpack.c.l.b16 %v3436
        %v3784 = vunpack.c.l.b16 %v3437
        %v3785 = vunpack.c.l.b16 %v3438
        %v3786 = vunpack.c.l.b16 %v3439
        %v3787 = vunpack.c.l.b16 %v3440
        %v3788 = vunpack.c.l.b16 %v3441
        %v3789 = vpack.c.b16 %v3750, %v3749
        %v3790 = vpack.c.b16 %v3752, %v3751
        %v3791 = vpack.c.b16 %v3754, %v3753
        %v3792 = vpack.c.b16 %v3756, %v3755
        %v3793 = vpack.c.b16 %v3758, %v3757
        %v3794 = vpack.c.b16 %v3760, %v3759
        %v3795 = vpack.c.b16 %v3762, %v3761
        %v3796 = vpack.c.b16 %v3764, %v3763
        %v3797 = vpack.c.b16 %v3766, %v3765
        %v3798 = vpack.c.b16 %v3768, %v3767
        %v3799 = vpack.c.b16 %v3770, %v3769
        %v3800 = vpack.c.b16 %v3772, %v3771
        %v3801 = vpack.c.b16 %v3774, %v3773
        %v3802 = vpack.c.b16 %v3776, %v3775
        %v3803 = vpack.c.b16 %v3778, %v3777
        %v3804 = vpack.c.b16 %v3780, %v3779
        %v3805 = vpack.c.b16 %v3782, %v3781
        %v3806 = vpack.c.b16 %v3784, %v3783
        %v3807 = vpack.c.b16 %v3786, %v3785
        %v3808 = vpack.c.b16 %v3788, %v3787
        %v3829 = vsel %vm2682, %v3401, 0
        %3831 = vmatprep.subr.bf16.mxu0 0
        %3832 = vmatpush1.bf16.msra.mxu0 %v3789
        %3833 = vmatprep.subr.bf16.mxu0 0
        %3834 = vmatpush1.bf16.msra.mxu0 %v3790
        %3835 = vmatprep.subr.bf16.mxu0 0
        %3836 = vmatpush1.bf16.msra.mxu0 %v3791
        %3837 = vmatprep.subr.bf16.mxu0 0
        %3838 = vmatpush1.bf16.msra.mxu0 %v3792
        %3839 = vmatprep.subr.bf16.mxu0 0
        %3840 = vmatpush1.bf16.msra.mxu0 %v3793
        %3841 = vmatprep.subr.bf16.mxu0 0
        %3842 = vmatpush1.bf16.msra.mxu0 %v3794
        %3843 = vmatprep.subr.bf16.mxu0 0
        %3844 = vmatpush1.bf16.msra.mxu0 %v3795
        %3845 = vmatprep.subr.bf16.mxu0 0
        %3846 = vmatpush1.bf16.msra.mxu0 %v3796
        %3847 = vmatprep.subr.bf16.mxu0 0
        %3848 = vmatpush1.bf16.msra.mxu0 %v3797
        %3849 = vmatprep.subr.bf16.mxu0 0
        %3850 = vmatpush1.bf16.msra.mxu0 %v3798
        %3851 = vmatprep.subr.bf16.mxu0 0
        %3852 = vmatpush1.bf16.msra.mxu0 %v3799
        %3853 = vmatprep.subr.bf16.mxu0 0
        %3854 = vmatpush1.bf16.msra.mxu0 %v3800
        %3855 = vmatprep.subr.bf16.mxu0 0
        %3856 = vmatpush1.bf16.msra.mxu0 %v3801
        %3857 = vmatprep.subr.bf16.mxu0 0
        %3858 = vmatpush1.bf16.msra.mxu0 %v3802
        %3859 = vmatprep.subr.bf16.mxu0 0
        %3860 = vmatpush1.bf16.msra.mxu0 %v3803
        %3861 = vmatprep.subr.bf16.mxu0 0
        %3862 = vmatpush1.bf16.msra.mxu0 %v3804
        %3863 = vmatprep.mubr.bf16.mxu0 %v3400
        %3864 = vmatmul.mubr.bf16.gmra.mrb[0].mxu0 %v3399
        %v3865 = vpop.f32.mrb[0].mxu0
        %v3866 = vadd.f32 %v3704, %v3865
        %v3867 = vpop.f32.mrb[0].mxu0
        %v3868 = vpop.f32.mrb[0].mxu0
        %v3869 = vpop.f32.mrb[0].mxu0
        %3870 = vdwg.mxu0
        %3871 = vmatprep.subr.bf16.mxu0 0
        %3872 = vmatpush1.bf16.msra.mxu0 %v3805
        %3873 = vmatprep.subr.bf16.mxu0 0
        %3874 = vmatpush1.bf16.msra.mxu0 %v3806
        %3875 = vmatprep.subr.bf16.mxu0 0
        %3876 = vmatpush1.bf16.msra.mxu0 %v3807
        %3877 = vmatprep.subr.bf16.mxu0 0
        %3878 = vmatpush1.bf16.msra.mxu0 %v3808
        %3879 = vmatprep.subr.bf16.mxu0 0
        %3880 = vmatpush1.bf16.msra.mxu0 0
        %3881 = vmatprep.subr.bf16.mxu0 0
        %3882 = vmatpush1.bf16.msra.mxu0 0
        %3883 = vmatprep.subr.bf16.mxu0 0
        %3884 = vmatpush1.bf16.msra.mxu0 0
        %3885 = vmatprep.subr.bf16.mxu0 0
        %3886 = vmatpush1.bf16.msra.mxu0 0
        %3887 = vmatprep.subr.bf16.mxu0 0
        %3888 = vmatpush1.bf16.msra.mxu0 0
        %3889 = vmatprep.subr.bf16.mxu0 0
        %3890 = vmatpush1.bf16.msra.mxu0 0
        %3891 = vmatprep.subr.bf16.mxu0 0
        %3892 = vmatpush1.bf16.msra.mxu0 0
        %3893 = vmatprep.subr.bf16.mxu0 0
        %3894 = vmatpush1.bf16.msra.mxu0 0
        %3895 = vmatprep.subr.bf16.mxu0 0
        %3896 = vmatpush1.bf16.msra.mxu0 0
        %3897 = vmatprep.subr.bf16.mxu0 0
        %3898 = vmatpush1.bf16.msra.mxu0 0
        %3899 = vmatprep.subr.bf16.mxu0 0
        %3900 = vmatpush1.bf16.msra.mxu0 0
        %3901 = vmatprep.subr.bf16.mxu0 0
        %3902 = vmatpush1.bf16.msra.mxu0 0
        %3903 = vmatprep.mubr.bf16.mxu0 0
        %3904 = vmatmul.mubr.bf16.gmra.mrb[0].mxu0 %v3829
        %v3905 = vpop.f32.mrb[0].mxu0
        %v3906 = vadd.f32 %v3866, %v3905
        %v3907 = vpop.f32.mrb[0].mxu0
        %v3908 = vpop.f32.mrb[0].mxu0
        %v3909 = vpop.f32.mrb[0].mxu0
        %3910 = vdwg.mxu0
        %s3911 = scalar_lea.vmem %s15, 320
        %v3912 = vld [vmem:[%s3911] sm:$0xf]
        %v3913 = vld [vmem:[%s3911 + $0x4] sm:$0xf]
        %v3914 = vld [vmem:[%s3911 + $0x8] sm:$0xf]
        %v3915 = vld [vmem:[%s3911 + $0xc] sm:$0xf]
        %v3916 = vld [vmem:[%s3911 + $0x10] sm:$0xf]
        %v3917 = vld [vmem:[%s3911 + $0x14] sm:$0xf]
        %v3918 = vld [vmem:[%s3911 + $0x18] sm:$0xf]
        %v3919 = vld [vmem:[%s3911 + $0x1c] sm:$0xf]
        %v3920 = vld [vmem:[%s3911 + $0x20] sm:$0xf]
        %v3921 = vld [vmem:[%s3911 + $0x24] sm:$0xf]
        %v3922 = vld [vmem:[%s3911 + $0x28] sm:$0xf]
        %v3923 = vld [vmem:[%s3911 + $0x2c] sm:$0xf]
        %v3924 = vld [vmem:[%s3911 + $0x30] sm:$0xf]
        %v3925 = vld [vmem:[%s3911 + $0x34] sm:$0xf]
        %v3926 = vld [vmem:[%s3911 + $0x38] sm:$0xf]
        %v3927 = vld [vmem:[%s3911 + $0x3c] sm:$0xf]
        %v3928 = vld [vmem:[%s3911 + $0x40] sm:$0xf]
        %v3929 = vld [vmem:[%s3911 + $0x44] sm:$0xf]
        %v3930 = vld [vmem:[%s3911 + $0x48] sm:$0xf]
        %v3931 = vld [vmem:[%s3911 + $0x4c] sm:$0xf]
        %v3932 = vld [vmem:[%s3911 + $0x50] sm:$0xf]
        %v3933 = vld [vmem:[%s3911 + $0x54] sm:$0xf]
        %v3934 = vld [vmem:[%s3911 + $0x58] sm:$0xf]
        %v3935 = vld [vmem:[%s3911 + $0x5c] sm:$0xf]
        %v3936 = vld [vmem:[%s3911 + $0x60] sm:$0xf]
        %v3937 = vld [vmem:[%s3911 + $0x64] sm:$0xf]
        %v3938 = vld [vmem:[%s3911 + $0x68] sm:$0xf]
        %v3939 = vld [vmem:[%s3911 + $0x6c] sm:$0xf]
        %v3940 = vld [vmem:[%s3911 + $0x70] sm:$0xf]
        %v3941 = vld [vmem:[%s3911 + $0x74] sm:$0xf]
        %v3942 = vld [vmem:[%s3911 + $0x78] sm:$0xf]
        %v3943 = vld [vmem:[%s3911 + $0x7c] sm:$0xf]
        %v3944 = vld [vmem:[%s3911 + $0x80] sm:$0xf]
        %v3945 = vld [vmem:[%s3911 + $0x84] sm:$0xf]
        %v3946 = vld [vmem:[%s3911 + $0x88] sm:$0xf]
        %v3947 = vld [vmem:[%s3911 + $0x8c] sm:$0xf]
        %v3948 = vld [vmem:[%s3911 + $0x90] sm:$0xf]
        %v3949 = vld [vmem:[%s3911 + $0x94] sm:$0xf]
        %v3950 = vld [vmem:[%s3911 + $0x98] sm:$0xf]
        %v3951 = vld [vmem:[%s3911 + $0x9c] sm:$0xf]
        %v3955 = vrot.slane %v3399, 1
        %v3956 = vrot.slane %v3400, 1
        %v3957 = vrot.slane %v3401, 1
        %v4000 = vunpack.c.l.b16 %v3912
        %v4001 = vunpack.c.l.b16 %v3913
        %v4002 = vunpack.c.l.b16 %v3914
        %v4003 = vunpack.c.l.b16 %v3915
        %v4004 = vunpack.c.l.b16 %v3916
        %v4005 = vunpack.c.l.b16 %v3917
        %v4006 = vunpack.c.l.b16 %v3918
        %v4007 = vunpack.c.l.b16 %v3919
        %v4008 = vunpack.c.l.b16 %v3920
        %v4009 = vunpack.c.l.b16 %v3921
        %v4010 = vunpack.c.l.b16 %v3922
        %v4011 = vunpack.c.l.b16 %v3923
        %v4012 = vunpack.c.l.b16 %v3924
        %v4013 = vunpack.c.l.b16 %v3925
        %v4014 = vunpack.c.l.b16 %v3926
        %v4015 = vunpack.c.l.b16 %v3927
        %v4016 = vunpack.c.l.b16 %v3928
        %v4017 = vunpack.c.l.b16 %v3929
        %v4018 = vunpack.c.l.b16 %v3930
        %v4019 = vunpack.c.l.b16 %v3931
        %v4020 = vunpack.c.l.b16 %v3932
        %v4021 = vunpack.c.l.b16 %v3933
        %v4022 = vunpack.c.l.b16 %v3934
        %v4023 = vunpack.c.l.b16 %v3935
        %v4024 = vunpack.c.l.b16 %v3936
        %v4025 = vunpack.c.l.b16 %v3937
        %v4026 = vunpack.c.l.b16 %v3938
        %v4027 = vunpack.c.l.b16 %v3939
        %v4028 = vunpack.c.l.b16 %v3940
        %v4029 = vunpack.c.l.b16 %v3941
        %v4030 = vunpack.c.l.b16 %v3942
        %v4031 = vunpack.c.l.b16 %v3943
        %v4032 = vunpack.c.l.b16 %v3944
        %v4033 = vunpack.c.l.b16 %v3945
        %v4034 = vunpack.c.l.b16 %v3946
        %v4035 = vunpack.c.l.b16 %v3947
        %v4036 = vunpack.c.l.b16 %v3948
        %v4037 = vunpack.c.l.b16 %v3949
        %v4038 = vunpack.c.l.b16 %v3950
        %v4039 = vunpack.c.l.b16 %v3951
        %v4040 = vpack.c.b16 %v4001, %v4000
        %v4041 = vpack.c.b16 %v4003, %v4002
        %v4042 = vpack.c.b16 %v4005, %v4004
        %v4043 = vpack.c.b16 %v4007, %v4006
        %v4044 = vpack.c.b16 %v4009, %v4008
        %v4045 = vpack.c.b16 %v4011, %v4010
        %v4046 = vpack.c.b16 %v4013, %v4012
        %v4047 = vpack.c.b16 %v4015, %v4014
        %v4048 = vpack.c.b16 %v4017, %v4016
        %v4049 = vpack.c.b16 %v4019, %v4018
        %v4050 = vpack.c.b16 %v4021, %v4020
        %v4051 = vpack.c.b16 %v4023, %v4022
        %v4052 = vpack.c.b16 %v4025, %v4024
        %v4053 = vpack.c.b16 %v4027, %v4026
        %v4054 = vpack.c.b16 %v4029, %v4028
        %v4055 = vpack.c.b16 %v4031, %v4030
        %v4056 = vpack.c.b16 %v4033, %v4032
        %v4057 = vpack.c.b16 %v4035, %v4034
        %v4058 = vpack.c.b16 %v4037, %v4036
        %v4059 = vpack.c.b16 %v4039, %v4038
        %v4081 = vsel %vm2682, %v3957, 0
        %4083 = vmatprep.subr.bf16.mxu0 0
        %4084 = vmatpush1.bf16.msra.mxu0 %v4040
        %4085 = vmatprep.subr.bf16.mxu0 0
        %4086 = vmatpush1.bf16.msra.mxu0 %v4041
        %4087 = vmatprep.subr.bf16.mxu0 0
        %4088 = vmatpush1.bf16.msra.mxu0 %v4042
        %4089 = vmatprep.subr.bf16.mxu0 0
        %4090 = vmatpush1.bf16.msra.mxu0 %v4043
        %4091 = vmatprep.subr.bf16.mxu0 0
        %4092 = vmatpush1.bf16.msra.mxu0 %v4044
        %4093 = vmatprep.subr.bf16.mxu0 0
        %4094 = vmatpush1.bf16.msra.mxu0 %v4045
        %4095 = vmatprep.subr.bf16.mxu0 0
        %4096 = vmatpush1.bf16.msra.mxu0 %v4046
        %4097 = vmatprep.subr.bf16.mxu0 0
        %4098 = vmatpush1.bf16.msra.mxu0 %v4047
        %4099 = vmatprep.subr.bf16.mxu0 0
        %4100 = vmatpush1.bf16.msra.mxu0 %v4048
        %4101 = vmatprep.subr.bf16.mxu0 0
        %4102 = vmatpush1.bf16.msra.mxu0 %v4049
        %4103 = vmatprep.subr.bf16.mxu0 0
        %4104 = vmatpush1.bf16.msra.mxu0 %v4050
        %4105 = vmatprep.subr.bf16.mxu0 0
        %4106 = vmatpush1.bf16.msra.mxu0 %v4051
        %4107 = vmatprep.subr.bf16.mxu0 0
        %4108 = vmatpush1.bf16.msra.mxu0 %v4052
        %4109 = vmatprep.subr.bf16.mxu0 0
        %4110 = vmatpush1.bf16.msra.mxu0 %v4053
        %4111 = vmatprep.subr.bf16.mxu0 0
        %4112 = vmatpush1.bf16.msra.mxu0 %v4054
        %4113 = vmatprep.subr.bf16.mxu0 0
        %4114 = vmatpush1.bf16.msra.mxu0 %v4055
        %4115 = vmatprep.mubr.bf16.mxu0 %v3956
        %4116 = vmatmul.mubr.bf16.gmra.mrb[0].mxu0 %v3955
        %v4117 = vpop.f32.mrb[0].mxu0
        %v4118 = vadd.f32 0.0, %v4117
        %v4119 = vpop.f32.mrb[0].mxu0
        %v4120 = vpop.f32.mrb[0].mxu0
        %v4121 = vpop.f32.mrb[0].mxu0
        %4122 = vdwg.mxu0
        %4123 = vmatprep.subr.bf16.mxu0 0
        %4124 = vmatpush1.bf16.msra.mxu0 %v4056
        %4125 = vmatprep.subr.bf16.mxu0 0
        %4126 = vmatpush1.bf16.msra.mxu0 %v4057
        %4127 = vmatprep.subr.bf16.mxu0 0
        %4128 = vmatpush1.bf16.msra.mxu0 %v4058
        %4129 = vmatprep.subr.bf16.mxu0 0
        %4130 = vmatpush1.bf16.msra.mxu0 %v4059
        %4131 = vmatprep.subr.bf16.mxu0 0
        %4132 = vmatpush1.bf16.msra.mxu0 0
        %4133 = vmatprep.subr.bf16.mxu0 0
        %4134 = vmatpush1.bf16.msra.mxu0 0
        %4135 = vmatprep.subr.bf16.mxu0 0
        %4136 = vmatpush1.bf16.msra.mxu0 0
        %4137 = vmatprep.subr.bf16.mxu0 0
        %4138 = vmatpush1.bf16.msra.mxu0 0
        %4139 = vmatprep.subr.bf16.mxu0 0
        %4140 = vmatpush1.bf16.msra.mxu0 0
        %4141 = vmatprep.subr.bf16.mxu0 0
        %4142 = vmatpush1.bf16.msra.mxu0 0
        %4143 = vmatprep.subr.bf16.mxu0 0
        %4144 = vmatpush1.bf16.msra.mxu0 0
        %4145 = vmatprep.subr.bf16.mxu0 0
        %4146 = vmatpush1.bf16.msra.mxu0 0
        %4147 = vmatprep.subr.bf16.mxu0 0
        %4148 = vmatpush1.bf16.msra.mxu0 0
        %4149 = vmatprep.subr.bf16.mxu0 0
        %4150 = vmatpush1.bf16.msra.mxu0 0
        %4151 = vmatprep.subr.bf16.mxu0 0
        %4152 = vmatpush1.bf16.msra.mxu0 0
        %4153 = vmatprep.subr.bf16.mxu0 0
        %4154 = vmatpush1.bf16.msra.mxu0 0
        %4155 = vmatprep.mubr.bf16.mxu0 0
        %4156 = vmatmul.mubr.bf16.gmra.mrb[0].mxu0 %v4081
        %v4157 = vpop.f32.mrb[0].mxu0
        %v4158 = vadd.f32 %v4118, %v4157
        %v4159 = vpop.f32.mrb[0].mxu0
        %v4160 = vpop.f32.mrb[0].mxu0
        %v4161 = vpop.f32.mrb[0].mxu0
        %4162 = vdwg.mxu0
        %v4163 = vadd.f32 %v3906, %v4158
        %s4164 = scalar_lea.vmem %s15, 480
        %v4165 = vld [vmem:[%s4164] sm:$0xf]
        %v4166 = vld [vmem:[%s4164 + $0x4] sm:$0xf]
        %v4167 = vld [vmem:[%s4164 + $0x8] sm:$0xf]
        %v4168 = vld [vmem:[%s4164 + $0xc] sm:$0xf]
        %v4169 = vld [vmem:[%s4164 + $0x10] sm:$0xf]
        %v4170 = vld [vmem:[%s4164 + $0x14] sm:$0xf]
        %v4171 = vld [vmem:[%s4164 + $0x18] sm:$0xf]
        %v4172 = vld [vmem:[%s4164 + $0x1c] sm:$0xf]
        %v4173 = vld [vmem:[%s4164 + $0x20] sm:$0xf]
        %v4174 = vld [vmem:[%s4164 + $0x24] sm:$0xf]
        %v4175 = vld [vmem:[%s4164 + $0x28] sm:$0xf]
        %v4176 = vld [vmem:[%s4164 + $0x2c] sm:$0xf]
        %v4177 = vld [vmem:[%s4164 + $0x30] sm:$0xf]
        %v4178 = vld [vmem:[%s4164 + $0x34] sm:$0xf]
        %v4179 = vld [vmem:[%s4164 + $0x38] sm:$0xf]
        %v4180 = vld [vmem:[%s4164 + $0x3c] sm:$0xf]
        %v4181 = vld [vmem:[%s4164 + $0x40] sm:$0xf]
        %v4182 = vld [vmem:[%s4164 + $0x44] sm:$0xf]
        %v4183 = vld [vmem:[%s4164 + $0x48] sm:$0xf]
        %v4184 = vld [vmem:[%s4164 + $0x4c] sm:$0xf]
        %v4185 = vld [vmem:[%s4164 + $0x50] sm:$0xf]
        %v4186 = vld [vmem:[%s4164 + $0x54] sm:$0xf]
        %v4187 = vld [vmem:[%s4164 + $0x58] sm:$0xf]
        %v4188 = vld [vmem:[%s4164 + $0x5c] sm:$0xf]
        %v4189 = vld [vmem:[%s4164 + $0x60] sm:$0xf]
        %v4190 = vld [vmem:[%s4164 + $0x64] sm:$0xf]
        %v4191 = vld [vmem:[%s4164 + $0x68] sm:$0xf]
        %v4192 = vld [vmem:[%s4164 + $0x6c] sm:$0xf]
        %v4193 = vld [vmem:[%s4164 + $0x70] sm:$0xf]
        %v4194 = vld [vmem:[%s4164 + $0x74] sm:$0xf]
        %v4195 = vld [vmem:[%s4164 + $0x78] sm:$0xf]
        %v4196 = vld [vmem:[%s4164 + $0x7c] sm:$0xf]
        %v4197 = vld [vmem:[%s4164 + $0x80] sm:$0xf]
        %v4198 = vld [vmem:[%s4164 + $0x84] sm:$0xf]
        %v4199 = vld [vmem:[%s4164 + $0x88] sm:$0xf]
        %v4200 = vld [vmem:[%s4164 + $0x8c] sm:$0xf]
        %v4201 = vld [vmem:[%s4164 + $0x90] sm:$0xf]
        %v4202 = vld [vmem:[%s4164 + $0x94] sm:$0xf]
        %v4203 = vld [vmem:[%s4164 + $0x98] sm:$0xf]
        %v4204 = vld [vmem:[%s4164 + $0x9c] sm:$0xf]
        %v4205 = vrot.slane %v3484, 1
        %v4206 = vrot.slane %v3486, 2
        %v4207 = vor.u32 %v4205, %v4206
        %v4208 = vrot.slane %v3491, 1
        %v4209 = vrot.slane %v3493, 2
        %v4210 = vor.u32 %v4208, %v4209
        %v4211 = vrot.slane %v3498, 1
        %v4212 = vrot.slane %v3500, 2
        %v4213 = vor.u32 %v4211, %v4212
        %v4256 = vunpack.c.l.b16 %v4165
        %v4257 = vunpack.c.l.b16 %v4166
        %v4258 = vunpack.c.l.b16 %v4167
        %v4259 = vunpack.c.l.b16 %v4168
        %v4260 = vunpack.c.l.b16 %v4169
        %v4261 = vunpack.c.l.b16 %v4170
        %v4262 = vunpack.c.l.b16 %v4171
        %v4263 = vunpack.c.l.b16 %v4172
        %v4264 = vunpack.c.l.b16 %v4173
        %v4265 = vunpack.c.l.b16 %v4174
        %v4266 = vunpack.c.l.b16 %v4175
        %v4267 = vunpack.c.l.b16 %v4176
        %v4268 = vunpack.c.l.b16 %v4177
        %v4269 = vunpack.c.l.b16 %v4178
        %v4270 = vunpack.c.l.b16 %v4179
        %v4271 = vunpack.c.l.b16 %v4180
        %v4272 = vunpack.c.l.b16 %v4181
        %v4273 = vunpack.c.l.b16 %v4182
        %v4274 = vunpack.c.l.b16 %v4183
        %v4275 = vunpack.c.l.b16 %v4184
        %v4276 = vunpack.c.l.b16 %v4185
        %v4277 = vunpack.c.l.b16 %v4186
        %v4278 = vunpack.c.l.b16 %v4187
        %v4279 = vunpack.c.l.b16 %v4188
        %v4280 = vunpack.c.l.b16 %v4189
        %v4281 = vunpack.c.l.b16 %v4190
        %v4282 = vunpack.c.l.b16 %v4191
        %v4283 = vunpack.c.l.b16 %v4192
        %v4284 = vunpack.c.l.b16 %v4193
        %v4285 = vunpack.c.l.b16 %v4194
        %v4286 = vunpack.c.l.b16 %v4195
        %v4287 = vunpack.c.l.b16 %v4196
        %v4288 = vunpack.c.l.b16 %v4197
        %v4289 = vunpack.c.l.b16 %v4198
        %v4290 = vunpack.c.l.b16 %v4199
        %v4291 = vunpack.c.l.b16 %v4200
        %v4292 = vunpack.c.l.b16 %v4201
        %v4293 = vunpack.c.l.b16 %v4202
        %v4294 = vunpack.c.l.b16 %v4203
        %v4295 = vunpack.c.l.b16 %v4204
        %v4296 = vpack.c.b16 %v4257, %v4256
        %v4297 = vpack.c.b16 %v4259, %v4258
        %v4298 = vpack.c.b16 %v4261, %v4260
        %v4299 = vpack.c.b16 %v4263, %v4262
        %v4300 = vpack.c.b16 %v4265, %v4264
        %v4301 = vpack.c.b16 %v4267, %v4266
        %v4302 = vpack.c.b16 %v4269, %v4268
        %v4303 = vpack.c.b16 %v4271, %v4270
        %v4304 = vpack.c.b16 %v4273, %v4272
        %v4305 = vpack.c.b16 %v4275, %v4274
        %v4306 = vpack.c.b16 %v4277, %v4276
        %v4307 = vpack.c.b16 %v4279, %v4278
        %v4308 = vpack.c.b16 %v4281, %v4280
        %v4309 = vpack.c.b16 %v4283, %v4282
        %v4310 = vpack.c.b16 %v4285, %v4284
        %v4311 = vpack.c.b16 %v4287, %v4286
        %v4312 = vpack.c.b16 %v4289, %v4288
        %v4313 = vpack.c.b16 %v4291, %v4290
        %v4314 = vpack.c.b16 %v4293, %v4292
        %v4315 = vpack.c.b16 %v4295, %v4294
        %v4337 = vsel %vm2682, %v4213, 0
        %4339 = vmatprep.subr.bf16.mxu0 0
        %4340 = vmatpush1.bf16.msra.mxu0 %v4296
        %4341 = vmatprep.subr.bf16.mxu0 0
        %4342 = vmatpush1.bf16.msra.mxu0 %v4297
        %4343 = vmatprep.subr.bf16.mxu0 0
        %4344 = vmatpush1.bf16.msra.mxu0 %v4298
        %4345 = vmatprep.subr.bf16.mxu0 0
        %4346 = vmatpush1.bf16.msra.mxu0 %v4299
        %4347 = vmatprep.subr.bf16.mxu0 0
        %4348 = vmatpush1.bf16.msra.mxu0 %v4300
        %4349 = vmatprep.subr.bf16.mxu0 0
        %4350 = vmatpush1.bf16.msra.mxu0 %v4301
        %4351 = vmatprep.subr.bf16.mxu0 0
        %4352 = vmatpush1.bf16.msra.mxu0 %v4302
        %4353 = vmatprep.subr.bf16.mxu0 0
        %4354 = vmatpush1.bf16.msra.mxu0 %v4303
        %4355 = vmatprep.subr.bf16.mxu0 0
        %4356 = vmatpush1.bf16.msra.mxu0 %v4304
        %4357 = vmatprep.subr.bf16.mxu0 0
        %4358 = vmatpush1.bf16.msra.mxu0 %v4305
        %4359 = vmatprep.subr.bf16.mxu0 0
        %4360 = vmatpush1.bf16.msra.mxu0 %v4306
        %4361 = vmatprep.subr.bf16.mxu0 0
        %4362 = vmatpush1.bf16.msra.mxu0 %v4307
        %4363 = vmatprep.subr.bf16.mxu0 0
        %4364 = vmatpush1.bf16.msra.mxu0 %v4308
        %4365 = vmatprep.subr.bf16.mxu0 0
        %4366 = vmatpush1.bf16.msra.mxu0 %v4309
        %4367 = vmatprep.subr.bf16.mxu0 0
        %4368 = vmatpush1.bf16.msra.mxu0 %v4310
        %4369 = vmatprep.subr.bf16.mxu0 0
        %4370 = vmatpush1.bf16.msra.mxu0 %v4311
        %4371 = vmatprep.mubr.bf16.mxu0 %v4210
        %4372 = vmatmul.mubr.bf16.gmra.mrb[0].mxu0 %v4207
        %v4373 = vpop.f32.mrb[0].mxu0
        %v4374 = vadd.f32 0.0, %v4373
        %v4375 = vpop.f32.mrb[0].mxu0
        %v4376 = vpop.f32.mrb[0].mxu0
        %v4377 = vpop.f32.mrb[0].mxu0
        %4378 = vdwg.mxu0
        %4379 = vmatprep.subr.bf16.mxu0 0
        %4380 = vmatpush1.bf16.msra.mxu0 %v4312
        %4381 = vmatprep.subr.bf16.mxu0 0
        %4382 = vmatpush1.bf16.msra.mxu0 %v4313
        %4383 = vmatprep.subr.bf16.mxu0 0
        %4384 = vmatpush1.bf16.msra.mxu0 %v4314
        %4385 = vmatprep.subr.bf16.mxu0 0
        %4386 = vmatpush1.bf16.msra.mxu0 %v4315
        %4387 = vmatprep.subr.bf16.mxu0 0
        %4388 = vmatpush1.bf16.msra.mxu0 0
        %4389 = vmatprep.subr.bf16.mxu0 0
        %4390 = vmatpush1.bf16.msra.mxu0 0
        %4391 = vmatprep.subr.bf16.mxu0 0
        %4392 = vmatpush1.bf16.msra.mxu0 0
        %4393 = vmatprep.subr.bf16.mxu0 0
        %4394 = vmatpush1.bf16.msra.mxu0 0
        %4395 = vmatprep.subr.bf16.mxu0 0
        %4396 = vmatpush1.bf16.msra.mxu0 0
        %4397 = vmatprep.subr.bf16.mxu0 0
        %4398 = vmatpush1.bf16.msra.mxu0 0
        %4399 = vmatprep.subr.bf16.mxu0 0
        %4400 = vmatpush1.bf16.msra.mxu0 0
        %4401 = vmatprep.subr.bf16.mxu0 0
        %4402 = vmatpush1.bf16.msra.mxu0 0
        %4403 = vmatprep.subr.bf16.mxu0 0
        %4404 = vmatpush1.bf16.msra.mxu0 0
        %4405 = vmatprep.subr.bf16.mxu0 0
        %4406 = vmatpush1.bf16.msra.mxu0 0
        %4407 = vmatprep.subr.bf16.mxu0 0
        %4408 = vmatpush1.bf16.msra.mxu0 0
        %4409 = vmatprep.subr.bf16.mxu0 0
        %4410 = vmatpush1.bf16.msra.mxu0 0
        %4411 = vmatprep.mubr.bf16.mxu0 0
        %4412 = vmatmul.mubr.bf16.gmra.mrb[0].mxu0 %v4337
        %v4413 = vpop.f32.mrb[0].mxu0
        %v4414 = vadd.f32 %v4374, %v4413
        %v4415 = vpop.f32.mrb[0].mxu0
        %v4416 = vpop.f32.mrb[0].mxu0
        %v4417 = vpop.f32.mrb[0].mxu0
        %4418 = vdwg.mxu0
        %v4419 = vadd.f32 %v4163, %v4414
        %v4420 = vld [vmem:[%s16] sm:$0x1]
        %v4422 = vlaneseq
        %v4423 = vshrl.u32 %v4422, 7
        %v4424 = vsub.s32 0, %v4423
        %v4425 = vrot.slane %v4420, %v4424
        %v4427 = vadd.f32 %v4419, %v4425
        %vm4428 = vcmask 9216
        %4429 = vst.msk [vmem:[%s541] sm:$0x3] %vm4428, %v4427
        %s4430 = sand.u32 %s401, 1
        %s4431 = scalar_lea.sflag [#allocation7], %s4430
        %s4432 = sand.u32 %s401, 1
        %s4433 = smul.addr %s4432, 2
        %s4434 = scalar_lea.vmem [#allocation6], %s4433
        // Predicated region
        $region89: #{tpu_custom_call.1} parent=87 // pred_check
          %p4435 = pneg %p411
        $region90: #{tpu_custom_call.1} parent=87 // pred_check_branch
          %4437 = sbr.rel (%p4435) target = $region92
        $region91: #{tpu_custom_call.1} parent=87 // pred_region
          %s4439 = ssub.s32 32, 32
          %4440 = vsyncadd %s4431, %s4439
          %s4441 = smul.addr %s31, 32
          %s4442 = scalar_lea.hbm %s17, %s4441
          %s4444 = sshll.u32 %s4434, 4
          %s4445 = int_to_ptr.vmem [resolvable:$true] %s4444
          %4447 = dma.vmem_to_hbm [thread:$0]  %s4445, 32, %s4442, %s4431
        $region92: #{tpu_custom_call.1} parent=87 // pred_fallthru
          _
      $region88: #{tpu_custom_call.1} parent=5 // pred_fallthru
        _
      %p4448 = scmp.le.s32.totalorder 2, %s26
      // Predicated region
      $region93: #{tpu_custom_call.1} parent=5 // pred_check
        %p4449 = pneg %p4448
      $region94: #{tpu_custom_call.1} parent=5 // pred_check_branch
        %4451 = sbr.rel (%p4449) target = $region96
      $region95: #{tpu_custom_call.1} parent=5 // pred_region
        %s4452 = ssub.s32 %s26, 2
        // Predicated region
        $region97: #{tpu_custom_call.1} parent=95 // pred_check
          %p4453 = pneg %p417
        $region98: #{tpu_custom_call.1} parent=95 // pred_check_branch
          %4455 = sbr.rel (%p4453) target = $region100
        $region99: #{tpu_custom_call.1} parent=95 // pred_region
          %s4456 = sand.u32 %s402, 1
          %s4457 = scalar_lea.sflag [#allocation7], %s4456
          %s4458 = sand.u32 %s402, 1
          %s4459 = smul.addr %s4458, 2
          %s4460 = scalar_lea.vmem [#allocation6], %s4459
          %4461 = dma.done %s4457, 32
        $region100: #{tpu_custom_call.1} parent=95 // pred_fallthru
          _
      $region96: #{tpu_custom_call.1} parent=5 // pred_fallthru
        _
    $region6: #{tpu_custom_call.1} parent=1 // loop_footer
      %s30 = sadd.s32 1, %s26
    $region7: #{tpu_custom_call.1} parent=1 // loop_footer_branch
      %25 = sbr.rel target = $region3
    $region8: #{tpu_custom_call.1} parent=1 // loop_exit
      _
    %4462 = vsyncpa [#allocation7], 1
    %s4463 = scalar_lea.sflag [#allocation7], 1
    %4464 = vsyncpa %s4463, 1

</llo_original>
